<compile_context>
chip_gen: v7x
topology: tpu7x:2x2x1
jax: 0.10.0
libtpu: 0.0.40
codegen_flags: <defaults>
</compile_context>

<pallas_src>
import functools
import math

import jax
import jax.numpy as jnp
from jax import lax
from jax.experimental import pallas as pl
from jax.experimental.pallas import tpu as pltpu

PADDING = 8  # FNO2d_emdT zero-padding when flip=False


# ---------------------------------------------------------------------------
# Pallas kernel: fused complex spectral mixing for the low/high mode blocks.
# ---------------------------------------------------------------------------
def _round_up(n, m):
    return ((n + m - 1) // m) * m


def _pick_batch_tile(batch, cout, mpad):
    """Largest batch tile whose two f32 accumulators fit in ~32 vregs (128 KiB)."""
    budget = 128 * 1024
    per_b = 2 * cout * mpad * 4
    return max(1, min(budget // per_b, batch, 8))


def _make_spectral_mix_kernel(cin, cout, unroll_threshold=32):
    """Kernel for one (stack, batch-tile) grid step.

    Block shapes (stack axis squeezed away):
      x_ref : (bt, 2*Cin, Mpad)   rows [0:Cin] = real, [Cin:2Cin] = imag
      w_ref : (2*Cin, Cout, Mpad) rows [0:Cin] = real, [Cin:2Cin] = imag
      o_ref : (bt, 2*Cout, Mpad)  rows [0:Cout] = real, [Cout:2Cout] = imag

    out[b, o, m] = sum_i x[b, i, m] * w[i, o, m]   (complex, split planes)
    """

    def kernel(x_ref, w_ref, o_ref):
        bt = x_ref.shape[0]
        mpad = x_ref.shape[-1]

        # Register accumulators; output Ref is written exactly once at the end.
        acc_r = jnp.zeros((bt, cout, mpad), jnp.float32)
        acc_i = jnp.zeros((bt, cout, mpad), jnp.float32)

        def mac(i, carry):
            acc_r, acc_i = carry
            xr_i = x_ref[:, pl.ds(i, 1), :]            # (bt, 1, Mpad)
            xi_i = x_ref[:, pl.ds(cin + i, 1), :]      # (bt, 1, Mpad)
            wr_i = w_ref[pl.ds(i, 1)]                  # (1, Cout, Mpad)
            wi_i = w_ref[pl.ds(cin + i, 1)]            # (1, Cout, Mpad)
            acc_r = acc_r + (xr_i * wr_i - xi_i * wi_i)
            acc_i = acc_i + (xr_i * wi_i + xi_i * wr_i)
            return acc_r, acc_i

        if cin <= unroll_threshold:
            for i in range(cin):
                acc_r, acc_i = mac(i, (acc_r, acc_i))
        else:
            # Bounded live ranges + LLO visibility for wide channel counts.
            acc_r, acc_i = lax.fori_loop(0, cin, mac, (acc_r, acc_i), unroll=4)

        o_ref[:, :cout, :] = acc_r
        o_ref[:, cout:, :] = acc_i

    return kernel


def pack_spectral_weights(w1, w2, mpad):
    """(Cin,Cout,m1,m2) complex x2 -> (2, 2*Cin, Cout, Mpad) f32 packed planes."""
    cin, cout, m1, m2 = w1.shape
    m = m1 * m2
    w = jnp.stack([w1, w2], axis=0).reshape(2, cin, cout, m)
    wr = jnp.real(w).astype(jnp.float32)
    wi = jnp.imag(w).astype(jnp.float32)
    w_ri = jnp.concatenate([wr, wi], axis=1)           # (2, 2*Cin, Cout, m)
    if mpad > m:
        w_ri = jnp.pad(w_ri, ((0, 0), (0, 0), (0, 0), (0, mpad - m)))
    return w_ri


def spectral_mix_pallas(x_ft, w_ri, modes1, modes2):
    """Fused low/high complex mode mixing.

    x_ft : (B, Cin, H, Wf) complex64 (rfft2 output)
    w_ri : (2, 2*Cin, Cout, Mpad) float32 packed weights (low, high stacks)
    returns: (B, Cout, H, Wf) complex64 out_ft (zero outside the kept modes)
    """
    B, Cin, H, Wf = x_ft.shape
    _, two_cin, Cout, Mpad = w_ri.shape
    assert two_cin == 2 * Cin
    M = modes1 * modes2
    assert modes2 <= Wf, "modes2 must be <= W//2 + 1"
    assert 2 * modes1 <= H, "2*modes1 must be <= H"
    assert M <= Mpad

    # Gather the two kept mode blocks, flatten modes, pack real/imag along the
    # channel axis, pad to lane-dense width.
    x_low = x_ft[:, :, :modes1, :modes2]
    x_high = x_ft[:, :, H - modes1:, :modes2]
    x_stack = jnp.stack([x_low, x_high], axis=0).reshape(2, B, Cin, M)
    x_ri = jnp.concatenate(
        [jnp.real(x_stack), jnp.imag(x_stack)], axis=2).astype(jnp.float32)
    if Mpad > M:
        x_ri = jnp.pad(x_ri, ((0, 0), (0, 0), (0, 0), (0, Mpad - M)))

    # Fold the batch axis into the block (bt batch elements per grid step).
    bt = _pick_batch_tile(B, Cout, Mpad)
    Bp = _round_up(B, bt)
    if Bp > B:
        x_ri = jnp.pad(x_ri, ((0, 0), (0, Bp - B), (0, 0), (0, 0)))
    n_bt = Bp // bt

    x_spec = pl.BlockSpec((None, bt, 2 * Cin, Mpad), lambda s, b: (s, b, 0, 0))
    # Weights indexed only by the stack axis -> VMEM-resident across batch steps.
    w_spec = pl.BlockSpec((None, 2 * Cin, Cout, Mpad), lambda s, b: (s, 0, 0, 0))
    o_spec = pl.BlockSpec((None, bt, 2 * Cout, Mpad), lambda s, b: (s, b, 0, 0))

    out = pl.pallas_call(
        _make_spectral_mix_kernel(Cin, Cout),
        out_shape=jax.ShapeDtypeStruct((2, Bp, 2 * Cout, Mpad), jnp.float32),
        grid=(2, n_bt),                       # stack axis leading (megacore split)
        in_specs=[x_spec, w_spec],
        out_specs=o_spec,
        compiler_params=pltpu.CompilerParams(
            dimension_semantics=("parallel", "parallel"),
            vmem_limit_bytes=32 * 1024 * 1024,
        ),
    )(x_ri, w_ri)

    out = out[:, :B]                                       # drop batch padding
    out_r = out[:, :, :Cout, :M].reshape(2, B, Cout, modes1, modes2)
    out_i = out[:, :, Cout:, :M].reshape(2, B, Cout, modes1, modes2)
    low = lax.complex(out_r[0], out_i[0])
    high = lax.complex(out_r[1], out_i[1])
    mid = jnp.zeros((B, Cout, H - 2 * modes1, modes2), jnp.complex64)
    out_cols = jnp.concatenate([low, mid, high], axis=2)   # (B, Cout, H, modes2)
    out_ft = jnp.pad(out_cols, ((0, 0), (0, 0), (0, 0), (0, Wf - modes2)))
    return out_ft


# ---------------------------------------------------------------------------
# Rest of the FNO2d_emdT forward (plain JAX around the Pallas hot path).
# ---------------------------------------------------------------------------
def gelu(x):
    return jax.nn.gelu(x, approximate=False)     # matches torch F.gelu default


def swish(x):
    return x * jax.nn.sigmoid(x)


def linear(p, x):
    return x @ p['w'] + p['b']


def conv1x1(p, x):
    # 1x1 Conv2d on NCHW. TODO(synk): pointwise channel matmul left to XLA.
    return jnp.einsum('bihw,oi->bohw', x, p['w']) + p['b'][None, :, None, None]


def params_embedding(p, v, act):
    return linear(p['lin2'], act(linear(p['lin1'], v)))


def spectral_conv2d(spec_params, x, modes1, modes2, flip):
    """SpectralConv2d (flip=False) / SpectralConv2d_flip (flip=True), NCHW."""
    B, Cin, Nx, Ny = x.shape
    if flip:
        x = jnp.concatenate([x, -jnp.flip(x, axis=-2)[..., 1:Nx - 1, :]], axis=-2)
        x = jnp.concatenate([x, -jnp.flip(x, axis=-1)[..., 1:Ny - 1]], axis=-1)
    H, W = x.shape[-2], x.shape[-1]
    # TODO(synk): FFT has no Pallas TPU primitive; rfft2/irfft2 stay in XLA.
    x_ft = jnp.fft.rfft2(x)
    out_ft = spectral_mix_pallas(x_ft, spec_params['w'], modes1, modes2)
    y = jnp.fft.irfft2(out_ft, s=(H, W))
    if flip:
        y = y[:, :, :Nx, :Ny]
    return y.astype(jnp.float32)


def mlp_t_theta(p, x, theta_e, t_e):
    x = conv1x1(p['mlp1'], x)
    th = linear(p['theta_emb2'], gelu(linear(p['theta_emb1'], theta_e)))
    tm = linear(p['time_emb2'], swish(linear(p['time_emb1'], t_e)))
    return x + th[:, :, None, None] + tm[:, :, None, None]


def fno_block(p, x, theta_e, t_e, modes1, modes2, flip):
    x1 = spectral_conv2d(p['spec'], x, modes1, modes2, flip)
    x2 = mlp_t_theta(p['mlp'], x, theta_e, t_e)
    return gelu(x1 + x2)


def get_grid(B, Nx, Ny):
    gx = jnp.linspace(0.0, 1.0, Nx, dtype=jnp.float32).reshape(1, 1, Nx, 1)
    gx = jnp.broadcast_to(gx, (B, 1, Nx, Ny))
    gy = jnp.linspace(0.0, 1.0, Ny, dtype=jnp.float32).reshape(1, 1, 1, Ny)
    gy = jnp.broadcast_to(gy, (B, 1, Nx, Ny))
    return jnp.concatenate([gx, gy], axis=1)


def fno2d_emdt_forward(params, x, theta, t, *, modes1, modes2, flip):
    theta_e = params_embedding(params['theta_emb'], theta, gelu)
    t_e = params_embedding(params['time_emb'], t, swish)
    B, _, Nx, Ny = x.shape
    x = jnp.concatenate([x, get_grid(B, Nx, Ny)], axis=1)
    x = conv1x1(params['p'], x)
    if not flip:
        x = jnp.pad(x, ((0, 0), (0, 0), (0, PADDING), (0, PADDING)))
    for bi in range(4):
        x = fno_block(params[f'block{bi}'], x, theta_e, t_e, modes1, modes2, flip)
    if not flip:
        x = x[..., :-PADDING, :-PADDING]
    return conv1x1(params['q'], x)


# ---------------------------------------------------------------------------
# Parameter init (deterministic; mirrors the torch module's structure).
# ---------------------------------------------------------------------------
def _init_linear(key, fan_in, fan_out):
    kw, kb = jax.random.split(key)
    bound = 1.0 / math.sqrt(fan_in)
    return {'w': jax.random.uniform(kw, (fan_in, fan_out), jnp.float32, -bound, bound),
            'b': jax.random.uniform(kb, (fan_out,), jnp.float32, -bound, bound)}


def _init_conv1x1(key, cin, cout):
    kw, kb = jax.random.split(key)
    bound = 1.0 / math.sqrt(cin)
    return {'w': jax.random.uniform(kw, (cout, cin), jnp.float32, -bound, bound),
            'b': jax.random.uniform(kb, (cout,), jnp.float32, -bound, bound)}


def _init_spectral(key, cin, cout, modes1, modes2, mpad):
    scale = 1.0 / (cin * cout)
    k1, k2, k3, k4 = jax.random.split(key, 4)
    shape = (cin, cout, modes1, modes2)
    w1 = lax.complex(scale * jax.random.uniform(k1, shape, jnp.float32),
                     scale * jax.random.uniform(k2, shape, jnp.float32))
    w2 = lax.complex(scale * jax.random.uniform(k3, shape, jnp.float32),
                     scale * jax.random.uniform(k4, shape, jnp.float32))
    # real/imag split + flatten + pad hoisted out of the forward path.
    return {'w': pack_spectral_weights(w1, w2, mpad)}


def init_fno2d_emdt(key, *, width, modes1, modes2, theta_channels=1, x_channels=3):
    mpad = _round_up(modes1 * modes2, 128)
    keys = jax.random.split(key, 10)
    params = {
        'theta_emb': {'lin1': _init_linear(keys[0], theta_channels, width * 4),
                      'lin2': _init_linear(keys[1], width * 4, width * 4)},
        'time_emb': {'lin1': _init_linear(keys[2], 1, width * 4),
                     'lin2': _init_linear(keys[3], width * 4, width * 4)},
        'p': _init_conv1x1(keys[4], x_channels, width),
        'q': _init_conv1x1(keys[5], width, 1),
    }
    for bi in range(4):
        bk = jax.random.split(keys[6 + bi], 6)
        params[f'block{bi}'] = {
            'spec': _init_spectral(bk[0], width, width, modes1, modes2, mpad),
            'mlp': {
                'mlp1': _init_conv1x1(bk[1], width, width),
                'theta_emb1': _init_linear(bk[2], width * 4, width),
                'theta_emb2': _init_linear(bk[3], width, width),
                'time_emb1': _init_linear(bk[4], width * 4, width),
                'time_emb2': _init_linear(bk[5], width, width),
            },
        }
    return params


if __name__ == "__main__":
    B = 2
    width = 32
    modes1 = modes2 = 8
    Nx = Ny = 16
    theta_channels = 1

    key = jax.random.PRNGKey(0)
    k_param, k_x, k_theta, k_t, k_check = jax.random.split(key, 5)

    params = init_fno2d_emdt(k_param, width=width, modes1=modes1, modes2=modes2,
                             theta_channels=theta_channels)
    x = jax.random.normal(k_x, (B, 1, Nx, Ny), jnp.float32)
    theta = jax.random.normal(k_theta, (B, theta_channels), jnp.float32)
    t = jax.random.uniform(k_t, (B, 1), jnp.float32)

    # Default config (flip=False -> SpectralConv2d path, padding=8).
    fwd = jax.jit(functools.partial(fno2d_emdt_forward,
                                    modes1=modes1, modes2=modes2, flip=False))
    y = jax.block_until_ready(fwd(params, x, theta, t))
    assert y.shape == (B, 1, Nx, Ny), y.shape
    assert bool(jnp.all(jnp.isfinite(y)))

    # flip=True config (SpectralConv2d_flip path with odd-reflection extension).
    fwd_flip = jax.jit(functools.partial(fno2d_emdt_forward,
                                         modes1=modes1, modes2=modes2, flip=True))
    y_flip = jax.block_until_ready(fwd_flip(params, x, theta, t))
    assert y_flip.shape == (B, 1, Nx, Ny), y_flip.shape
    assert bool(jnp.all(jnp.isfinite(y_flip)))

    # Standalone check: Pallas spectral mixing vs. pure-JAX complex einsum.
    Ht, Wft = Nx + PADDING, (Ny + PADDING) // 2 + 1
    mpad = _round_up(modes1 * modes2, 128)
    kk = jax.random.split(k_check, 6)
    x_ft_t = lax.complex(jax.random.normal(kk[0], (B, width, Ht, Wft), jnp.float32),
                         jax.random.normal(kk[1], (B, width, Ht, Wft), jnp.float32))
    wshape = (width, width, modes1, modes2)
    w1_t = 0.02 * lax.complex(jax.random.normal(kk[2], wshape, jnp.float32),
                              jax.random.normal(kk[3], wshape, jnp.float32))
    w2_t = 0.02 * lax.complex(jax.random.normal(kk[4], wshape, jnp.float32),
                              jax.random.normal(kk[5], wshape, jnp.float32))
    w_ri_t = pack_spectral_weights(w1_t, w2_t, mpad)
    got = jax.block_until_ready(spectral_mix_pallas(x_ft_t, w_ri_t, modes1, modes2))
    ref = jnp.zeros((B, width, Ht, Wft), jnp.complex64)
    ref = ref.at[:, :, :modes1, :modes2].set(
        jnp.einsum('bixy,ioxy->boxy', x_ft_t[:, :, :modes1, :modes2], w1_t,
                   precision=lax.Precision.HIGHEST))
    ref = ref.at[:, :, Ht - modes1:, :modes2].set(
        jnp.einsum('bixy,ioxy->boxy', x_ft_t[:, :, Ht - modes1:, :modes2], w2_t,
                   precision=lax.Precision.HIGHEST))
    assert jnp.allclose(got, ref, atol=2e-5, rtol=2e-5)

    print("KERNEL_OK")
</pallas_src>

<mosaic_0001>
module attributes {stable_mosaic.version = 11 : i64} {
  func.func @kernel(%arg0: i32, %arg1: i32, %arg2: memref<1x2x64x128xf32, #tpu.memory_space<vmem>>, %arg3: memref<1x64x32x128xf32, #tpu.memory_space<vmem>>, %arg4: memref<1x2x64x128xf32, #tpu.memory_space<vmem>>) attributes {dimension_semantics = [#tpu.dimension_semantics<parallel>, #tpu.dimension_semantics<parallel>], iteration_bounds = array<i64: 2, 1>, scalar_prefetch = 0 : i64, scratch_operands = 0 : i64, tpu.core_type = #tpu.core_type<tc>, window_params = [{transform_indices = @transform_0, window_bounds = array<i64: 1, 2, 64, 128>}, {transform_indices = @transform_1, window_bounds = array<i64: 1, 64, 32, 128>}, {transform_indices = @transform_2, window_bounds = array<i64: 1, 2, 64, 128>}]} {
    %cst = arith.constant 0.000000e+00 : f32
    %0 = vector.broadcast %cst : f32 to vector<2x32x128xf32>
    %cst_0 = arith.constant 0.000000e+00 : f32
    %1 = vector.broadcast %cst_0 : f32 to vector<2x32x128xf32>
    %c0 = arith.constant 0 : index
    %c0_1 = arith.constant 0 : index
    %c0_2 = arith.constant 0 : index
    %c0_3 = arith.constant 0 : index
    %2 = vector.load %arg2[%c0, %c0_1, %c0_2, %c0_3] : memref<1x2x64x128xf32, #tpu.memory_space<vmem>>, vector<1x2x1x128xf32>
    %3 = vector.shape_cast %2 : vector<1x2x1x128xf32> to vector<2x1x128xf32>
    %c0_4 = arith.constant 0 : index
    %c0_5 = arith.constant 0 : index
    %c32 = arith.constant 32 : index
    %c0_6 = arith.constant 0 : index
    %4 = vector.load %arg2[%c0_4, %c0_5, %c32, %c0_6] : memref<1x2x64x128xf32, #tpu.memory_space<vmem>>, vector<1x2x1x128xf32>
    %5 = vector.shape_cast %4 : vector<1x2x1x128xf32> to vector<2x1x128xf32>
    %c0_7 = arith.constant 0 : index
    %c0_8 = arith.constant 0 : index
    %c0_9 = arith.constant 0 : index
    %c0_10 = arith.constant 0 : index
    %6 = vector.load %arg3[%c0_7, %c0_8, %c0_9, %c0_10] : memref<1x64x32x128xf32, #tpu.memory_space<vmem>>, vector<1x1x32x128xf32>
    %7 = vector.shape_cast %6 : vector<1x1x32x128xf32> to vector<1x32x128xf32>
    %c0_11 = arith.constant 0 : index
    %c32_12 = arith.constant 32 : index
    %c0_13 = arith.constant 0 : index
    %c0_14 = arith.constant 0 : index
    %8 = vector.load %arg3[%c0_11, %c32_12, %c0_13, %c0_14] : memref<1x64x32x128xf32, #tpu.memory_space<vmem>>, vector<1x1x32x128xf32>
    %9 = vector.shape_cast %8 : vector<1x1x32x128xf32> to vector<1x32x128xf32>
    %10 = vector.broadcast %3 : vector<2x1x128xf32> to vector<2x32x128xf32>
    %11 = vector.broadcast %7 : vector<1x32x128xf32> to vector<2x32x128xf32>
    %12 = arith.mulf %10, %11 : vector<2x32x128xf32>
    %13 = vector.broadcast %5 : vector<2x1x128xf32> to vector<2x32x128xf32>
    %14 = vector.broadcast %9 : vector<1x32x128xf32> to vector<2x32x128xf32>
    %15 = arith.mulf %13, %14 : vector<2x32x128xf32>
    %16 = arith.subf %12, %15 : vector<2x32x128xf32>
    %17 = arith.addf %0, %16 : vector<2x32x128xf32>
    %18 = vector.broadcast %3 : vector<2x1x128xf32> to vector<2x32x128xf32>
    %19 = vector.broadcast %9 : vector<1x32x128xf32> to vector<2x32x128xf32>
    %20 = arith.mulf %18, %19 : vector<2x32x128xf32>
    %21 = vector.broadcast %5 : vector<2x1x128xf32> to vector<2x32x128xf32>
    %22 = vector.broadcast %7 : vector<1x32x128xf32> to vector<2x32x128xf32>
    %23 = arith.mulf %21, %22 : vector<2x32x128xf32>
    %24 = arith.addf %20, %23 : vector<2x32x128xf32>
    %25 = arith.addf %1, %24 : vector<2x32x128xf32>
    %c0_15 = arith.constant 0 : index
    %c0_16 = arith.constant 0 : index
    %c1 = arith.constant 1 : index
    %c0_17 = arith.constant 0 : index
    %26 = vector.load %arg2[%c0_15, %c0_16, %c1, %c0_17] : memref<1x2x64x128xf32, #tpu.memory_space<vmem>>, vector<1x2x1x128xf32>
    %27 = vector.shape_cast %26 : vector<1x2x1x128xf32> to vector<2x1x128xf32>
    %c0_18 = arith.constant 0 : index
    %c0_19 = arith.constant 0 : index
    %c33 = arith.constant 33 : index
    %c0_20 = arith.constant 0 : index
    %28 = vector.load %arg2[%c0_18, %c0_19, %c33, %c0_20] : memref<1x2x64x128xf32, #tpu.memory_space<vmem>>, vector<1x2x1x128xf32>
    %29 = vector.shape_cast %28 : vector<1x2x1x128xf32> to vector<2x1x128xf32>
    %c0_21 = arith.constant 0 : index
    %c1_22 = arith.constant 1 : index
    %c0_23 = arith.constant 0 : index
    %c0_24 = arith.constant 0 : index
    %30 = vector.load %arg3[%c0_21, %c1_22, %c0_23, %c0_24] : memref<1x64x32x128xf32, #tpu.memory_space<vmem>>, vector<1x1x32x128xf32>
    %31 = vector.shape_cast %30 : vector<1x1x32x128xf32> to vector<1x32x128xf32>
    %c0_25 = arith.constant 0 : index
    %c33_26 = arith.constant 33 : index
    %c0_27 = arith.constant 0 : index
    %c0_28 = arith.constant 0 : index
    %32 = vector.load %arg3[%c0_25, %c33_26, %c0_27, %c0_28] : memref<1x64x32x128xf32, #tpu.memory_space<vmem>>, vector<1x1x32x128xf32>
    %33 = vector.shape_cast %32 : vector<1x1x32x128xf32> to vector<1x32x128xf32>
    %34 = vector.broadcast %27 : vector<2x1x128xf32> to vector<2x32x128xf32>
    %35 = vector.broadcast %31 : vector<1x32x128xf32> to vector<2x32x128xf32>
    %36 = arith.mulf %34, %35 : vector<2x32x128xf32>
    %37 = vector.broadcast %29 : vector<2x1x128xf32> to vector<2x32x128xf32>
    %38 = vector.broadcast %33 : vector<1x32x128xf32> to vector<2x32x128xf32>
    %39 = arith.mulf %37, %38 : vector<2x32x128xf32>
    %40 = arith.subf %36, %39 : vector<2x32x128xf32>
    %41 = arith.addf %17, %40 : vector<2x32x128xf32>
    %42 = vector.broadcast %27 : vector<2x1x128xf32> to vector<2x32x128xf32>
    %43 = vector.broadcast %33 : vector<1x32x128xf32> to vector<2x32x128xf32>
    %44 = arith.mulf %42, %43 : vector<2x32x128xf32>
    %45 = vector.broadcast %29 : vector<2x1x128xf32> to vector<2x32x128xf32>
    %46 = vector.broadcast %31 : vector<1x32x128xf32> to vector<2x32x128xf32>
    %47 = arith.mulf %45, %46 : vector<2x32x128xf32>
    %48 = arith.addf %44, %47 : vector<2x32x128xf32>
    %49 = arith.addf %25, %48 : vector<2x32x128xf32>
    %c0_29 = arith.constant 0 : index
    %c0_30 = arith.constant 0 : index
    %c2 = arith.constant 2 : index
    %c0_31 = arith.constant 0 : index
    %50 = vector.load %arg2[%c0_29, %c0_30, %c2, %c0_31] : memref<1x2x64x128xf32, #tpu.memory_space<vmem>>, vector<1x2x1x128xf32>
    %51 = vector.shape_cast %50 : vector<1x2x1x128xf32> to vector<2x1x128xf32>
    %c0_32 = arith.constant 0 : index
    %c0_33 = arith.constant 0 : index
    %c34 = arith.constant 34 : index
    %c0_34 = arith.constant 0 : index
    %52 = vector.load %arg2[%c0_32, %c0_33, %c34, %c0_34] : memref<1x2x64x128xf32, #tpu.memory_space<vmem>>, vector<1x2x1x128xf32>
    %53 = vector.shape_cast %52 : vector<1x2x1x128xf32> to vector<2x1x128xf32>
    %c0_35 = arith.constant 0 : index
    %c2_36 = arith.constant 2 : index
    %c0_37 = arith.constant 0 : index
    %c0_38 = arith.constant 0 : index
    %54 = vector.load %arg3[%c0_35, %c2_36, %c0_37, %c0_38] : memref<1x64x32x128xf32, #tpu.memory_space<vmem>>, vector<1x1x32x128xf32>
    %55 = vector.shape_cast %54 : vector<1x1x32x128xf32> to vector<1x32x128xf32>
    %c0_39 = arith.constant 0 : index
    %c34_40 = arith.constant 34 : index
    %c0_41 = arith.constant 0 : index
    %c0_42 = arith.constant 0 : index
    %56 = vector.load %arg3[%c0_39, %c34_40, %c0_41, %c0_42] : memref<1x64x32x128xf32, #tpu.memory_space<vmem>>, vector<1x1x32x128xf32>
    %57 = vector.shape_cast %56 : vector<1x1x32x128xf32> to vector<1x32x128xf32>
    %58 = vector.broadcast %51 : vector<2x1x128xf32> to vector<2x32x128xf32>
    %59 = vector.broadcast %55 : vector<1x32x128xf32> to vector<2x32x128xf32>
    %60 = arith.mulf %58, %59 : vector<2x32x128xf32>
    %61 = vector.broadcast %53 : vector<2x1x128xf32> to vector<2x32x128xf32>
    %62 = vector.broadcast %57 : vector<1x32x128xf32> to vector<2x32x128xf32>
    %63 = arith.mulf %61, %62 : vector<2x32x128xf32>
    %64 = arith.subf %60, %63 : vector<2x32x128xf32>
    %65 = arith.addf %41, %64 : vector<2x32x128xf32>
    %66 = vector.broadcast %51 : vector<2x1x128xf32> to vector<2x32x128xf32>
    %67 = vector.broadcast %57 : vector<1x32x128xf32> to vector<2x32x128xf32>
    %68 = arith.mulf %66, %67 : vector<2x32x128xf32>
    %69 = vector.broadcast %53 : vector<2x1x128xf32> to vector<2x32x128xf32>
    %70 = vector.broadcast %55 : vector<1x32x128xf32> to vector<2x32x128xf32>
    %71 = arith.mulf %69, %70 : vector<2x32x128xf32>
    %72 = arith.addf %68, %71 : vector<2x32x128xf32>
    %73 = arith.addf %49, %72 : vector<2x32x128xf32>
    %c0_43 = arith.constant 0 : index
    %c0_44 = arith.constant 0 : index
    %c3 = arith.constant 3 : index
    %c0_45 = arith.constant 0 : index
    %74 = vector.load %arg2[%c0_43, %c0_44, %c3, %c0_45] : memref<1x2x64x128xf32, #tpu.memory_space<vmem>>, vector<1x2x1x128xf32>
    %75 = vector.shape_cast %74 : vector<1x2x1x128xf32> to vector<2x1x128xf32>
    %c0_46 = arith.constant 0 : index
    %c0_47 = arith.constant 0 : index
    %c35 = arith.constant 35 : index
    %c0_48 = arith.constant 0 : index
    %76 = vector.load %arg2[%c0_46, %c0_47, %c35, %c0_48] : memref<1x2x64x128xf32, #tpu.memory_space<vmem>>, vector<1x2x1x128xf32>
    %77 = vector.shape_cast %76 : vector<1x2x1x128xf32> to vector<2x1x128xf32>
    %c0_49 = arith.constant 0 : index
    %c3_50 = arith.constant 3 : index
    %c0_51 = arith.constant 0 : index
    %c0_52 = arith.constant 0 : index
    %78 = vector.load %arg3[%c0_49, %c3_50, %c0_51, %c0_52] : memref<1x64x32x128xf32, #tpu.memory_space<vmem>>, vector<1x1x32x128xf32>
    %79 = vector.shape_cast %78 : vector<1x1x32x128xf32> to vector<1x32x128xf32>
    %c0_53 = arith.constant 0 : index
    %c35_54 = arith.constant 35 : index
    %c0_55 = arith.constant 0 : index
    %c0_56 = arith.constant 0 : index
    %80 = vector.load %arg3[%c0_53, %c35_54, %c0_55, %c0_56] : memref<1x64x32x128xf32, #tpu.memory_space<vmem>>, vector<1x1x32x128xf32>
    %81 = vector.shape_cast %80 : vector<1x1x32x128xf32> to vector<1x32x128xf32>
    %82 = vector.broadcast %75 : vector<2x1x128xf32> to vector<2x32x128xf32>
    %83 = vector.broadcast %79 : vector<1x32x128xf32> to vector<2x32x128xf32>
    %84 = arith.mulf %82, %83 : vector<2x32x128xf32>
    %85 = vector.broadcast %77 : vector<2x1x128xf32> to vector<2x32x128xf32>
    %86 = vector.broadcast %81 : vector<1x32x128xf32> to vector<2x32x128xf32>
    %87 = arith.mulf %85, %86 : vector<2x32x128xf32>
    %88 = arith.subf %84, %87 : vector<2x32x128xf32>
    %89 = arith.addf %65, %88 : vector<2x32x128xf32>
    %90 = vector.broadcast %75 : vector<2x1x128xf32> to vector<2x32x128xf32>
    %91 = vector.broadcast %81 : vector<1x32x128xf32> to vector<2x32x128xf32>
    %92 = arith.mulf %90, %91 : vector<2x32x128xf32>
    %93 = vector.broadcast %77 : vector<2x1x128xf32> to vector<2x32x128xf32>
    %94 = vector.broadcast %79 : vector<1x32x128xf32> to vector<2x32x128xf32>
    %95 = arith.mulf %93, %94 : vector<2x32x128xf32>
    %96 = arith.addf %92, %95 : vector<2x32x128xf32>
    %97 = arith.addf %73, %96 : vector<2x32x128xf32>
    %c0_57 = arith.constant 0 : index
    %c0_58 = arith.constant 0 : index
    %c4 = arith.constant 4 : index
    %c0_59 = arith.constant 0 : index
    %98 = vector.load %arg2[%c0_57, %c0_58, %c4, %c0_59] : memref<1x2x64x128xf32, #tpu.memory_space<vmem>>, vector<1x2x1x128xf32>
    %99 = vector.shape_cast %98 : vector<1x2x1x128xf32> to vector<2x1x128xf32>
    %c0_60 = arith.constant 0 : index
    %c0_61 = arith.constant 0 : index
    %c36 = arith.constant 36 : index
    %c0_62 = arith.constant 0 : index
    %100 = vector.load %arg2[%c0_60, %c0_61, %c36, %c0_62] : memref<1x2x64x128xf32, #tpu.memory_space<vmem>>, vector<1x2x1x128xf32>
    %101 = vector.shape_cast %100 : vector<1x2x1x128xf32> to vector<2x1x128xf32>
    %c0_63 = arith.constant 0 : index
    %c4_64 = arith.constant 4 : index
    %c0_65 = arith.constant 0 : index
    %c0_66 = arith.constant 0 : index
    %102 = vector.load %arg3[%c0_63, %c4_64, %c0_65, %c0_66] : memref<1x64x32x128xf32, #tpu.memory_space<vmem>>, vector<1x1x32x128xf32>
    %103 = vector.shape_cast %102 : vector<1x1x32x128xf32> to vector<1x32x128xf32>
    %c0_67 = arith.constant 0 : index
    %c36_68 = arith.constant 36 : index
    %c0_69 = arith.constant 0 : index
    %c0_70 = arith.constant 0 : index
    %104 = vector.load %arg3[%c0_67, %c36_68, %c0_69, %c0_70] : memref<1x64x32x128xf32, #tpu.memory_space<vmem>>, vector<1x1x32x128xf32>
    %105 = vector.shape_cast %104 : vector<1x1x32x128xf32> to vector<1x32x128xf32>
    %106 = vector.broadcast %99 : vector<2x1x128xf32> to vector<2x32x128xf32>
    %107 = vector.broadcast %103 : vector<1x32x128xf32> to vector<2x32x128xf32>
    %108 = arith.mulf %106, %107 : vector<2x32x128xf32>
    %109 = vector.broadcast %101 : vector<2x1x128xf32> to vector<2x32x128xf32>
    %110 = vector.broadcast %105 : vector<1x32x128xf32> to vector<2x32x128xf32>
    %111 = arith.mulf %109, %110 : vector<2x32x128xf32>
    %112 = arith.subf %108, %111 : vector<2x32x128xf32>
    %113 = arith.addf %89, %112 : vector<2x32x128xf32>
    %114 = vector.broadcast %99 : vector<2x1x128xf32> to vector<2x32x128xf32>
    %115 = vector.broadcast %105 : vector<1x32x128xf32> to vector<2x32x128xf32>
    %116 = arith.mulf %114, %115 : vector<2x32x128xf32>
    %117 = vector.broadcast %101 : vector<2x1x128xf32> to vector<2x32x128xf32>
    %118 = vector.broadcast %103 : vector<1x32x128xf32> to vector<2x32x128xf32>
    %119 = arith.mulf %117, %118 : vector<2x32x128xf32>
    %120 = arith.addf %116, %119 : vector<2x32x128xf32>
    %121 = arith.addf %97, %120 : vector<2x32x128xf32>
    %c0_71 = arith.constant 0 : index
    %c0_72 = arith.constant 0 : index
    %c5 = arith.constant 5 : index
    %c0_73 = arith.constant 0 : index
    %122 = vector.load %arg2[%c0_71, %c0_72, %c5, %c0_73] : memref<1x2x64x128xf32, #tpu.memory_space<vmem>>, vector<1x2x1x128xf32>
    %123 = vector.shape_cast %122 : vector<1x2x1x128xf32> to vector<2x1x128xf32>
    %c0_74 = arith.constant 0 : index
    %c0_75 = arith.constant 0 : index
    %c37 = arith.constant 37 : index
    %c0_76 = arith.constant 0 : index
    %124 = vector.load %arg2[%c0_74, %c0_75, %c37, %c0_76] : memref<1x2x64x128xf32, #tpu.memory_space<vmem>>, vector<1x2x1x128xf32>
    %125 = vector.shape_cast %124 : vector<1x2x1x128xf32> to vector<2x1x128xf32>
    %c0_77 = arith.constant 0 : index
    %c5_78 = arith.constant 5 : index
    %c0_79 = arith.constant 0 : index
    %c0_80 = arith.constant 0 : index
    %126 = vector.load %arg3[%c0_77, %c5_78, %c0_79, %c0_80] : memref<1x64x32x128xf32, #tpu.memory_space<vmem>>, vector<1x1x32x128xf32>
    %127 = vector.shape_cast %126 : vector<1x1x32x128xf32> to vector<1x32x128xf32>
    %c0_81 = arith.constant 0 : index
    %c37_82 = arith.constant 37 : index
    %c0_83 = arith.constant 0 : index
    %c0_84 = arith.constant 0 : index
    %128 = vector.load %arg3[%c0_81, %c37_82, %c0_83, %c0_84] : memref<1x64x32x128xf32, #tpu.memory_space<vmem>>, vector<1x1x32x128xf32>
    %129 = vector.shape_cast %128 : vector<1x1x32x128xf32> to vector<1x32x128xf32>
    %130 = vector.broadcast %123 : vector<2x1x128xf32> to vector<2x32x128xf32>
    %131 = vector.broadcast %127 : vector<1x32x128xf32> to vector<2x32x128xf32>
    %132 = arith.mulf %130, %131 : vector<2x32x128xf32>
    %133 = vector.broadcast %125 : vector<2x1x128xf32> to vector<2x32x128xf32>
    %134 = vector.broadcast %129 : vector<1x32x128xf32> to vector<2x32x128xf32>
    %135 = arith.mulf %133, %134 : vector<2x32x128xf32>
    %136 = arith.subf %132, %135 : vector<2x32x128xf32>
    %137 = arith.addf %113, %136 : vector<2x32x128xf32>
    %138 = vector.broadcast %123 : vector<2x1x128xf32> to vector<2x32x128xf32>
    %139 = vector.broadcast %129 : vector<1x32x128xf32> to vector<2x32x128xf32>
    %140 = arith.mulf %138, %139 : vector<2x32x128xf32>
    %141 = vector.broadcast %125 : vector<2x1x128xf32> to vector<2x32x128xf32>
    %142 = vector.broadcast %127 : vector<1x32x128xf32> to vector<2x32x128xf32>
    %143 = arith.mulf %141, %142 : vector<2x32x128xf32>
    %144 = arith.addf %140, %143 : vector<2x32x128xf32>
    %145 = arith.addf %121, %144 : vector<2x32x128xf32>
    %c0_85 = arith.constant 0 : index
    %c0_86 = arith.constant 0 : index
    %c6 = arith.constant 6 : index
    %c0_87 = arith.constant 0 : index
    %146 = vector.load %arg2[%c0_85, %c0_86, %c6, %c0_87] : memref<1x2x64x128xf32, #tpu.memory_space<vmem>>, vector<1x2x1x128xf32>
    %147 = vector.shape_cast %146 : vector<1x2x1x128xf32> to vector<2x1x128xf32>
    %c0_88 = arith.constant 0 : index
    %c0_89 = arith.constant 0 : index
    %c38 = arith.constant 38 : index
    %c0_90 = arith.constant 0 : index
    %148 = vector.load %arg2[%c0_88, %c0_89, %c38, %c0_90] : memref<1x2x64x128xf32, #tpu.memory_space<vmem>>, vector<1x2x1x128xf32>
    %149 = vector.shape_cast %148 : vector<1x2x1x128xf32> to vector<2x1x128xf32>
    %c0_91 = arith.constant 0 : index
    %c6_92 = arith.constant 6 : index
    %c0_93 = arith.constant 0 : index
    %c0_94 = arith.constant 0 : index
    %150 = vector.load %arg3[%c0_91, %c6_92, %c0_93, %c0_94] : memref<1x64x32x128xf32, #tpu.memory_space<vmem>>, vector<1x1x32x128xf32>
    %151 = vector.shape_cast %150 : vector<1x1x32x128xf32> to vector<1x32x128xf32>
    %c0_95 = arith.constant 0 : index
    %c38_96 = arith.constant 38 : index
    %c0_97 = arith.constant 0 : index
    %c0_98 = arith.constant 0 : index
    %152 = vector.load %arg3[%c0_95, %c38_96, %c0_97, %c0_98] : memref<1x64x32x128xf32, #tpu.memory_space<vmem>>, vector<1x1x32x128xf32>
    %153 = vector.shape_cast %152 : vector<1x1x32x128xf32> to vector<1x32x128xf32>
    %154 = vector.broadcast %147 : vector<2x1x128xf32> to vector<2x32x128xf32>
    %155 = vector.broadcast %151 : vector<1x32x128xf32> to vector<2x32x128xf32>
    %156 = arith.mulf %154, %155 : vector<2x32x128xf32>
    %157 = vector.broadcast %149 : vector<2x1x128xf32> to vector<2x32x128xf32>
    %158 = vector.broadcast %153 : vector<1x32x128xf32> to vector<2x32x128xf32>
    %159 = arith.mulf %157, %158 : vector<2x32x128xf32>
    %160 = arith.subf %156, %159 : vector<2x32x128xf32>
    %161 = arith.addf %137, %160 : vector<2x32x128xf32>
    %162 = vector.broadcast %147 : vector<2x1x128xf32> to vector<2x32x128xf32>
    %163 = vector.broadcast %153 : vector<1x32x128xf32> to vector<2x32x128xf32>
    %164 = arith.mulf %162, %163 : vector<2x32x128xf32>
    %165 = vector.broadcast %149 : vector<2x1x128xf32> to vector<2x32x128xf32>
    %166 = vector.broadcast %151 : vector<1x32x128xf32> to vector<2x32x128xf32>
    %167 = arith.mulf %165, %166 : vector<2x32x128xf32>
    %168 = arith.addf %164, %167 : vector<2x32x128xf32>
    %169 = arith.addf %145, %168 : vector<2x32x128xf32>
    %c0_99 = arith.constant 0 : index
    %c0_100 = arith.constant 0 : index
    %c7 = arith.constant 7 : index
    %c0_101 = arith.constant 0 : index
    %170 = vector.load %arg2[%c0_99, %c0_100, %c7, %c0_101] : memref<1x2x64x128xf32, #tpu.memory_space<vmem>>, vector<1x2x1x128xf32>
    %171 = vector.shape_cast %170 : vector<1x2x1x128xf32> to vector<2x1x128xf32>
    %c0_102 = arith.constant 0 : index
    %c0_103 = arith.constant 0 : index
    %c39 = arith.constant 39 : index
    %c0_104 = arith.constant 0 : index
    %172 = vector.load %arg2[%c0_102, %c0_103, %c39, %c0_104] : memref<1x2x64x128xf32, #tpu.memory_space<vmem>>, vector<1x2x1x128xf32>
    %173 = vector.shape_cast %172 : vector<1x2x1x128xf32> to vector<2x1x128xf32>
    %c0_105 = arith.constant 0 : index
    %c7_106 = arith.constant 7 : index
    %c0_107 = arith.constant 0 : index
    %c0_108 = arith.constant 0 : index
    %174 = vector.load %arg3[%c0_105, %c7_106, %c0_107, %c0_108] : memref<1x64x32x128xf32, #tpu.memory_space<vmem>>, vector<1x1x32x128xf32>
    %175 = vector.shape_cast %174 : vector<1x1x32x128xf32> to vector<1x32x128xf32>
    %c0_109 = arith.constant 0 : index
    %c39_110 = arith.constant 39 : index
    %c0_111 = arith.constant 0 : index
    %c0_112 = arith.constant 0 : index
    %176 = vector.load %arg3[%c0_109, %c39_110, %c0_111, %c0_112] : memref<1x64x32x128xf32, #tpu.memory_space<vmem>>, vector<1x1x32x128xf32>
    %177 = vector.shape_cast %176 : vector<1x1x32x128xf32> to vector<1x32x128xf32>
    %178 = vector.broadcast %171 : vector<2x1x128xf32> to vector<2x32x128xf32>
    %179 = vector.broadcast %175 : vector<1x32x128xf32> to vector<2x32x128xf32>
    %180 = arith.mulf %178, %179 : vector<2x32x128xf32>
    %181 = vector.broadcast %173 : vector<2x1x128xf32> to vector<2x32x128xf32>
    %182 = vector.broadcast %177 : vector<1x32x128xf32> to vector<2x32x128xf32>
    %183 = arith.mulf %181, %182 : vector<2x32x128xf32>
    %184 = arith.subf %180, %183 : vector<2x32x128xf32>
    %185 = arith.addf %161, %184 : vector<2x32x128xf32>
    %186 = vector.broadcast %171 : vector<2x1x128xf32> to vector<2x32x128xf32>
    %187 = vector.broadcast %177 : vector<1x32x128xf32> to vector<2x32x128xf32>
    %188 = arith.mulf %186, %187 : vector<2x32x128xf32>
    %189 = vector.broadcast %173 : vector<2x1x128xf32> to vector<2x32x128xf32>
    %190 = vector.broadcast %175 : vector<1x32x128xf32> to vector<2x32x128xf32>
    %191 = arith.mulf %189, %190 : vector<2x32x128xf32>
    %192 = arith.addf %188, %191 : vector<2x32x128xf32>
    %193 = arith.addf %169, %192 : vector<2x32x128xf32>
    %c0_113 = arith.constant 0 : index
    %c0_114 = arith.constant 0 : index
    %c8 = arith.constant 8 : index
    %c0_115 = arith.constant 0 : index
    %194 = vector.load %arg2[%c0_113, %c0_114, %c8, %c0_115] : memref<1x2x64x128xf32, #tpu.memory_space<vmem>>, vector<1x2x1x128xf32>
    %195 = vector.shape_cast %194 : vector<1x2x1x128xf32> to vector<2x1x128xf32>
    %c0_116 = arith.constant 0 : index
    %c0_117 = arith.constant 0 : index
    %c40 = arith.constant 40 : index
    %c0_118 = arith.constant 0 : index
    %196 = vector.load %arg2[%c0_116, %c0_117, %c40, %c0_118] : memref<1x2x64x128xf32, #tpu.memory_space<vmem>>, vector<1x2x1x128xf32>
    %197 = vector.shape_cast %196 : vector<1x2x1x128xf32> to vector<2x1x128xf32>
    %c0_119 = arith.constant 0 : index
    %c8_120 = arith.constant 8 : index
    %c0_121 = arith.constant 0 : index
    %c0_122 = arith.constant 0 : index
    %198 = vector.load %arg3[%c0_119, %c8_120, %c0_121, %c0_122] : memref<1x64x32x128xf32, #tpu.memory_space<vmem>>, vector<1x1x32x128xf32>
    %199 = vector.shape_cast %198 : vector<1x1x32x128xf32> to vector<1x32x128xf32>
    %c0_123 = arith.constant 0 : index
    %c40_124 = arith.constant 40 : index
    %c0_125 = arith.constant 0 : index
    %c0_126 = arith.constant 0 : index
    %200 = vector.load %arg3[%c0_123, %c40_124, %c0_125, %c0_126] : memref<1x64x32x128xf32, #tpu.memory_space<vmem>>, vector<1x1x32x128xf32>
    %201 = vector.shape_cast %200 : vector<1x1x32x128xf32> to vector<1x32x128xf32>
    %202 = vector.broadcast %195 : vector<2x1x128xf32> to vector<2x32x128xf32>
    %203 = vector.broadcast %199 : vector<1x32x128xf32> to vector<2x32x128xf32>
    %204 = arith.mulf %202, %203 : vector<2x32x128xf32>
    %205 = vector.broadcast %197 : vector<2x1x128xf32> to vector<2x32x128xf32>
    %206 = vector.broadcast %201 : vector<1x32x128xf32> to vector<2x32x128xf32>
    %207 = arith.mulf %205, %206 : vector<2x32x128xf32>
    %208 = arith.subf %204, %207 : vector<2x32x128xf32>
    %209 = arith.addf %185, %208 : vector<2x32x128xf32>
    %210 = vector.broadcast %195 : vector<2x1x128xf32> to vector<2x32x128xf32>
    %211 = vector.broadcast %201 : vector<1x32x128xf32> to vector<2x32x128xf32>
    %212 = arith.mulf %210, %211 : vector<2x32x128xf32>
    %213 = vector.broadcast %197 : vector<2x1x128xf32> to vector<2x32x128xf32>
    %214 = vector.broadcast %199 : vector<1x32x128xf32> to vector<2x32x128xf32>
    %215 = arith.mulf %213, %214 : vector<2x32x128xf32>
    %216 = arith.addf %212, %215 : vector<2x32x128xf32>
    %217 = arith.addf %193, %216 : vector<2x32x128xf32>
    %c0_127 = arith.constant 0 : index
    %c0_128 = arith.constant 0 : index
    %c9 = arith.constant 9 : index
    %c0_129 = arith.constant 0 : index
    %218 = vector.load %arg2[%c0_127, %c0_128, %c9, %c0_129] : memref<1x2x64x128xf32, #tpu.memory_space<vmem>>, vector<1x2x1x128xf32>
    %219 = vector.shape_cast %218 : vector<1x2x1x128xf32> to vector<2x1x128xf32>
    %c0_130 = arith.constant 0 : index
    %c0_131 = arith.constant 0 : index
    %c41 = arith.constant 41 : index
    %c0_132 = arith.constant 0 : index
    %220 = vector.load %arg2[%c0_130, %c0_131, %c41, %c0_132] : memref<1x2x64x128xf32, #tpu.memory_space<vmem>>, vector<1x2x1x128xf32>
    %221 = vector.shape_cast %220 : vector<1x2x1x128xf32> to vector<2x1x128xf32>
    %c0_133 = arith.constant 0 : index
    %c9_134 = arith.constant 9 : index
    %c0_135 = arith.constant 0 : index
    %c0_136 = arith.constant 0 : index
    %222 = vector.load %arg3[%c0_133, %c9_134, %c0_135, %c0_136] : memref<1x64x32x128xf32, #tpu.memory_space<vmem>>, vector<1x1x32x128xf32>
    %223 = vector.shape_cast %222 : vector<1x1x32x128xf32> to vector<1x32x128xf32>
    %c0_137 = arith.constant 0 : index
    %c41_138 = arith.constant 41 : index
    %c0_139 = arith.constant 0 : index
    %c0_140 = arith.constant 0 : index
    %224 = vector.load %arg3[%c0_137, %c41_138, %c0_139, %c0_140] : memref<1x64x32x128xf32, #tpu.memory_space<vmem>>, vector<1x1x32x128xf32>
    %225 = vector.shape_cast %224 : vector<1x1x32x128xf32> to vector<1x32x128xf32>
    %226 = vector.broadcast %219 : vector<2x1x128xf32> to vector<2x32x128xf32>
    %227 = vector.broadcast %223 : vector<1x32x128xf32> to vector<2x32x128xf32>
    %228 = arith.mulf %226, %227 : vector<2x32x128xf32>
    %229 = vector.broadcast %221 : vector<2x1x128xf32> to vector<2x32x128xf32>
    %230 = vector.broadcast %225 : vector<1x32x128xf32> to vector<2x32x128xf32>
    %231 = arith.mulf %229, %230 : vector<2x32x128xf32>
    %232 = arith.subf %228, %231 : vector<2x32x128xf32>
    %233 = arith.addf %209, %232 : vector<2x32x128xf32>
    %234 = vector.broadcast %219 : vector<2x1x128xf32> to vector<2x32x128xf32>
    %235 = vector.broadcast %225 : vector<1x32x128xf32> to vector<2x32x128xf32>
    %236 = arith.mulf %234, %235 : vector<2x32x128xf32>
    %237 = vector.broadcast %221 : vector<2x1x128xf32> to vector<2x32x128xf32>
    %238 = vector.broadcast %223 : vector<1x32x128xf32> to vector<2x32x128xf32>
    %239 = arith.mulf %237, %238 : vector<2x32x128xf32>
    %240 = arith.addf %236, %239 : vector<2x32x128xf32>
    %241 = arith.addf %217, %240 : vector<2x32x128xf32>
    %c0_141 = arith.constant 0 : index
    %c0_142 = arith.constant 0 : index
    %c10 = arith.constant 10 : index
    %c0_143 = arith.constant 0 : index
    %242 = vector.load %arg2[%c0_141, %c0_142, %c10, %c0_143] : memref<1x2x64x128xf32, #tpu.memory_space<vmem>>, vector<1x2x1x128xf32>
    %243 = vector.shape_cast %242 : vector<1x2x1x128xf32> to vector<2x1x128xf32>
    %c0_144 = arith.constant 0 : index
    %c0_145 = arith.constant 0 : index
    %c42 = arith.constant 42 : index
    %c0_146 = arith.constant 0 : index
    %244 = vector.load %arg2[%c0_144, %c0_145, %c42, %c0_146] : memref<1x2x64x128xf32, #tpu.memory_space<vmem>>, vector<1x2x1x128xf32>
    %245 = vector.shape_cast %244 : vector<1x2x1x128xf32> to vector<2x1x128xf32>
    %c0_147 = arith.constant 0 : index
    %c10_148 = arith.constant 10 : index
    %c0_149 = arith.constant 0 : index
    %c0_150 = arith.constant 0 : index
    %246 = vector.load %arg3[%c0_147, %c10_148, %c0_149, %c0_150] : memref<1x64x32x128xf32, #tpu.memory_space<vmem>>, vector<1x1x32x128xf32>
    %247 = vector.shape_cast %246 : vector<1x1x32x128xf32> to vector<1x32x128xf32>
    %c0_151 = arith.constant 0 : index
    %c42_152 = arith.constant 42 : index
    %c0_153 = arith.constant 0 : index
    %c0_154 = arith.constant 0 : index
    %248 = vector.load %arg3[%c0_151, %c42_152, %c0_153, %c0_154] : memref<1x64x32x128xf32, #tpu.memory_space<vmem>>, vector<1x1x32x128xf32>
    %249 = vector.shape_cast %248 : vector<1x1x32x128xf32> to vector<1x32x128xf32>
    %250 = vector.broadcast %243 : vector<2x1x128xf32> to vector<2x32x128xf32>
    %251 = vector.broadcast %247 : vector<1x32x128xf32> to vector<2x32x128xf32>
    %252 = arith.mulf %250, %251 : vector<2x32x128xf32>
    %253 = vector.broadcast %245 : vector<2x1x128xf32> to vector<2x32x128xf32>
    %254 = vector.broadcast %249 : vector<1x32x128xf32> to vector<2x32x128xf32>
    %255 = arith.mulf %253, %254 : vector<2x32x128xf32>
    %256 = arith.subf %252, %255 : vector<2x32x128xf32>
    %257 = arith.addf %233, %256 : vector<2x32x128xf32>
    %258 = vector.broadcast %243 : vector<2x1x128xf32> to vector<2x32x128xf32>
    %259 = vector.broadcast %249 : vector<1x32x128xf32> to vector<2x32x128xf32>
    %260 = arith.mulf %258, %259 : vector<2x32x128xf32>
    %261 = vector.broadcast %245 : vector<2x1x128xf32> to vector<2x32x128xf32>
    %262 = vector.broadcast %247 : vector<1x32x128xf32> to vector<2x32x128xf32>
    %263 = arith.mulf %261, %262 : vector<2x32x128xf32>
    %264 = arith.addf %260, %263 : vector<2x32x128xf32>
    %265 = arith.addf %241, %264 : vector<2x32x128xf32>
    %c0_155 = arith.constant 0 : index
    %c0_156 = arith.constant 0 : index
    %c11 = arith.constant 11 : index
    %c0_157 = arith.constant 0 : index
    %266 = vector.load %arg2[%c0_155, %c0_156, %c11, %c0_157] : memref<1x2x64x128xf32, #tpu.memory_space<vmem>>, vector<1x2x1x128xf32>
    %267 = vector.shape_cast %266 : vector<1x2x1x128xf32> to vector<2x1x128xf32>
    %c0_158 = arith.constant 0 : index
    %c0_159 = arith.constant 0 : index
    %c43 = arith.constant 43 : index
    %c0_160 = arith.constant 0 : index
    %268 = vector.load %arg2[%c0_158, %c0_159, %c43, %c0_160] : memref<1x2x64x128xf32, #tpu.memory_space<vmem>>, vector<1x2x1x128xf32>
    %269 = vector.shape_cast %268 : vector<1x2x1x128xf32> to vector<2x1x128xf32>
    %c0_161 = arith.constant 0 : index
    %c11_162 = arith.constant 11 : index
    %c0_163 = arith.constant 0 : index
    %c0_164 = arith.constant 0 : index
    %270 = vector.load %arg3[%c0_161, %c11_162, %c0_163, %c0_164] : memref<1x64x32x128xf32, #tpu.memory_space<vmem>>, vector<1x1x32x128xf32>
    %271 = vector.shape_cast %270 : vector<1x1x32x128xf32> to vector<1x32x128xf32>
    %c0_165 = arith.constant 0 : index
    %c43_166 = arith.constant 43 : index
    %c0_167 = arith.constant 0 : index
    %c0_168 = arith.constant 0 : index
    %272 = vector.load %arg3[%c0_165, %c43_166, %c0_167, %c0_168] : memref<1x64x32x128xf32, #tpu.memory_space<vmem>>, vector<1x1x32x128xf32>
    %273 = vector.shape_cast %272 : vector<1x1x32x128xf32> to vector<1x32x128xf32>
    %274 = vector.broadcast %267 : vector<2x1x128xf32> to vector<2x32x128xf32>
    %275 = vector.broadcast %271 : vector<1x32x128xf32> to vector<2x32x128xf32>
    %276 = arith.mulf %274, %275 : vector<2x32x128xf32>
    %277 = vector.broadcast %269 : vector<2x1x128xf32> to vector<2x32x128xf32>
    %278 = vector.broadcast %273 : vector<1x32x128xf32> to vector<2x32x128xf32>
    %279 = arith.mulf %277, %278 : vector<2x32x128xf32>
    %280 = arith.subf %276, %279 : vector<2x32x128xf32>
    %281 = arith.addf %257, %280 : vector<2x32x128xf32>
    %282 = vector.broadcast %267 : vector<2x1x128xf32> to vector<2x32x128xf32>
    %283 = vector.broadcast %273 : vector<1x32x128xf32> to vector<2x32x128xf32>
    %284 = arith.mulf %282, %283 : vector<2x32x128xf32>
    %285 = vector.broadcast %269 : vector<2x1x128xf32> to vector<2x32x128xf32>
    %286 = vector.broadcast %271 : vector<1x32x128xf32> to vector<2x32x128xf32>
    %287 = arith.mulf %285, %286 : vector<2x32x128xf32>
    %288 = arith.addf %284, %287 : vector<2x32x128xf32>
    %289 = arith.addf %265, %288 : vector<2x32x128xf32>
    %c0_169 = arith.constant 0 : index
    %c0_170 = arith.constant 0 : index
    %c12 = arith.constant 12 : index
    %c0_171 = arith.constant 0 : index
    %290 = vector.load %arg2[%c0_169, %c0_170, %c12, %c0_171] : memref<1x2x64x128xf32, #tpu.memory_space<vmem>>, vector<1x2x1x128xf32>
    %291 = vector.shape_cast %290 : vector<1x2x1x128xf32> to vector<2x1x128xf32>
    %c0_172 = arith.constant 0 : index
    %c0_173 = arith.constant 0 : index
    %c44 = arith.constant 44 : index
    %c0_174 = arith.constant 0 : index
    %292 = vector.load %arg2[%c0_172, %c0_173, %c44, %c0_174] : memref<1x2x64x128xf32, #tpu.memory_space<vmem>>, vector<1x2x1x128xf32>
    %293 = vector.shape_cast %292 : vector<1x2x1x128xf32> to vector<2x1x128xf32>
    %c0_175 = arith.constant 0 : index
    %c12_176 = arith.constant 12 : index
    %c0_177 = arith.constant 0 : index
    %c0_178 = arith.constant 0 : index
    %294 = vector.load %arg3[%c0_175, %c12_176, %c0_177, %c0_178] : memref<1x64x32x128xf32, #tpu.memory_space<vmem>>, vector<1x1x32x128xf32>
    %295 = vector.shape_cast %294 : vector<1x1x32x128xf32> to vector<1x32x128xf32>
    %c0_179 = arith.constant 0 : index
    %c44_180 = arith.constant 44 : index
    %c0_181 = arith.constant 0 : index
    %c0_182 = arith.constant 0 : index
    %296 = vector.load %arg3[%c0_179, %c44_180, %c0_181, %c0_182] : memref<1x64x32x128xf32, #tpu.memory_space<vmem>>, vector<1x1x32x128xf32>
    %297 = vector.shape_cast %296 : vector<1x1x32x128xf32> to vector<1x32x128xf32>
    %298 = vector.broadcast %291 : vector<2x1x128xf32> to vector<2x32x128xf32>
    %299 = vector.broadcast %295 : vector<1x32x128xf32> to vector<2x32x128xf32>
    %300 = arith.mulf %298, %299 : vector<2x32x128xf32>
    %301 = vector.broadcast %293 : vector<2x1x128xf32> to vector<2x32x128xf32>
    %302 = vector.broadcast %297 : vector<1x32x128xf32> to vector<2x32x128xf32>
    %303 = arith.mulf %301, %302 : vector<2x32x128xf32>
    %304 = arith.subf %300, %303 : vector<2x32x128xf32>
    %305 = arith.addf %281, %304 : vector<2x32x128xf32>
    %306 = vector.broadcast %291 : vector<2x1x128xf32> to vector<2x32x128xf32>
    %307 = vector.broadcast %297 : vector<1x32x128xf32> to vector<2x32x128xf32>
    %308 = arith.mulf %306, %307 : vector<2x32x128xf32>
    %309 = vector.broadcast %293 : vector<2x1x128xf32> to vector<2x32x128xf32>
    %310 = vector.broadcast %295 : vector<1x32x128xf32> to vector<2x32x128xf32>
    %311 = arith.mulf %309, %310 : vector<2x32x128xf32>
    %312 = arith.addf %308, %311 : vector<2x32x128xf32>
    %313 = arith.addf %289, %312 : vector<2x32x128xf32>
    %c0_183 = arith.constant 0 : index
    %c0_184 = arith.constant 0 : index
    %c13 = arith.constant 13 : index
    %c0_185 = arith.constant 0 : index
    %314 = vector.load %arg2[%c0_183, %c0_184, %c13, %c0_185] : memref<1x2x64x128xf32, #tpu.memory_space<vmem>>, vector<1x2x1x128xf32>
    %315 = vector.shape_cast %314 : vector<1x2x1x128xf32> to vector<2x1x128xf32>
    %c0_186 = arith.constant 0 : index
    %c0_187 = arith.constant 0 : index
    %c45 = arith.constant 45 : index
    %c0_188 = arith.constant 0 : index
    %316 = vector.load %arg2[%c0_186, %c0_187, %c45, %c0_188] : memref<1x2x64x128xf32, #tpu.memory_space<vmem>>, vector<1x2x1x128xf32>
    %317 = vector.shape_cast %316 : vector<1x2x1x128xf32> to vector<2x1x128xf32>
    %c0_189 = arith.constant 0 : index
    %c13_190 = arith.constant 13 : index
    %c0_191 = arith.constant 0 : index
    %c0_192 = arith.constant 0 : index
    %318 = vector.load %arg3[%c0_189, %c13_190, %c0_191, %c0_192] : memref<1x64x32x128xf32, #tpu.memory_space<vmem>>, vector<1x1x32x128xf32>
    %319 = vector.shape_cast %318 : vector<1x1x32x128xf32> to vector<1x32x128xf32>
    %c0_193 = arith.constant 0 : index
    %c45_194 = arith.constant 45 : index
    %c0_195 = arith.constant 0 : index
    %c0_196 = arith.constant 0 : index
    %320 = vector.load %arg3[%c0_193, %c45_194, %c0_195, %c0_196] : memref<1x64x32x128xf32, #tpu.memory_space<vmem>>, vector<1x1x32x128xf32>
    %321 = vector.shape_cast %320 : vector<1x1x32x128xf32> to vector<1x32x128xf32>
    %322 = vector.broadcast %315 : vector<2x1x128xf32> to vector<2x32x128xf32>
    %323 = vector.broadcast %319 : vector<1x32x128xf32> to vector<2x32x128xf32>
    %324 = arith.mulf %322, %323 : vector<2x32x128xf32>
    %325 = vector.broadcast %317 : vector<2x1x128xf32> to vector<2x32x128xf32>
    %326 = vector.broadcast %321 : vector<1x32x128xf32> to vector<2x32x128xf32>
    %327 = arith.mulf %325, %326 : vector<2x32x128xf32>
    %328 = arith.subf %324, %327 : vector<2x32x128xf32>
    %329 = arith.addf %305, %328 : vector<2x32x128xf32>
    %330 = vector.broadcast %315 : vector<2x1x128xf32> to vector<2x32x128xf32>
    %331 = vector.broadcast %321 : vector<1x32x128xf32> to vector<2x32x128xf32>
    %332 = arith.mulf %330, %331 : vector<2x32x128xf32>
    %333 = vector.broadcast %317 : vector<2x1x128xf32> to vector<2x32x128xf32>
    %334 = vector.broadcast %319 : vector<1x32x128xf32> to vector<2x32x128xf32>
    %335 = arith.mulf %333, %334 : vector<2x32x128xf32>
    %336 = arith.addf %332, %335 : vector<2x32x128xf32>
    %337 = arith.addf %313, %336 : vector<2x32x128xf32>
    %c0_197 = arith.constant 0 : index
    %c0_198 = arith.constant 0 : index
    %c14 = arith.constant 14 : index
    %c0_199 = arith.constant 0 : index
    %338 = vector.load %arg2[%c0_197, %c0_198, %c14, %c0_199] : memref<1x2x64x128xf32, #tpu.memory_space<vmem>>, vector<1x2x1x128xf32>
    %339 = vector.shape_cast %338 : vector<1x2x1x128xf32> to vector<2x1x128xf32>
    %c0_200 = arith.constant 0 : index
    %c0_201 = arith.constant 0 : index
    %c46 = arith.constant 46 : index
    %c0_202 = arith.constant 0 : index
    %340 = vector.load %arg2[%c0_200, %c0_201, %c46, %c0_202] : memref<1x2x64x128xf32, #tpu.memory_space<vmem>>, vector<1x2x1x128xf32>
    %341 = vector.shape_cast %340 : vector<1x2x1x128xf32> to vector<2x1x128xf32>
    %c0_203 = arith.constant 0 : index
    %c14_204 = arith.constant 14 : index
    %c0_205 = arith.constant 0 : index
    %c0_206 = arith.constant 0 : index
    %342 = vector.load %arg3[%c0_203, %c14_204, %c0_205, %c0_206] : memref<1x64x32x128xf32, #tpu.memory_space<vmem>>, vector<1x1x32x128xf32>
    %343 = vector.shape_cast %342 : vector<1x1x32x128xf32> to vector<1x32x128xf32>
    %c0_207 = arith.constant 0 : index
    %c46_208 = arith.constant 46 : index
    %c0_209 = arith.constant 0 : index
    %c0_210 = arith.constant 0 : index
    %344 = vector.load %arg3[%c0_207, %c46_208, %c0_209, %c0_210] : memref<1x64x32x128xf32, #tpu.memory_space<vmem>>, vector<1x1x32x128xf32>
    %345 = vector.shape_cast %344 : vector<1x1x32x128xf32> to vector<1x32x128xf32>
    %346 = vector.broadcast %339 : vector<2x1x128xf32> to vector<2x32x128xf32>
    %347 = vector.broadcast %343 : vector<1x32x128xf32> to vector<2x32x128xf32>
    %348 = arith.mulf %346, %347 : vector<2x32x128xf32>
    %349 = vector.broadcast %341 : vector<2x1x128xf32> to vector<2x32x128xf32>
    %350 = vector.broadcast %345 : vector<1x32x128xf32> to vector<2x32x128xf32>
    %351 = arith.mulf %349, %350 : vector<2x32x128xf32>
    %352 = arith.subf %348, %351 : vector<2x32x128xf32>
    %353 = arith.addf %329, %352 : vector<2x32x128xf32>
    %354 = vector.broadcast %339 : vector<2x1x128xf32> to vector<2x32x128xf32>
    %355 = vector.broadcast %345 : vector<1x32x128xf32> to vector<2x32x128xf32>
    %356 = arith.mulf %354, %355 : vector<2x32x128xf32>
    %357 = vector.broadcast %341 : vector<2x1x128xf32> to vector<2x32x128xf32>
    %358 = vector.broadcast %343 : vector<1x32x128xf32> to vector<2x32x128xf32>
    %359 = arith.mulf %357, %358 : vector<2x32x128xf32>
    %360 = arith.addf %356, %359 : vector<2x32x128xf32>
    %361 = arith.addf %337, %360 : vector<2x32x128xf32>
    %c0_211 = arith.constant 0 : index
    %c0_212 = arith.constant 0 : index
    %c15 = arith.constant 15 : index
    %c0_213 = arith.constant 0 : index
    %362 = vector.load %arg2[%c0_211, %c0_212, %c15, %c0_213] : memref<1x2x64x128xf32, #tpu.memory_space<vmem>>, vector<1x2x1x128xf32>
    %363 = vector.shape_cast %362 : vector<1x2x1x128xf32> to vector<2x1x128xf32>
    %c0_214 = arith.constant 0 : index
    %c0_215 = arith.constant 0 : index
    %c47 = arith.constant 47 : index
    %c0_216 = arith.constant 0 : index
    %364 = vector.load %arg2[%c0_214, %c0_215, %c47, %c0_216] : memref<1x2x64x128xf32, #tpu.memory_space<vmem>>, vector<1x2x1x128xf32>
    %365 = vector.shape_cast %364 : vector<1x2x1x128xf32> to vector<2x1x128xf32>
    %c0_217 = arith.constant 0 : index
    %c15_218 = arith.constant 15 : index
    %c0_219 = arith.constant 0 : index
    %c0_220 = arith.constant 0 : index
    %366 = vector.load %arg3[%c0_217, %c15_218, %c0_219, %c0_220] : memref<1x64x32x128xf32, #tpu.memory_space<vmem>>, vector<1x1x32x128xf32>
    %367 = vector.shape_cast %366 : vector<1x1x32x128xf32> to vector<1x32x128xf32>
    %c0_221 = arith.constant 0 : index
    %c47_222 = arith.constant 47 : index
    %c0_223 = arith.constant 0 : index
    %c0_224 = arith.constant 0 : index
    %368 = vector.load %arg3[%c0_221, %c47_222, %c0_223, %c0_224] : memref<1x64x32x128xf32, #tpu.memory_space<vmem>>, vector<1x1x32x128xf32>
    %369 = vector.shape_cast %368 : vector<1x1x32x128xf32> to vector<1x32x128xf32>
    %370 = vector.broadcast %363 : vector<2x1x128xf32> to vector<2x32x128xf32>
    %371 = vector.broadcast %367 : vector<1x32x128xf32> to vector<2x32x128xf32>
    %372 = arith.mulf %370, %371 : vector<2x32x128xf32>
    %373 = vector.broadcast %365 : vector<2x1x128xf32> to vector<2x32x128xf32>
    %374 = vector.broadcast %369 : vector<1x32x128xf32> to vector<2x32x128xf32>
    %375 = arith.mulf %373, %374 : vector<2x32x128xf32>
    %376 = arith.subf %372, %375 : vector<2x32x128xf32>
    %377 = arith.addf %353, %376 : vector<2x32x128xf32>
    %378 = vector.broadcast %363 : vector<2x1x128xf32> to vector<2x32x128xf32>
    %379 = vector.broadcast %369 : vector<1x32x128xf32> to vector<2x32x128xf32>
    %380 = arith.mulf %378, %379 : vector<2x32x128xf32>
    %381 = vector.broadcast %365 : vector<2x1x128xf32> to vector<2x32x128xf32>
    %382 = vector.broadcast %367 : vector<1x32x128xf32> to vector<2x32x128xf32>
    %383 = arith.mulf %381, %382 : vector<2x32x128xf32>
    %384 = arith.addf %380, %383 : vector<2x32x128xf32>
    %385 = arith.addf %361, %384 : vector<2x32x128xf32>
    %c0_225 = arith.constant 0 : index
    %c0_226 = arith.constant 0 : index
    %c16 = arith.constant 16 : index
    %c0_227 = arith.constant 0 : index
    %386 = vector.load %arg2[%c0_225, %c0_226, %c16, %c0_227] : memref<1x2x64x128xf32, #tpu.memory_space<vmem>>, vector<1x2x1x128xf32>
    %387 = vector.shape_cast %386 : vector<1x2x1x128xf32> to vector<2x1x128xf32>
    %c0_228 = arith.constant 0 : index
    %c0_229 = arith.constant 0 : index
    %c48 = arith.constant 48 : index
    %c0_230 = arith.constant 0 : index
    %388 = vector.load %arg2[%c0_228, %c0_229, %c48, %c0_230] : memref<1x2x64x128xf32, #tpu.memory_space<vmem>>, vector<1x2x1x128xf32>
    %389 = vector.shape_cast %388 : vector<1x2x1x128xf32> to vector<2x1x128xf32>
    %c0_231 = arith.constant 0 : index
    %c16_232 = arith.constant 16 : index
    %c0_233 = arith.constant 0 : index
    %c0_234 = arith.constant 0 : index
    %390 = vector.load %arg3[%c0_231, %c16_232, %c0_233, %c0_234] : memref<1x64x32x128xf32, #tpu.memory_space<vmem>>, vector<1x1x32x128xf32>
    %391 = vector.shape_cast %390 : vector<1x1x32x128xf32> to vector<1x32x128xf32>
    %c0_235 = arith.constant 0 : index
    %c48_236 = arith.constant 48 : index
    %c0_237 = arith.constant 0 : index
    %c0_238 = arith.constant 0 : index
    %392 = vector.load %arg3[%c0_235, %c48_236, %c0_237, %c0_238] : memref<1x64x32x128xf32, #tpu.memory_space<vmem>>, vector<1x1x32x128xf32>
    %393 = vector.shape_cast %392 : vector<1x1x32x128xf32> to vector<1x32x128xf32>
    %394 = vector.broadcast %387 : vector<2x1x128xf32> to vector<2x32x128xf32>
    %395 = vector.broadcast %391 : vector<1x32x128xf32> to vector<2x32x128xf32>
    %396 = arith.mulf %394, %395 : vector<2x32x128xf32>
    %397 = vector.broadcast %389 : vector<2x1x128xf32> to vector<2x32x128xf32>
    %398 = vector.broadcast %393 : vector<1x32x128xf32> to vector<2x32x128xf32>
    %399 = arith.mulf %397, %398 : vector<2x32x128xf32>
    %400 = arith.subf %396, %399 : vector<2x32x128xf32>
    %401 = arith.addf %377, %400 : vector<2x32x128xf32>
    %402 = vector.broadcast %387 : vector<2x1x128xf32> to vector<2x32x128xf32>
    %403 = vector.broadcast %393 : vector<1x32x128xf32> to vector<2x32x128xf32>
    %404 = arith.mulf %402, %403 : vector<2x32x128xf32>
    %405 = vector.broadcast %389 : vector<2x1x128xf32> to vector<2x32x128xf32>
    %406 = vector.broadcast %391 : vector<1x32x128xf32> to vector<2x32x128xf32>
    %407 = arith.mulf %405, %406 : vector<2x32x128xf32>
    %408 = arith.addf %404, %407 : vector<2x32x128xf32>
    %409 = arith.addf %385, %408 : vector<2x32x128xf32>
    %c0_239 = arith.constant 0 : index
    %c0_240 = arith.constant 0 : index
    %c17 = arith.constant 17 : index
    %c0_241 = arith.constant 0 : index
    %410 = vector.load %arg2[%c0_239, %c0_240, %c17, %c0_241] : memref<1x2x64x128xf32, #tpu.memory_space<vmem>>, vector<1x2x1x128xf32>
    %411 = vector.shape_cast %410 : vector<1x2x1x128xf32> to vector<2x1x128xf32>
    %c0_242 = arith.constant 0 : index
    %c0_243 = arith.constant 0 : index
    %c49 = arith.constant 49 : index
    %c0_244 = arith.constant 0 : index
    %412 = vector.load %arg2[%c0_242, %c0_243, %c49, %c0_244] : memref<1x2x64x128xf32, #tpu.memory_space<vmem>>, vector<1x2x1x128xf32>
    %413 = vector.shape_cast %412 : vector<1x2x1x128xf32> to vector<2x1x128xf32>
    %c0_245 = arith.constant 0 : index
    %c17_246 = arith.constant 17 : index
    %c0_247 = arith.constant 0 : index
    %c0_248 = arith.constant 0 : index
    %414 = vector.load %arg3[%c0_245, %c17_246, %c0_247, %c0_248] : memref<1x64x32x128xf32, #tpu.memory_space<vmem>>, vector<1x1x32x128xf32>
    %415 = vector.shape_cast %414 : vector<1x1x32x128xf32> to vector<1x32x128xf32>
    %c0_249 = arith.constant 0 : index
    %c49_250 = arith.constant 49 : index
    %c0_251 = arith.constant 0 : index
    %c0_252 = arith.constant 0 : index
    %416 = vector.load %arg3[%c0_249, %c49_250, %c0_251, %c0_252] : memref<1x64x32x128xf32, #tpu.memory_space<vmem>>, vector<1x1x32x128xf32>
    %417 = vector.shape_cast %416 : vector<1x1x32x128xf32> to vector<1x32x128xf32>
    %418 = vector.broadcast %411 : vector<2x1x128xf32> to vector<2x32x128xf32>
    %419 = vector.broadcast %415 : vector<1x32x128xf32> to vector<2x32x128xf32>
    %420 = arith.mulf %418, %419 : vector<2x32x128xf32>
    %421 = vector.broadcast %413 : vector<2x1x128xf32> to vector<2x32x128xf32>
    %422 = vector.broadcast %417 : vector<1x32x128xf32> to vector<2x32x128xf32>
    %423 = arith.mulf %421, %422 : vector<2x32x128xf32>
    %424 = arith.subf %420, %423 : vector<2x32x128xf32>
    %425 = arith.addf %401, %424 : vector<2x32x128xf32>
    %426 = vector.broadcast %411 : vector<2x1x128xf32> to vector<2x32x128xf32>
    %427 = vector.broadcast %417 : vector<1x32x128xf32> to vector<2x32x128xf32>
    %428 = arith.mulf %426, %427 : vector<2x32x128xf32>
    %429 = vector.broadcast %413 : vector<2x1x128xf32> to vector<2x32x128xf32>
    %430 = vector.broadcast %415 : vector<1x32x128xf32> to vector<2x32x128xf32>
    %431 = arith.mulf %429, %430 : vector<2x32x128xf32>
    %432 = arith.addf %428, %431 : vector<2x32x128xf32>
    %433 = arith.addf %409, %432 : vector<2x32x128xf32>
    %c0_253 = arith.constant 0 : index
    %c0_254 = arith.constant 0 : index
    %c18 = arith.constant 18 : index
    %c0_255 = arith.constant 0 : index
    %434 = vector.load %arg2[%c0_253, %c0_254, %c18, %c0_255] : memref<1x2x64x128xf32, #tpu.memory_space<vmem>>, vector<1x2x1x128xf32>
    %435 = vector.shape_cast %434 : vector<1x2x1x128xf32> to vector<2x1x128xf32>
    %c0_256 = arith.constant 0 : index
    %c0_257 = arith.constant 0 : index
    %c50 = arith.constant 50 : index
    %c0_258 = arith.constant 0 : index
    %436 = vector.load %arg2[%c0_256, %c0_257, %c50, %c0_258] : memref<1x2x64x128xf32, #tpu.memory_space<vmem>>, vector<1x2x1x128xf32>
    %437 = vector.shape_cast %436 : vector<1x2x1x128xf32> to vector<2x1x128xf32>
    %c0_259 = arith.constant 0 : index
    %c18_260 = arith.constant 18 : index
    %c0_261 = arith.constant 0 : index
    %c0_262 = arith.constant 0 : index
    %438 = vector.load %arg3[%c0_259, %c18_260, %c0_261, %c0_262] : memref<1x64x32x128xf32, #tpu.memory_space<vmem>>, vector<1x1x32x128xf32>
    %439 = vector.shape_cast %438 : vector<1x1x32x128xf32> to vector<1x32x128xf32>
    %c0_263 = arith.constant 0 : index
    %c50_264 = arith.constant 50 : index
    %c0_265 = arith.constant 0 : index
    %c0_266 = arith.constant 0 : index
    %440 = vector.load %arg3[%c0_263, %c50_264, %c0_265, %c0_266] : memref<1x64x32x128xf32, #tpu.memory_space<vmem>>, vector<1x1x32x128xf32>
    %441 = vector.shape_cast %440 : vector<1x1x32x128xf32> to vector<1x32x128xf32>
    %442 = vector.broadcast %435 : vector<2x1x128xf32> to vector<2x32x128xf32>
    %443 = vector.broadcast %439 : vector<1x32x128xf32> to vector<2x32x128xf32>
    %444 = arith.mulf %442, %443 : vector<2x32x128xf32>
    %445 = vector.broadcast %437 : vector<2x1x128xf32> to vector<2x32x128xf32>
    %446 = vector.broadcast %441 : vector<1x32x128xf32> to vector<2x32x128xf32>
    %447 = arith.mulf %445, %446 : vector<2x32x128xf32>
    %448 = arith.subf %444, %447 : vector<2x32x128xf32>
    %449 = arith.addf %425, %448 : vector<2x32x128xf32>
    %450 = vector.broadcast %435 : vector<2x1x128xf32> to vector<2x32x128xf32>
    %451 = vector.broadcast %441 : vector<1x32x128xf32> to vector<2x32x128xf32>
    %452 = arith.mulf %450, %451 : vector<2x32x128xf32>
    %453 = vector.broadcast %437 : vector<2x1x128xf32> to vector<2x32x128xf32>
    %454 = vector.broadcast %439 : vector<1x32x128xf32> to vector<2x32x128xf32>
    %455 = arith.mulf %453, %454 : vector<2x32x128xf32>
    %456 = arith.addf %452, %455 : vector<2x32x128xf32>
    %457 = arith.addf %433, %456 : vector<2x32x128xf32>
    %c0_267 = arith.constant 0 : index
    %c0_268 = arith.constant 0 : index
    %c19 = arith.constant 19 : index
    %c0_269 = arith.constant 0 : index
    %458 = vector.load %arg2[%c0_267, %c0_268, %c19, %c0_269] : memref<1x2x64x128xf32, #tpu.memory_space<vmem>>, vector<1x2x1x128xf32>
    %459 = vector.shape_cast %458 : vector<1x2x1x128xf32> to vector<2x1x128xf32>
    %c0_270 = arith.constant 0 : index
    %c0_271 = arith.constant 0 : index
    %c51 = arith.constant 51 : index
    %c0_272 = arith.constant 0 : index
    %460 = vector.load %arg2[%c0_270, %c0_271, %c51, %c0_272] : memref<1x2x64x128xf32, #tpu.memory_space<vmem>>, vector<1x2x1x128xf32>
    %461 = vector.shape_cast %460 : vector<1x2x1x128xf32> to vector<2x1x128xf32>
    %c0_273 = arith.constant 0 : index
    %c19_274 = arith.constant 19 : index
    %c0_275 = arith.constant 0 : index
    %c0_276 = arith.constant 0 : index
    %462 = vector.load %arg3[%c0_273, %c19_274, %c0_275, %c0_276] : memref<1x64x32x128xf32, #tpu.memory_space<vmem>>, vector<1x1x32x128xf32>
    %463 = vector.shape_cast %462 : vector<1x1x32x128xf32> to vector<1x32x128xf32>
    %c0_277 = arith.constant 0 : index
    %c51_278 = arith.constant 51 : index
    %c0_279 = arith.constant 0 : index
    %c0_280 = arith.constant 0 : index
    %464 = vector.load %arg3[%c0_277, %c51_278, %c0_279, %c0_280] : memref<1x64x32x128xf32, #tpu.memory_space<vmem>>, vector<1x1x32x128xf32>
    %465 = vector.shape_cast %464 : vector<1x1x32x128xf32> to vector<1x32x128xf32>
    %466 = vector.broadcast %459 : vector<2x1x128xf32> to vector<2x32x128xf32>
    %467 = vector.broadcast %463 : vector<1x32x128xf32> to vector<2x32x128xf32>
    %468 = arith.mulf %466, %467 : vector<2x32x128xf32>
    %469 = vector.broadcast %461 : vector<2x1x128xf32> to vector<2x32x128xf32>
    %470 = vector.broadcast %465 : vector<1x32x128xf32> to vector<2x32x128xf32>
    %471 = arith.mulf %469, %470 : vector<2x32x128xf32>
    %472 = arith.subf %468, %471 : vector<2x32x128xf32>
    %473 = arith.addf %449, %472 : vector<2x32x128xf32>
    %474 = vector.broadcast %459 : vector<2x1x128xf32> to vector<2x32x128xf32>
    %475 = vector.broadcast %465 : vector<1x32x128xf32> to vector<2x32x128xf32>
    %476 = arith.mulf %474, %475 : vector<2x32x128xf32>
    %477 = vector.broadcast %461 : vector<2x1x128xf32> to vector<2x32x128xf32>
    %478 = vector.broadcast %463 : vector<1x32x128xf32> to vector<2x32x128xf32>
    %479 = arith.mulf %477, %478 : vector<2x32x128xf32>
    %480 = arith.addf %476, %479 : vector<2x32x128xf32>
    %481 = arith.addf %457, %480 : vector<2x32x128xf32>
    %c0_281 = arith.constant 0 : index
    %c0_282 = arith.constant 0 : index
    %c20 = arith.constant 20 : index
    %c0_283 = arith.constant 0 : index
    %482 = vector.load %arg2[%c0_281, %c0_282, %c20, %c0_283] : memref<1x2x64x128xf32, #tpu.memory_space<vmem>>, vector<1x2x1x128xf32>
    %483 = vector.shape_cast %482 : vector<1x2x1x128xf32> to vector<2x1x128xf32>
    %c0_284 = arith.constant 0 : index
    %c0_285 = arith.constant 0 : index
    %c52 = arith.constant 52 : index
    %c0_286 = arith.constant 0 : index
    %484 = vector.load %arg2[%c0_284, %c0_285, %c52, %c0_286] : memref<1x2x64x128xf32, #tpu.memory_space<vmem>>, vector<1x2x1x128xf32>
    %485 = vector.shape_cast %484 : vector<1x2x1x128xf32> to vector<2x1x128xf32>
    %c0_287 = arith.constant 0 : index
    %c20_288 = arith.constant 20 : index
    %c0_289 = arith.constant 0 : index
    %c0_290 = arith.constant 0 : index
    %486 = vector.load %arg3[%c0_287, %c20_288, %c0_289, %c0_290] : memref<1x64x32x128xf32, #tpu.memory_space<vmem>>, vector<1x1x32x128xf32>
    %487 = vector.shape_cast %486 : vector<1x1x32x128xf32> to vector<1x32x128xf32>
    %c0_291 = arith.constant 0 : index
    %c52_292 = arith.constant 52 : index
    %c0_293 = arith.constant 0 : index
    %c0_294 = arith.constant 0 : index
    %488 = vector.load %arg3[%c0_291, %c52_292, %c0_293, %c0_294] : memref<1x64x32x128xf32, #tpu.memory_space<vmem>>, vector<1x1x32x128xf32>
    %489 = vector.shape_cast %488 : vector<1x1x32x128xf32> to vector<1x32x128xf32>
    %490 = vector.broadcast %483 : vector<2x1x128xf32> to vector<2x32x128xf32>
    %491 = vector.broadcast %487 : vector<1x32x128xf32> to vector<2x32x128xf32>
    %492 = arith.mulf %490, %491 : vector<2x32x128xf32>
    %493 = vector.broadcast %485 : vector<2x1x128xf32> to vector<2x32x128xf32>
    %494 = vector.broadcast %489 : vector<1x32x128xf32> to vector<2x32x128xf32>
    %495 = arith.mulf %493, %494 : vector<2x32x128xf32>
    %496 = arith.subf %492, %495 : vector<2x32x128xf32>
    %497 = arith.addf %473, %496 : vector<2x32x128xf32>
    %498 = vector.broadcast %483 : vector<2x1x128xf32> to vector<2x32x128xf32>
    %499 = vector.broadcast %489 : vector<1x32x128xf32> to vector<2x32x128xf32>
    %500 = arith.mulf %498, %499 : vector<2x32x128xf32>
    %501 = vector.broadcast %485 : vector<2x1x128xf32> to vector<2x32x128xf32>
    %502 = vector.broadcast %487 : vector<1x32x128xf32> to vector<2x32x128xf32>
    %503 = arith.mulf %501, %502 : vector<2x32x128xf32>
    %504 = arith.addf %500, %503 : vector<2x32x128xf32>
    %505 = arith.addf %481, %504 : vector<2x32x128xf32>
    %c0_295 = arith.constant 0 : index
    %c0_296 = arith.constant 0 : index
    %c21 = arith.constant 21 : index
    %c0_297 = arith.constant 0 : index
    %506 = vector.load %arg2[%c0_295, %c0_296, %c21, %c0_297] : memref<1x2x64x128xf32, #tpu.memory_space<vmem>>, vector<1x2x1x128xf32>
    %507 = vector.shape_cast %506 : vector<1x2x1x128xf32> to vector<2x1x128xf32>
    %c0_298 = arith.constant 0 : index
    %c0_299 = arith.constant 0 : index
    %c53 = arith.constant 53 : index
    %c0_300 = arith.constant 0 : index
    %508 = vector.load %arg2[%c0_298, %c0_299, %c53, %c0_300] : memref<1x2x64x128xf32, #tpu.memory_space<vmem>>, vector<1x2x1x128xf32>
    %509 = vector.shape_cast %508 : vector<1x2x1x128xf32> to vector<2x1x128xf32>
    %c0_301 = arith.constant 0 : index
    %c21_302 = arith.constant 21 : index
    %c0_303 = arith.constant 0 : index
    %c0_304 = arith.constant 0 : index
    %510 = vector.load %arg3[%c0_301, %c21_302, %c0_303, %c0_304] : memref<1x64x32x128xf32, #tpu.memory_space<vmem>>, vector<1x1x32x128xf32>
    %511 = vector.shape_cast %510 : vector<1x1x32x128xf32> to vector<1x32x128xf32>
    %c0_305 = arith.constant 0 : index
    %c53_306 = arith.constant 53 : index
    %c0_307 = arith.constant 0 : index
    %c0_308 = arith.constant 0 : index
    %512 = vector.load %arg3[%c0_305, %c53_306, %c0_307, %c0_308] : memref<1x64x32x128xf32, #tpu.memory_space<vmem>>, vector<1x1x32x128xf32>
    %513 = vector.shape_cast %512 : vector<1x1x32x128xf32> to vector<1x32x128xf32>
    %514 = vector.broadcast %507 : vector<2x1x128xf32> to vector<2x32x128xf32>
    %515 = vector.broadcast %511 : vector<1x32x128xf32> to vector<2x32x128xf32>
    %516 = arith.mulf %514, %515 : vector<2x32x128xf32>
    %517 = vector.broadcast %509 : vector<2x1x128xf32> to vector<2x32x128xf32>
    %518 = vector.broadcast %513 : vector<1x32x128xf32> to vector<2x32x128xf32>
    %519 = arith.mulf %517, %518 : vector<2x32x128xf32>
    %520 = arith.subf %516, %519 : vector<2x32x128xf32>
    %521 = arith.addf %497, %520 : vector<2x32x128xf32>
    %522 = vector.broadcast %507 : vector<2x1x128xf32> to vector<2x32x128xf32>
    %523 = vector.broadcast %513 : vector<1x32x128xf32> to vector<2x32x128xf32>
    %524 = arith.mulf %522, %523 : vector<2x32x128xf32>
    %525 = vector.broadcast %509 : vector<2x1x128xf32> to vector<2x32x128xf32>
    %526 = vector.broadcast %511 : vector<1x32x128xf32> to vector<2x32x128xf32>
    %527 = arith.mulf %525, %526 : vector<2x32x128xf32>
    %528 = arith.addf %524, %527 : vector<2x32x128xf32>
    %529 = arith.addf %505, %528 : vector<2x32x128xf32>
    %c0_309 = arith.constant 0 : index
    %c0_310 = arith.constant 0 : index
    %c22 = arith.constant 22 : index
    %c0_311 = arith.constant 0 : index
    %530 = vector.load %arg2[%c0_309, %c0_310, %c22, %c0_311] : memref<1x2x64x128xf32, #tpu.memory_space<vmem>>, vector<1x2x1x128xf32>
    %531 = vector.shape_cast %530 : vector<1x2x1x128xf32> to vector<2x1x128xf32>
    %c0_312 = arith.constant 0 : index
    %c0_313 = arith.constant 0 : index
    %c54 = arith.constant 54 : index
    %c0_314 = arith.constant 0 : index
    %532 = vector.load %arg2[%c0_312, %c0_313, %c54, %c0_314] : memref<1x2x64x128xf32, #tpu.memory_space<vmem>>, vector<1x2x1x128xf32>
    %533 = vector.shape_cast %532 : vector<1x2x1x128xf32> to vector<2x1x128xf32>
    %c0_315 = arith.constant 0 : index
    %c22_316 = arith.constant 22 : index
    %c0_317 = arith.constant 0 : index
    %c0_318 = arith.constant 0 : index
    %534 = vector.load %arg3[%c0_315, %c22_316, %c0_317, %c0_318] : memref<1x64x32x128xf32, #tpu.memory_space<vmem>>, vector<1x1x32x128xf32>
    %535 = vector.shape_cast %534 : vector<1x1x32x128xf32> to vector<1x32x128xf32>
    %c0_319 = arith.constant 0 : index
    %c54_320 = arith.constant 54 : index
    %c0_321 = arith.constant 0 : index
    %c0_322 = arith.constant 0 : index
    %536 = vector.load %arg3[%c0_319, %c54_320, %c0_321, %c0_322] : memref<1x64x32x128xf32, #tpu.memory_space<vmem>>, vector<1x1x32x128xf32>
    %537 = vector.shape_cast %536 : vector<1x1x32x128xf32> to vector<1x32x128xf32>
    %538 = vector.broadcast %531 : vector<2x1x128xf32> to vector<2x32x128xf32>
    %539 = vector.broadcast %535 : vector<1x32x128xf32> to vector<2x32x128xf32>
    %540 = arith.mulf %538, %539 : vector<2x32x128xf32>
    %541 = vector.broadcast %533 : vector<2x1x128xf32> to vector<2x32x128xf32>
    %542 = vector.broadcast %537 : vector<1x32x128xf32> to vector<2x32x128xf32>
    %543 = arith.mulf %541, %542 : vector<2x32x128xf32>
    %544 = arith.subf %540, %543 : vector<2x32x128xf32>
    %545 = arith.addf %521, %544 : vector<2x32x128xf32>
    %546 = vector.broadcast %531 : vector<2x1x128xf32> to vector<2x32x128xf32>
    %547 = vector.broadcast %537 : vector<1x32x128xf32> to vector<2x32x128xf32>
    %548 = arith.mulf %546, %547 : vector<2x32x128xf32>
    %549 = vector.broadcast %533 : vector<2x1x128xf32> to vector<2x32x128xf32>
    %550 = vector.broadcast %535 : vector<1x32x128xf32> to vector<2x32x128xf32>
    %551 = arith.mulf %549, %550 : vector<2x32x128xf32>
    %552 = arith.addf %548, %551 : vector<2x32x128xf32>
    %553 = arith.addf %529, %552 : vector<2x32x128xf32>
    %c0_323 = arith.constant 0 : index
    %c0_324 = arith.constant 0 : index
    %c23 = arith.constant 23 : index
    %c0_325 = arith.constant 0 : index
    %554 = vector.load %arg2[%c0_323, %c0_324, %c23, %c0_325] : memref<1x2x64x128xf32, #tpu.memory_space<vmem>>, vector<1x2x1x128xf32>
    %555 = vector.shape_cast %554 : vector<1x2x1x128xf32> to vector<2x1x128xf32>
    %c0_326 = arith.constant 0 : index
    %c0_327 = arith.constant 0 : index
    %c55 = arith.constant 55 : index
    %c0_328 = arith.constant 0 : index
    %556 = vector.load %arg2[%c0_326, %c0_327, %c55, %c0_328] : memref<1x2x64x128xf32, #tpu.memory_space<vmem>>, vector<1x2x1x128xf32>
    %557 = vector.shape_cast %556 : vector<1x2x1x128xf32> to vector<2x1x128xf32>
    %c0_329 = arith.constant 0 : index
    %c23_330 = arith.constant 23 : index
    %c0_331 = arith.constant 0 : index
    %c0_332 = arith.constant 0 : index
    %558 = vector.load %arg3[%c0_329, %c23_330, %c0_331, %c0_332] : memref<1x64x32x128xf32, #tpu.memory_space<vmem>>, vector<1x1x32x128xf32>
    %559 = vector.shape_cast %558 : vector<1x1x32x128xf32> to vector<1x32x128xf32>
    %c0_333 = arith.constant 0 : index
    %c55_334 = arith.constant 55 : index
    %c0_335 = arith.constant 0 : index
    %c0_336 = arith.constant 0 : index
    %560 = vector.load %arg3[%c0_333, %c55_334, %c0_335, %c0_336] : memref<1x64x32x128xf32, #tpu.memory_space<vmem>>, vector<1x1x32x128xf32>
    %561 = vector.shape_cast %560 : vector<1x1x32x128xf32> to vector<1x32x128xf32>
    %562 = vector.broadcast %555 : vector<2x1x128xf32> to vector<2x32x128xf32>
    %563 = vector.broadcast %559 : vector<1x32x128xf32> to vector<2x32x128xf32>
    %564 = arith.mulf %562, %563 : vector<2x32x128xf32>
    %565 = vector.broadcast %557 : vector<2x1x128xf32> to vector<2x32x128xf32>
    %566 = vector.broadcast %561 : vector<1x32x128xf32> to vector<2x32x128xf32>
    %567 = arith.mulf %565, %566 : vector<2x32x128xf32>
    %568 = arith.subf %564, %567 : vector<2x32x128xf32>
    %569 = arith.addf %545, %568 : vector<2x32x128xf32>
    %570 = vector.broadcast %555 : vector<2x1x128xf32> to vector<2x32x128xf32>
    %571 = vector.broadcast %561 : vector<1x32x128xf32> to vector<2x32x128xf32>
    %572 = arith.mulf %570, %571 : vector<2x32x128xf32>
    %573 = vector.broadcast %557 : vector<2x1x128xf32> to vector<2x32x128xf32>
    %574 = vector.broadcast %559 : vector<1x32x128xf32> to vector<2x32x128xf32>
    %575 = arith.mulf %573, %574 : vector<2x32x128xf32>
    %576 = arith.addf %572, %575 : vector<2x32x128xf32>
    %577 = arith.addf %553, %576 : vector<2x32x128xf32>
    %c0_337 = arith.constant 0 : index
    %c0_338 = arith.constant 0 : index
    %c24 = arith.constant 24 : index
    %c0_339 = arith.constant 0 : index
    %578 = vector.load %arg2[%c0_337, %c0_338, %c24, %c0_339] : memref<1x2x64x128xf32, #tpu.memory_space<vmem>>, vector<1x2x1x128xf32>
    %579 = vector.shape_cast %578 : vector<1x2x1x128xf32> to vector<2x1x128xf32>
    %c0_340 = arith.constant 0 : index
    %c0_341 = arith.constant 0 : index
    %c56 = arith.constant 56 : index
    %c0_342 = arith.constant 0 : index
    %580 = vector.load %arg2[%c0_340, %c0_341, %c56, %c0_342] : memref<1x2x64x128xf32, #tpu.memory_space<vmem>>, vector<1x2x1x128xf32>
    %581 = vector.shape_cast %580 : vector<1x2x1x128xf32> to vector<2x1x128xf32>
    %c0_343 = arith.constant 0 : index
    %c24_344 = arith.constant 24 : index
    %c0_345 = arith.constant 0 : index
    %c0_346 = arith.constant 0 : index
    %582 = vector.load %arg3[%c0_343, %c24_344, %c0_345, %c0_346] : memref<1x64x32x128xf32, #tpu.memory_space<vmem>>, vector<1x1x32x128xf32>
    %583 = vector.shape_cast %582 : vector<1x1x32x128xf32> to vector<1x32x128xf32>
    %c0_347 = arith.constant 0 : index
    %c56_348 = arith.constant 56 : index
    %c0_349 = arith.constant 0 : index
    %c0_350 = arith.constant 0 : index
    %584 = vector.load %arg3[%c0_347, %c56_348, %c0_349, %c0_350] : memref<1x64x32x128xf32, #tpu.memory_space<vmem>>, vector<1x1x32x128xf32>
    %585 = vector.shape_cast %584 : vector<1x1x32x128xf32> to vector<1x32x128xf32>
    %586 = vector.broadcast %579 : vector<2x1x128xf32> to vector<2x32x128xf32>
    %587 = vector.broadcast %583 : vector<1x32x128xf32> to vector<2x32x128xf32>
    %588 = arith.mulf %586, %587 : vector<2x32x128xf32>
    %589 = vector.broadcast %581 : vector<2x1x128xf32> to vector<2x32x128xf32>
    %590 = vector.broadcast %585 : vector<1x32x128xf32> to vector<2x32x128xf32>
    %591 = arith.mulf %589, %590 : vector<2x32x128xf32>
    %592 = arith.subf %588, %591 : vector<2x32x128xf32>
    %593 = arith.addf %569, %592 : vector<2x32x128xf32>
    %594 = vector.broadcast %579 : vector<2x1x128xf32> to vector<2x32x128xf32>
    %595 = vector.broadcast %585 : vector<1x32x128xf32> to vector<2x32x128xf32>
    %596 = arith.mulf %594, %595 : vector<2x32x128xf32>
    %597 = vector.broadcast %581 : vector<2x1x128xf32> to vector<2x32x128xf32>
    %598 = vector.broadcast %583 : vector<1x32x128xf32> to vector<2x32x128xf32>
    %599 = arith.mulf %597, %598 : vector<2x32x128xf32>
    %600 = arith.addf %596, %599 : vector<2x32x128xf32>
    %601 = arith.addf %577, %600 : vector<2x32x128xf32>
    %c0_351 = arith.constant 0 : index
    %c0_352 = arith.constant 0 : index
    %c25 = arith.constant 25 : index
    %c0_353 = arith.constant 0 : index
    %602 = vector.load %arg2[%c0_351, %c0_352, %c25, %c0_353] : memref<1x2x64x128xf32, #tpu.memory_space<vmem>>, vector<1x2x1x128xf32>
    %603 = vector.shape_cast %602 : vector<1x2x1x128xf32> to vector<2x1x128xf32>
    %c0_354 = arith.constant 0 : index
    %c0_355 = arith.constant 0 : index
    %c57 = arith.constant 57 : index
    %c0_356 = arith.constant 0 : index
    %604 = vector.load %arg2[%c0_354, %c0_355, %c57, %c0_356] : memref<1x2x64x128xf32, #tpu.memory_space<vmem>>, vector<1x2x1x128xf32>
    %605 = vector.shape_cast %604 : vector<1x2x1x128xf32> to vector<2x1x128xf32>
    %c0_357 = arith.constant 0 : index
    %c25_358 = arith.constant 25 : index
    %c0_359 = arith.constant 0 : index
    %c0_360 = arith.constant 0 : index
    %606 = vector.load %arg3[%c0_357, %c25_358, %c0_359, %c0_360] : memref<1x64x32x128xf32, #tpu.memory_space<vmem>>, vector<1x1x32x128xf32>
    %607 = vector.shape_cast %606 : vector<1x1x32x128xf32> to vector<1x32x128xf32>
    %c0_361 = arith.constant 0 : index
    %c57_362 = arith.constant 57 : index
    %c0_363 = arith.constant 0 : index
    %c0_364 = arith.constant 0 : index
    %608 = vector.load %arg3[%c0_361, %c57_362, %c0_363, %c0_364] : memref<1x64x32x128xf32, #tpu.memory_space<vmem>>, vector<1x1x32x128xf32>
    %609 = vector.shape_cast %608 : vector<1x1x32x128xf32> to vector<1x32x128xf32>
    %610 = vector.broadcast %603 : vector<2x1x128xf32> to vector<2x32x128xf32>
    %611 = vector.broadcast %607 : vector<1x32x128xf32> to vector<2x32x128xf32>
    %612 = arith.mulf %610, %611 : vector<2x32x128xf32>
    %613 = vector.broadcast %605 : vector<2x1x128xf32> to vector<2x32x128xf32>
    %614 = vector.broadcast %609 : vector<1x32x128xf32> to vector<2x32x128xf32>
    %615 = arith.mulf %613, %614 : vector<2x32x128xf32>
    %616 = arith.subf %612, %615 : vector<2x32x128xf32>
    %617 = arith.addf %593, %616 : vector<2x32x128xf32>
    %618 = vector.broadcast %603 : vector<2x1x128xf32> to vector<2x32x128xf32>
    %619 = vector.broadcast %609 : vector<1x32x128xf32> to vector<2x32x128xf32>
    %620 = arith.mulf %618, %619 : vector<2x32x128xf32>
    %621 = vector.broadcast %605 : vector<2x1x128xf32> to vector<2x32x128xf32>
    %622 = vector.broadcast %607 : vector<1x32x128xf32> to vector<2x32x128xf32>
    %623 = arith.mulf %621, %622 : vector<2x32x128xf32>
    %624 = arith.addf %620, %623 : vector<2x32x128xf32>
    %625 = arith.addf %601, %624 : vector<2x32x128xf32>
    %c0_365 = arith.constant 0 : index
    %c0_366 = arith.constant 0 : index
    %c26 = arith.constant 26 : index
    %c0_367 = arith.constant 0 : index
    %626 = vector.load %arg2[%c0_365, %c0_366, %c26, %c0_367] : memref<1x2x64x128xf32, #tpu.memory_space<vmem>>, vector<1x2x1x128xf32>
    %627 = vector.shape_cast %626 : vector<1x2x1x128xf32> to vector<2x1x128xf32>
    %c0_368 = arith.constant 0 : index
    %c0_369 = arith.constant 0 : index
    %c58 = arith.constant 58 : index
    %c0_370 = arith.constant 0 : index
    %628 = vector.load %arg2[%c0_368, %c0_369, %c58, %c0_370] : memref<1x2x64x128xf32, #tpu.memory_space<vmem>>, vector<1x2x1x128xf32>
    %629 = vector.shape_cast %628 : vector<1x2x1x128xf32> to vector<2x1x128xf32>
    %c0_371 = arith.constant 0 : index
    %c26_372 = arith.constant 26 : index
    %c0_373 = arith.constant 0 : index
    %c0_374 = arith.constant 0 : index
    %630 = vector.load %arg3[%c0_371, %c26_372, %c0_373, %c0_374] : memref<1x64x32x128xf32, #tpu.memory_space<vmem>>, vector<1x1x32x128xf32>
    %631 = vector.shape_cast %630 : vector<1x1x32x128xf32> to vector<1x32x128xf32>
    %c0_375 = arith.constant 0 : index
    %c58_376 = arith.constant 58 : index
    %c0_377 = arith.constant 0 : index
    %c0_378 = arith.constant 0 : index
    %632 = vector.load %arg3[%c0_375, %c58_376, %c0_377, %c0_378] : memref<1x64x32x128xf32, #tpu.memory_space<vmem>>, vector<1x1x32x128xf32>
    %633 = vector.shape_cast %632 : vector<1x1x32x128xf32> to vector<1x32x128xf32>
    %634 = vector.broadcast %627 : vector<2x1x128xf32> to vector<2x32x128xf32>
    %635 = vector.broadcast %631 : vector<1x32x128xf32> to vector<2x32x128xf32>
    %636 = arith.mulf %634, %635 : vector<2x32x128xf32>
    %637 = vector.broadcast %629 : vector<2x1x128xf32> to vector<2x32x128xf32>
    %638 = vector.broadcast %633 : vector<1x32x128xf32> to vector<2x32x128xf32>
    %639 = arith.mulf %637, %638 : vector<2x32x128xf32>
    %640 = arith.subf %636, %639 : vector<2x32x128xf32>
    %641 = arith.addf %617, %640 : vector<2x32x128xf32>
    %642 = vector.broadcast %627 : vector<2x1x128xf32> to vector<2x32x128xf32>
    %643 = vector.broadcast %633 : vector<1x32x128xf32> to vector<2x32x128xf32>
    %644 = arith.mulf %642, %643 : vector<2x32x128xf32>
    %645 = vector.broadcast %629 : vector<2x1x128xf32> to vector<2x32x128xf32>
    %646 = vector.broadcast %631 : vector<1x32x128xf32> to vector<2x32x128xf32>
    %647 = arith.mulf %645, %646 : vector<2x32x128xf32>
    %648 = arith.addf %644, %647 : vector<2x32x128xf32>
    %649 = arith.addf %625, %648 : vector<2x32x128xf32>
    %c0_379 = arith.constant 0 : index
    %c0_380 = arith.constant 0 : index
    %c27 = arith.constant 27 : index
    %c0_381 = arith.constant 0 : index
    %650 = vector.load %arg2[%c0_379, %c0_380, %c27, %c0_381] : memref<1x2x64x128xf32, #tpu.memory_space<vmem>>, vector<1x2x1x128xf32>
    %651 = vector.shape_cast %650 : vector<1x2x1x128xf32> to vector<2x1x128xf32>
    %c0_382 = arith.constant 0 : index
    %c0_383 = arith.constant 0 : index
    %c59 = arith.constant 59 : index
    %c0_384 = arith.constant 0 : index
    %652 = vector.load %arg2[%c0_382, %c0_383, %c59, %c0_384] : memref<1x2x64x128xf32, #tpu.memory_space<vmem>>, vector<1x2x1x128xf32>
    %653 = vector.shape_cast %652 : vector<1x2x1x128xf32> to vector<2x1x128xf32>
    %c0_385 = arith.constant 0 : index
    %c27_386 = arith.constant 27 : index
    %c0_387 = arith.constant 0 : index
    %c0_388 = arith.constant 0 : index
    %654 = vector.load %arg3[%c0_385, %c27_386, %c0_387, %c0_388] : memref<1x64x32x128xf32, #tpu.memory_space<vmem>>, vector<1x1x32x128xf32>
    %655 = vector.shape_cast %654 : vector<1x1x32x128xf32> to vector<1x32x128xf32>
    %c0_389 = arith.constant 0 : index
    %c59_390 = arith.constant 59 : index
    %c0_391 = arith.constant 0 : index
    %c0_392 = arith.constant 0 : index
    %656 = vector.load %arg3[%c0_389, %c59_390, %c0_391, %c0_392] : memref<1x64x32x128xf32, #tpu.memory_space<vmem>>, vector<1x1x32x128xf32>
    %657 = vector.shape_cast %656 : vector<1x1x32x128xf32> to vector<1x32x128xf32>
    %658 = vector.broadcast %651 : vector<2x1x128xf32> to vector<2x32x128xf32>
    %659 = vector.broadcast %655 : vector<1x32x128xf32> to vector<2x32x128xf32>
    %660 = arith.mulf %658, %659 : vector<2x32x128xf32>
    %661 = vector.broadcast %653 : vector<2x1x128xf32> to vector<2x32x128xf32>
    %662 = vector.broadcast %657 : vector<1x32x128xf32> to vector<2x32x128xf32>
    %663 = arith.mulf %661, %662 : vector<2x32x128xf32>
    %664 = arith.subf %660, %663 : vector<2x32x128xf32>
    %665 = arith.addf %641, %664 : vector<2x32x128xf32>
    %666 = vector.broadcast %651 : vector<2x1x128xf32> to vector<2x32x128xf32>
    %667 = vector.broadcast %657 : vector<1x32x128xf32> to vector<2x32x128xf32>
    %668 = arith.mulf %666, %667 : vector<2x32x128xf32>
    %669 = vector.broadcast %653 : vector<2x1x128xf32> to vector<2x32x128xf32>
    %670 = vector.broadcast %655 : vector<1x32x128xf32> to vector<2x32x128xf32>
    %671 = arith.mulf %669, %670 : vector<2x32x128xf32>
    %672 = arith.addf %668, %671 : vector<2x32x128xf32>
    %673 = arith.addf %649, %672 : vector<2x32x128xf32>
    %c0_393 = arith.constant 0 : index
    %c0_394 = arith.constant 0 : index
    %c28 = arith.constant 28 : index
    %c0_395 = arith.constant 0 : index
    %674 = vector.load %arg2[%c0_393, %c0_394, %c28, %c0_395] : memref<1x2x64x128xf32, #tpu.memory_space<vmem>>, vector<1x2x1x128xf32>
    %675 = vector.shape_cast %674 : vector<1x2x1x128xf32> to vector<2x1x128xf32>
    %c0_396 = arith.constant 0 : index
    %c0_397 = arith.constant 0 : index
    %c60 = arith.constant 60 : index
    %c0_398 = arith.constant 0 : index
    %676 = vector.load %arg2[%c0_396, %c0_397, %c60, %c0_398] : memref<1x2x64x128xf32, #tpu.memory_space<vmem>>, vector<1x2x1x128xf32>
    %677 = vector.shape_cast %676 : vector<1x2x1x128xf32> to vector<2x1x128xf32>
    %c0_399 = arith.constant 0 : index
    %c28_400 = arith.constant 28 : index
    %c0_401 = arith.constant 0 : index
    %c0_402 = arith.constant 0 : index
    %678 = vector.load %arg3[%c0_399, %c28_400, %c0_401, %c0_402] : memref<1x64x32x128xf32, #tpu.memory_space<vmem>>, vector<1x1x32x128xf32>
    %679 = vector.shape_cast %678 : vector<1x1x32x128xf32> to vector<1x32x128xf32>
    %c0_403 = arith.constant 0 : index
    %c60_404 = arith.constant 60 : index
    %c0_405 = arith.constant 0 : index
    %c0_406 = arith.constant 0 : index
    %680 = vector.load %arg3[%c0_403, %c60_404, %c0_405, %c0_406] : memref<1x64x32x128xf32, #tpu.memory_space<vmem>>, vector<1x1x32x128xf32>
    %681 = vector.shape_cast %680 : vector<1x1x32x128xf32> to vector<1x32x128xf32>
    %682 = vector.broadcast %675 : vector<2x1x128xf32> to vector<2x32x128xf32>
    %683 = vector.broadcast %679 : vector<1x32x128xf32> to vector<2x32x128xf32>
    %684 = arith.mulf %682, %683 : vector<2x32x128xf32>
    %685 = vector.broadcast %677 : vector<2x1x128xf32> to vector<2x32x128xf32>
    %686 = vector.broadcast %681 : vector<1x32x128xf32> to vector<2x32x128xf32>
    %687 = arith.mulf %685, %686 : vector<2x32x128xf32>
    %688 = arith.subf %684, %687 : vector<2x32x128xf32>
    %689 = arith.addf %665, %688 : vector<2x32x128xf32>
    %690 = vector.broadcast %675 : vector<2x1x128xf32> to vector<2x32x128xf32>
    %691 = vector.broadcast %681 : vector<1x32x128xf32> to vector<2x32x128xf32>
    %692 = arith.mulf %690, %691 : vector<2x32x128xf32>
    %693 = vector.broadcast %677 : vector<2x1x128xf32> to vector<2x32x128xf32>
    %694 = vector.broadcast %679 : vector<1x32x128xf32> to vector<2x32x128xf32>
    %695 = arith.mulf %693, %694 : vector<2x32x128xf32>
    %696 = arith.addf %692, %695 : vector<2x32x128xf32>
    %697 = arith.addf %673, %696 : vector<2x32x128xf32>
    %c0_407 = arith.constant 0 : index
    %c0_408 = arith.constant 0 : index
    %c29 = arith.constant 29 : index
    %c0_409 = arith.constant 0 : index
    %698 = vector.load %arg2[%c0_407, %c0_408, %c29, %c0_409] : memref<1x2x64x128xf32, #tpu.memory_space<vmem>>, vector<1x2x1x128xf32>
    %699 = vector.shape_cast %698 : vector<1x2x1x128xf32> to vector<2x1x128xf32>
    %c0_410 = arith.constant 0 : index
    %c0_411 = arith.constant 0 : index
    %c61 = arith.constant 61 : index
    %c0_412 = arith.constant 0 : index
    %700 = vector.load %arg2[%c0_410, %c0_411, %c61, %c0_412] : memref<1x2x64x128xf32, #tpu.memory_space<vmem>>, vector<1x2x1x128xf32>
    %701 = vector.shape_cast %700 : vector<1x2x1x128xf32> to vector<2x1x128xf32>
    %c0_413 = arith.constant 0 : index
    %c29_414 = arith.constant 29 : index
    %c0_415 = arith.constant 0 : index
    %c0_416 = arith.constant 0 : index
    %702 = vector.load %arg3[%c0_413, %c29_414, %c0_415, %c0_416] : memref<1x64x32x128xf32, #tpu.memory_space<vmem>>, vector<1x1x32x128xf32>
    %703 = vector.shape_cast %702 : vector<1x1x32x128xf32> to vector<1x32x128xf32>
    %c0_417 = arith.constant 0 : index
    %c61_418 = arith.constant 61 : index
    %c0_419 = arith.constant 0 : index
    %c0_420 = arith.constant 0 : index
    %704 = vector.load %arg3[%c0_417, %c61_418, %c0_419, %c0_420] : memref<1x64x32x128xf32, #tpu.memory_space<vmem>>, vector<1x1x32x128xf32>
    %705 = vector.shape_cast %704 : vector<1x1x32x128xf32> to vector<1x32x128xf32>
    %706 = vector.broadcast %699 : vector<2x1x128xf32> to vector<2x32x128xf32>
    %707 = vector.broadcast %703 : vector<1x32x128xf32> to vector<2x32x128xf32>
    %708 = arith.mulf %706, %707 : vector<2x32x128xf32>
    %709 = vector.broadcast %701 : vector<2x1x128xf32> to vector<2x32x128xf32>
    %710 = vector.broadcast %705 : vector<1x32x128xf32> to vector<2x32x128xf32>
    %711 = arith.mulf %709, %710 : vector<2x32x128xf32>
    %712 = arith.subf %708, %711 : vector<2x32x128xf32>
    %713 = arith.addf %689, %712 : vector<2x32x128xf32>
    %714 = vector.broadcast %699 : vector<2x1x128xf32> to vector<2x32x128xf32>
    %715 = vector.broadcast %705 : vector<1x32x128xf32> to vector<2x32x128xf32>
    %716 = arith.mulf %714, %715 : vector<2x32x128xf32>
    %717 = vector.broadcast %701 : vector<2x1x128xf32> to vector<2x32x128xf32>
    %718 = vector.broadcast %703 : vector<1x32x128xf32> to vector<2x32x128xf32>
    %719 = arith.mulf %717, %718 : vector<2x32x128xf32>
    %720 = arith.addf %716, %719 : vector<2x32x128xf32>
    %721 = arith.addf %697, %720 : vector<2x32x128xf32>
    %c0_421 = arith.constant 0 : index
    %c0_422 = arith.constant 0 : index
    %c30 = arith.constant 30 : index
    %c0_423 = arith.constant 0 : index
    %722 = vector.load %arg2[%c0_421, %c0_422, %c30, %c0_423] : memref<1x2x64x128xf32, #tpu.memory_space<vmem>>, vector<1x2x1x128xf32>
    %723 = vector.shape_cast %722 : vector<1x2x1x128xf32> to vector<2x1x128xf32>
    %c0_424 = arith.constant 0 : index
    %c0_425 = arith.constant 0 : index
    %c62 = arith.constant 62 : index
    %c0_426 = arith.constant 0 : index
    %724 = vector.load %arg2[%c0_424, %c0_425, %c62, %c0_426] : memref<1x2x64x128xf32, #tpu.memory_space<vmem>>, vector<1x2x1x128xf32>
    %725 = vector.shape_cast %724 : vector<1x2x1x128xf32> to vector<2x1x128xf32>
    %c0_427 = arith.constant 0 : index
    %c30_428 = arith.constant 30 : index
    %c0_429 = arith.constant 0 : index
    %c0_430 = arith.constant 0 : index
    %726 = vector.load %arg3[%c0_427, %c30_428, %c0_429, %c0_430] : memref<1x64x32x128xf32, #tpu.memory_space<vmem>>, vector<1x1x32x128xf32>
    %727 = vector.shape_cast %726 : vector<1x1x32x128xf32> to vector<1x32x128xf32>
    %c0_431 = arith.constant 0 : index
    %c62_432 = arith.constant 62 : index
    %c0_433 = arith.constant 0 : index
    %c0_434 = arith.constant 0 : index
    %728 = vector.load %arg3[%c0_431, %c62_432, %c0_433, %c0_434] : memref<1x64x32x128xf32, #tpu.memory_space<vmem>>, vector<1x1x32x128xf32>
    %729 = vector.shape_cast %728 : vector<1x1x32x128xf32> to vector<1x32x128xf32>
    %730 = vector.broadcast %723 : vector<2x1x128xf32> to vector<2x32x128xf32>
    %731 = vector.broadcast %727 : vector<1x32x128xf32> to vector<2x32x128xf32>
    %732 = arith.mulf %730, %731 : vector<2x32x128xf32>
    %733 = vector.broadcast %725 : vector<2x1x128xf32> to vector<2x32x128xf32>
    %734 = vector.broadcast %729 : vector<1x32x128xf32> to vector<2x32x128xf32>
    %735 = arith.mulf %733, %734 : vector<2x32x128xf32>
    %736 = arith.subf %732, %735 : vector<2x32x128xf32>
    %737 = arith.addf %713, %736 : vector<2x32x128xf32>
    %738 = vector.broadcast %723 : vector<2x1x128xf32> to vector<2x32x128xf32>
    %739 = vector.broadcast %729 : vector<1x32x128xf32> to vector<2x32x128xf32>
    %740 = arith.mulf %738, %739 : vector<2x32x128xf32>
    %741 = vector.broadcast %725 : vector<2x1x128xf32> to vector<2x32x128xf32>
    %742 = vector.broadcast %727 : vector<1x32x128xf32> to vector<2x32x128xf32>
    %743 = arith.mulf %741, %742 : vector<2x32x128xf32>
    %744 = arith.addf %740, %743 : vector<2x32x128xf32>
    %745 = arith.addf %721, %744 : vector<2x32x128xf32>
    %c0_435 = arith.constant 0 : index
    %c0_436 = arith.constant 0 : index
    %c31 = arith.constant 31 : index
    %c0_437 = arith.constant 0 : index
    %746 = vector.load %arg2[%c0_435, %c0_436, %c31, %c0_437] : memref<1x2x64x128xf32, #tpu.memory_space<vmem>>, vector<1x2x1x128xf32>
    %747 = vector.shape_cast %746 : vector<1x2x1x128xf32> to vector<2x1x128xf32>
    %c0_438 = arith.constant 0 : index
    %c0_439 = arith.constant 0 : index
    %c63 = arith.constant 63 : index
    %c0_440 = arith.constant 0 : index
    %748 = vector.load %arg2[%c0_438, %c0_439, %c63, %c0_440] : memref<1x2x64x128xf32, #tpu.memory_space<vmem>>, vector<1x2x1x128xf32>
    %749 = vector.shape_cast %748 : vector<1x2x1x128xf32> to vector<2x1x128xf32>
    %c0_441 = arith.constant 0 : index
    %c31_442 = arith.constant 31 : index
    %c0_443 = arith.constant 0 : index
    %c0_444 = arith.constant 0 : index
    %750 = vector.load %arg3[%c0_441, %c31_442, %c0_443, %c0_444] : memref<1x64x32x128xf32, #tpu.memory_space<vmem>>, vector<1x1x32x128xf32>
    %751 = vector.shape_cast %750 : vector<1x1x32x128xf32> to vector<1x32x128xf32>
    %c0_445 = arith.constant 0 : index
    %c63_446 = arith.constant 63 : index
    %c0_447 = arith.constant 0 : index
    %c0_448 = arith.constant 0 : index
    %752 = vector.load %arg3[%c0_445, %c63_446, %c0_447, %c0_448] : memref<1x64x32x128xf32, #tpu.memory_space<vmem>>, vector<1x1x32x128xf32>
    %753 = vector.shape_cast %752 : vector<1x1x32x128xf32> to vector<1x32x128xf32>
    %754 = vector.broadcast %747 : vector<2x1x128xf32> to vector<2x32x128xf32>
    %755 = vector.broadcast %751 : vector<1x32x128xf32> to vector<2x32x128xf32>
    %756 = arith.mulf %754, %755 : vector<2x32x128xf32>
    %757 = vector.broadcast %749 : vector<2x1x128xf32> to vector<2x32x128xf32>
    %758 = vector.broadcast %753 : vector<1x32x128xf32> to vector<2x32x128xf32>
    %759 = arith.mulf %757, %758 : vector<2x32x128xf32>
    %760 = arith.subf %756, %759 : vector<2x32x128xf32>
    %761 = arith.addf %737, %760 : vector<2x32x128xf32>
    %762 = vector.broadcast %747 : vector<2x1x128xf32> to vector<2x32x128xf32>
    %763 = vector.broadcast %753 : vector<1x32x128xf32> to vector<2x32x128xf32>
    %764 = arith.mulf %762, %763 : vector<2x32x128xf32>
    %765 = vector.broadcast %749 : vector<2x1x128xf32> to vector<2x32x128xf32>
    %766 = vector.broadcast %751 : vector<1x32x128xf32> to vector<2x32x128xf32>
    %767 = arith.mulf %765, %766 : vector<2x32x128xf32>
    %768 = arith.addf %764, %767 : vector<2x32x128xf32>
    %769 = arith.addf %745, %768 : vector<2x32x128xf32>
    %c0_449 = arith.constant 0 : index
    %c0_450 = arith.constant 0 : index
    %c0_451 = arith.constant 0 : index
    %c0_452 = arith.constant 0 : index
    %770 = vector.load %arg4[%c0_449, %c0_450, %c0_451, %c0_452] : memref<1x2x64x128xf32, #tpu.memory_space<vmem>>, vector<1x2x32x128xf32>
    %771 = vector.shape_cast %770 : vector<1x2x32x128xf32> to vector<2x32x128xf32>
    %772 = vector.shape_cast %761 : vector<2x32x128xf32> to vector<1x2x32x128xf32>
    tpu.vector_store %arg4[%c0_449, %c0_450, %c0_451, %c0_452], %772 {strides = array<i32>} : memref<1x2x64x128xf32, #tpu.memory_space<vmem>>, vector<1x2x32x128xf32>,
    %c0_453 = arith.constant 0 : index
    %c0_454 = arith.constant 0 : index
    %c32_455 = arith.constant 32 : index
    %c0_456 = arith.constant 0 : index
    %773 = vector.load %arg4[%c0_453, %c0_454, %c32_455, %c0_456] : memref<1x2x64x128xf32, #tpu.memory_space<vmem>>, vector<1x2x32x128xf32>
    %774 = vector.shape_cast %773 : vector<1x2x32x128xf32> to vector<2x32x128xf32>
    %775 = vector.shape_cast %769 : vector<2x32x128xf32> to vector<1x2x32x128xf32>
    tpu.vector_store %arg4[%c0_453, %c0_454, %c32_455, %c0_456], %775 {strides = array<i32>} : memref<1x2x64x128xf32, #tpu.memory_space<vmem>>, vector<1x2x32x128xf32>,
    return
  }
  func.func @transform_0(%arg0: i32, %arg1: i32) -> (i32, i32, i32, i32) {
    %c0_i32 = arith.constant 0 : i32
    %c0_i32_0 = arith.constant 0 : i32
    %c0_i32_1 = arith.constant 0 : i32
    return %arg0, %arg1, %c0_i32, %c0_i32_0 : i32, i32, i32, i32
  }
  func.func @transform_1(%arg0: i32, %arg1: i32) -> (i32, i32, i32, i32) {
    %c0_i32 = arith.constant 0 : i32
    %c0_i32_0 = arith.constant 0 : i32
    %c0_i32_1 = arith.constant 0 : i32
    %c0_i32_2 = arith.constant 0 : i32
    return %arg0, %c0_i32, %c0_i32_0, %c0_i32_1 : i32, i32, i32, i32
  }
  func.func @transform_2(%arg0: i32, %arg1: i32) -> (i32, i32, i32, i32) {
    %c0_i32 = arith.constant 0 : i32
    %c0_i32_0 = arith.constant 0 : i32
    %c0_i32_1 = arith.constant 0 : i32
    return %arg0, %arg1, %c0_i32, %c0_i32_0 : i32, i32, i32, i32
  }
}

</mosaic_0001>

<llo_original>
// kernel: fno2d_emdt_forward.4
$region0: #{fno2d_emdt_forward.4}
  #allocation0 [shape = 'u32[]', space=smem, size = 0x4, offset = 0x4, fixed_abs, tag = 'smem constant byte address 0x4 - core index']
  #allocation1 [shape = 'u32[144,128]{1,0:T(1,128)}', space=vmem, size = 0x12000, scoped, tag = 'internal scratch']
  %s0 = inlined_call_operand.vmem [shape: f32[2,2,64,128], index: 0, kind: input, shape index: {}]
  %s1 = inlined_call_operand.vmem [shape: f32[2,64,32,128], index: 1, kind: input, shape index: {}]
  %s2 = inlined_call_operand.vmem [shape: f32[2,2,64,128], index: 2, kind: output, shape index: {}]
  %s3 = sld [smem:[#allocation0]]
  $region41: #{fno2d_emdt_forward.4} parent=0
    _
  %s5 = ssub.s32 1, %s3
  %s6 = scalar_select 0, %s5, %s3
  loop: start=0, step=1, limit=4
  $region2: #{fno2d_emdt_forward.4} parent=0 // loop_pre_header
    _
  $region3: #{fno2d_emdt_forward.4} parent=0 // loop_header
    %s8 = sphi 0, %s12
    %p9 = scmp.ge.s32.totalorder %s8, 4
    %s15 = sphi 0, %s27
    %s16 = sphi 0, %s23
    %s17 = sphi 0, %s15
    %s18 = sphi 0, %s16
    %s19 = sphi 0, %s17
    %s20 = sphi 0, %s18
    %s32 = sphi 0, %s34
    %s35 = sphi 0, %s32
    %s36 = sphi 0, %s35
    %s52 = sphi 0, %s36
    %s58 = sphi 0, %s60
    %s61 = sphi 0, %s58
    %s62 = sphi 0, %s61
    %s78 = sphi 0, %s62
    %s86 = sphi 0, %s88
    %s89 = sphi 0, %s86
    %s90 = sphi 0, %s89
    %s106 = sphi 0, %s90
  $region4: #{fno2d_emdt_forward.4} parent=0 // loop_header_branch
    %11 = sbr.rel (%p9) target = $region8
  $region5: #{fno2d_emdt_forward.4} parent=0 // loop_body
    %s13 = ssub.s32 %s8, 1
    %s14 = ssub.s32 %s8, 2
    %s21 = sadd.s32 1, %s16
    %p22 = scmp.ge.s32.totalorder %s21, 1
    %s23 = scalar_select %p22, 0, %s21
    %s24 = sadd.s32 1, %s15
    %s25 = scalar_select %p22, %s24, %s15
    %p26 = scmp.ge.s32.totalorder %s25, 2
    %s27 = scalar_select %p26, 0, %s25
    %s28 = ssub.s32 %s15, %s27
    %s29 = ssub.s32 %s16, %s23
    %s30 = sor.u32 %s28, %s29
    %p31 = scmp.eq.s32.totalorder %s30, 0
    %s33 = sadd.s32 %s32, 1
    %s34 = scalar_select %p31, %s32, %s33
    %p37 = pneg %p31
    %p38 = scmp.eq.s32.totalorder %s8, 1
    %p39 = por %p37, %p38
    %p40 = scmp.ne.s32.totalorder %s32, %s35
    %p41 = scmp.eq.s32.totalorder %s8, 0
    %p42 = por %p40, %p41
    %p43 = scmp.ne.s32.totalorder %s32, %s35
    %p44 = scmp.eq.s32.totalorder %s13, 1
    %p45 = por %p43, %p44
    %p46 = scmp.ne.s32.totalorder %s35, %s36
    %p47 = scmp.eq.s32.totalorder %s13, 0
    %p48 = por %p46, %p47
    %p49 = scmp.ne.s32.totalorder %s35, %s36
    %p50 = scmp.eq.s32.totalorder %s14, 1
    %p51 = por %p49, %p50
    %p53 = scmp.ne.s32.totalorder %s36, %s52
    %p54 = scmp.eq.s32.totalorder %s14, 0
    %p55 = por %p53, %p54
    %s56 = ssub.s32 %s15, %s27
    %p57 = scmp.eq.s32.totalorder %s56, 0
    %s59 = sadd.s32 %s58, 1
    %s60 = scalar_select %p57, %s58, %s59
    %p63 = pneg %p57
    %p64 = scmp.eq.s32.totalorder %s8, 1
    %p65 = por %p63, %p64
    %p66 = scmp.ne.s32.totalorder %s58, %s61
    %p67 = scmp.eq.s32.totalorder %s8, 0
    %p68 = por %p66, %p67
    %p69 = scmp.ne.s32.totalorder %s58, %s61
    %p70 = scmp.eq.s32.totalorder %s13, 1
    %p71 = por %p69, %p70
    %p72 = scmp.ne.s32.totalorder %s61, %s62
    %p73 = scmp.eq.s32.totalorder %s13, 0
    %p74 = por %p72, %p73
    %p75 = scmp.ne.s32.totalorder %s61, %s62
    %p76 = scmp.eq.s32.totalorder %s14, 1
    %p77 = por %p75, %p76
    %p79 = scmp.ne.s32.totalorder %s62, %s78
    %p80 = scmp.eq.s32.totalorder %s14, 0
    %p81 = por %p79, %p80
    %s82 = ssub.s32 %s15, %s27
    %s83 = ssub.s32 %s16, %s23
    %s84 = sor.u32 %s82, %s83
    %p85 = scmp.eq.s32.totalorder %s84, 0
    %s87 = sadd.s32 %s86, 1
    %s88 = scalar_select %p85, %s86, %s87
    %p91 = pneg %p85
    %p92 = scmp.eq.s32.totalorder %s8, 1
    %p93 = por %p91, %p92
    %p94 = scmp.ne.s32.totalorder %s86, %s89
    %p95 = scmp.eq.s32.totalorder %s8, 0
    %p96 = por %p94, %p95
    %p97 = scmp.ne.s32.totalorder %s86, %s89
    %p98 = scmp.eq.s32.totalorder %s13, 1
    %p99 = por %p97, %p98
    %p100 = scmp.ne.s32.totalorder %s89, %s90
    %p101 = scmp.eq.s32.totalorder %s13, 0
    %p102 = por %p100, %p101
    %p103 = scmp.ne.s32.totalorder %s89, %s90
    %p104 = scmp.eq.s32.totalorder %s14, 1
    %p105 = por %p103, %p104
    %p107 = scmp.ne.s32.totalorder %s90, %s106
    %p108 = scmp.eq.s32.totalorder %s14, 0
    %p109 = por %p107, %p108
    %p110 = scmp.le.s32.totalorder 1, %s8
    %p111 = scmp.lt.s32.totalorder %s8, 3
    %p112 = pnand %p110, %p111
    %p113 = pneg %p112
    // Predicated region
    $region9: #{fno2d_emdt_forward.4} parent=5 // pred_check
      _
    $region10: #{fno2d_emdt_forward.4} parent=5 // pred_check_branch
      %115 = sbr.rel (%p112) target = $region12
    $region11: #{fno2d_emdt_forward.4} parent=5 // pred_region
      %s116 = ssub.s32 %s8, 1
    $region12: #{fno2d_emdt_forward.4} parent=5 // pred_fallthru
      _
    %p117 = scmp.lt.s32.totalorder %s8, 2
    // Predicated region
    $region13: #{fno2d_emdt_forward.4} parent=5 // pred_check
      %p118 = pneg %p117
    $region14: #{fno2d_emdt_forward.4} parent=5 // pred_check_branch
      %120 = sbr.rel (%p118) target = $region16
    $region15: #{fno2d_emdt_forward.4} parent=5 // pred_region
      // Predicated region
      $region17: #{fno2d_emdt_forward.4} parent=15 // pred_check
        %p121 = pneg %p42
      $region18: #{fno2d_emdt_forward.4} parent=15 // pred_check_branch
        %123 = sbr.rel (%p121) target = $region20
      $region19: #{fno2d_emdt_forward.4} parent=15 // pred_region
        %s124 = smul.u32 2, %s16
        %p125 = scmp.lt.s32.totalorder %s15, 1
        %s126 = scalar_select %p125, %s15, 1
        %p127 = scmp.lt.s32.totalorder %s124, 1
        %s128 = scalar_select %p127, %s124, 1
        %s129 = smul.addr %s128, 8
        %s130 = smul.addr %s126, 16
        %s131 = sadd.s32 %s129, %s130
        %s132 = smul.addr %s131, 8
        %s133 = scalar_lea.vmem %s0, %s132
        %s134 = smul.u32 2, %s16
      $region20: #{fno2d_emdt_forward.4} parent=15 // pred_fallthru
        _
      // Predicated region
      $region21: #{fno2d_emdt_forward.4} parent=15 // pred_check
        %p135 = pneg %p68
      $region22: #{fno2d_emdt_forward.4} parent=15 // pred_check_branch
        %137 = sbr.rel (%p135) target = $region24
      $region23: #{fno2d_emdt_forward.4} parent=15 // pred_region
        %p138 = scmp.lt.s32.totalorder %s15, 1
        %s139 = scalar_select %p138, %s15, 1
        %s140 = smul.addr %s139, 256
        %s141 = smul.addr %s140, 8
        %s142 = scalar_lea.vmem %s1, %s141
      $region24: #{fno2d_emdt_forward.4} parent=15 // pred_fallthru
        _
    $region16: #{fno2d_emdt_forward.4} parent=5 // pred_fallthru
      _
    %p143 = scmp.le.s32.totalorder 1, %s8
    %p144 = scmp.lt.s32.totalorder %s8, 3
    %p145 = pnand %p143, %p144
    %p146 = pneg %p145
    // Predicated region
    $region25: #{fno2d_emdt_forward.4} parent=5 // pred_check
      _
    $region26: #{fno2d_emdt_forward.4} parent=5 // pred_check_branch
      %148 = sbr.rel (%p145) target = $region28
    $region27: #{fno2d_emdt_forward.4} parent=5 // pred_region
      %s149 = ssub.s32 %s8, 1
      %s150 = smul.u32 2, %s18
      %p151 = scmp.lt.s32.totalorder %s17, 1
      %s152 = scalar_select %p151, %s17, 1
      %p153 = scmp.lt.s32.totalorder %s150, 1
      %s154 = scalar_select %p153, %s150, 1
      %s155 = smul.addr %s154, 8
      %s156 = smul.addr %s152, 16
      %s157 = sadd.s32 %s155, %s156
      %s158 = smul.addr %s157, 8
      %s159 = scalar_lea.vmem %s0, %s158
      %p160 = pneg %p48
      %p161 = pneg %p45
      %p162 = scmp.lt.s32.totalorder %s17, 1
      %s163 = scalar_select %p162, %s17, 1
      %s164 = smul.addr %s163, 256
      %s165 = smul.addr %s164, 8
      %s166 = scalar_lea.vmem %s1, %s165
      %p167 = pneg %p74
      %p168 = pneg %p71
      %p169 = pneg %p102
      %p170 = pneg %p99
      %s171 = smul.u32 2, %s18
      %p172 = scmp.lt.s32.totalorder %s17, 1
      %s173 = scalar_select %p172, %s17, 1
      %p174 = scmp.lt.s32.totalorder %s171, 1
      %s175 = scalar_select %p174, %s171, 1
      %s176 = smul.addr %s175, 8
      %s177 = smul.addr %s173, 16
      %s178 = sadd.s32 %s176, %s177
      %s179 = smul.addr %s178, 8
      %s180 = scalar_lea.vmem %s2, %s179
      %s181 = smul.u32 2, %s18
      %p182 = scmp.lt.s32.totalorder %s17, 1
      %s183 = scalar_select %p182, %s17, 1
      %p184 = scmp.lt.s32.totalorder %s181, 1
      %s185 = scalar_select %p184, %s181, 1
      %s186 = smul.addr %s185, 8
      %s187 = smul.addr %s183, 16
      %s188 = sadd.s32 %s186, %s187
      %s189 = smul.addr %s188, 8
      %s190 = scalar_lea.vmem %s0, %s189
      %s191 = smul.u32 2, %s18
      %p192 = scmp.lt.s32.totalorder %s17, 1
      %s193 = scalar_select %p192, %s17, 1
      %s194 = smul.addr %s193, 256
      %s195 = smul.addr %s194, 8
      %s196 = scalar_lea.vmem %s1, %s195
      %s197 = smul.u32 2, %s18
      %p198 = scmp.lt.s32.totalorder %s17, 1
      %s199 = scalar_select %p198, %s17, 1
      %p200 = scmp.lt.s32.totalorder %s197, 1
      %s201 = scalar_select %p200, %s197, 1
      %s202 = smul.addr %s201, 8
      %s203 = smul.addr %s199, 16
      %s204 = sadd.s32 %s202, %s203
      %s205 = smul.addr %s204, 8
      %s206 = scalar_lea.vmem %s2, %s205
      %s207 = smul.u32 2, %s18
      %v208 = vld [vmem:[%s190] sm:$0x1]
      %v209 = vld [vmem:[%s190 + $0x40] sm:$0x1]
      %v210 = vld [vmem:[%s190 + $0x20] sm:$0x1]
      %v211 = vld [vmem:[%s190 + $0x60] sm:$0x1]
      %v212 = vld [vmem:[%s196] sm:$0xff]
      %v213 = vld [vmem:[%s196 + $0x8] sm:$0xff]
      %v214 = vld [vmem:[%s196 + $0x10] sm:$0xff]
      %v215 = vld [vmem:[%s196 + $0x18] sm:$0xff]
      %s216 = scalar_lea.vmem %s196, 1024
      %v217 = vld [vmem:[%s216] sm:$0xff]
      %v218 = vld [vmem:[%s216 + $0x8] sm:$0xff]
      %v219 = vld [vmem:[%s216 + $0x10] sm:$0xff]
      %v220 = vld [vmem:[%s216 + $0x18] sm:$0xff]
      %v221 = vlaneseq
      %v222 = vshrl.u32 %v221, 7
      %v223 = vsub.s32 0, %v222
      %v224 = vrot.slane %v208, %v223
      %v225 = vlaneseq
      %v226 = vshrl.u32 %v225, 7
      %v227 = vsub.s32 0, %v226
      %v228 = vrot.slane %v209, %v227
      %v229 = vmul.f32 %v224, %v212
      %v230 = vmul.f32 %v224, %v213
      %v231 = vmul.f32 %v224, %v214
      %v232 = vmul.f32 %v224, %v215
      %v233 = vmul.f32 %v228, %v212
      %v234 = vmul.f32 %v228, %v213
      %v235 = vmul.f32 %v228, %v214
      %v236 = vmul.f32 %v228, %v215
      %v237 = vlaneseq
      %v238 = vshrl.u32 %v237, 7
      %v239 = vsub.s32 0, %v238
      %v240 = vrot.slane %v210, %v239
      %v241 = vlaneseq
      %v242 = vshrl.u32 %v241, 7
      %v243 = vsub.s32 0, %v242
      %v244 = vrot.slane %v211, %v243
      %v245 = vmul.f32 %v240, %v217
      %v246 = vmul.f32 %v240, %v218
      %v247 = vmul.f32 %v240, %v219
      %v248 = vmul.f32 %v240, %v220
      %v249 = vmul.f32 %v244, %v217
      %v250 = vmul.f32 %v244, %v218
      %v251 = vmul.f32 %v244, %v219
      %v252 = vmul.f32 %v244, %v220
      %v253 = vsub.f32 %v229, %v245
      %v254 = vsub.f32 %v230, %v246
      %v255 = vsub.f32 %v231, %v247
      %v256 = vsub.f32 %v232, %v248
      %v257 = vsub.f32 %v233, %v249
      %v258 = vsub.f32 %v234, %v250
      %v259 = vsub.f32 %v235, %v251
      %v260 = vsub.f32 %v236, %v252
      %v261 = vadd.f32 %v253, 0.0
      %v262 = vadd.f32 %v254, 0.0
      %v263 = vadd.f32 %v255, 0.0
      %v264 = vadd.f32 %v256, 0.0
      %v265 = vadd.f32 %v257, 0.0
      %v266 = vadd.f32 %v258, 0.0
      %v267 = vadd.f32 %v259, 0.0
      %v268 = vadd.f32 %v260, 0.0
      %v269 = vmul.f32 %v224, %v217
      %v270 = vmul.f32 %v224, %v218
      %v271 = vmul.f32 %v224, %v219
      %v272 = vmul.f32 %v224, %v220
      %v273 = vmul.f32 %v228, %v217
      %v274 = vmul.f32 %v228, %v218
      %v275 = vmul.f32 %v228, %v219
      %v276 = vmul.f32 %v228, %v220
      %v277 = vmul.f32 %v240, %v212
      %v278 = vmul.f32 %v240, %v213
      %v279 = vmul.f32 %v240, %v214
      %v280 = vmul.f32 %v240, %v215
      %v281 = vmul.f32 %v244, %v212
      %v282 = vmul.f32 %v244, %v213
      %v283 = vmul.f32 %v244, %v214
      %v284 = vmul.f32 %v244, %v215
      %v285 = vadd.f32 %v269, %v277
      %v286 = vadd.f32 %v270, %v278
      %v287 = vadd.f32 %v271, %v279
      %v288 = vadd.f32 %v272, %v280
      %v289 = vadd.f32 %v273, %v281
      %v290 = vadd.f32 %v274, %v282
      %v291 = vadd.f32 %v275, %v283
      %v292 = vadd.f32 %v276, %v284
      %v293 = vadd.f32 %v285, 0.0
      %v294 = vadd.f32 %v286, 0.0
      %v295 = vadd.f32 %v287, 0.0
      %v296 = vadd.f32 %v288, 0.0
      %v297 = vadd.f32 %v289, 0.0
      %v298 = vadd.f32 %v290, 0.0
      %v299 = vadd.f32 %v291, 0.0
      %v300 = vadd.f32 %v292, 0.0
      %v301 = vld [vmem:[%s190 + $0x1] sm:$0x1]
      %v302 = vld [vmem:[%s190 + $0x41] sm:$0x1]
      %v303 = vld [vmem:[%s190 + $0x21] sm:$0x1]
      %v304 = vld [vmem:[%s190 + $0x61] sm:$0x1]
      %s305 = scalar_lea.vmem %s196, 32
      %v306 = vld [vmem:[%s305] sm:$0xff]
      %v307 = vld [vmem:[%s305 + $0x8] sm:$0xff]
      %v308 = vld [vmem:[%s305 + $0x10] sm:$0xff]
      %v309 = vld [vmem:[%s305 + $0x18] sm:$0xff]
      %s310 = scalar_lea.vmem %s196, 1056
      %v311 = vld [vmem:[%s310] sm:$0xff]
      %v312 = vld [vmem:[%s310 + $0x8] sm:$0xff]
      %v313 = vld [vmem:[%s310 + $0x10] sm:$0xff]
      %v314 = vld [vmem:[%s310 + $0x18] sm:$0xff]
      %v315 = vlaneseq
      %v316 = vshrl.u32 %v315, 7
      %v317 = vsub.s32 0, %v316
      %v318 = vrot.slane %v301, %v317
      %v319 = vlaneseq
      %v320 = vshrl.u32 %v319, 7
      %v321 = vsub.s32 0, %v320
      %v322 = vrot.slane %v302, %v321
      %v323 = vmul.f32 %v318, %v306
      %v324 = vmul.f32 %v318, %v307
      %v325 = vmul.f32 %v318, %v308
      %v326 = vmul.f32 %v318, %v309
      %v327 = vmul.f32 %v322, %v306
      %v328 = vmul.f32 %v322, %v307
      %v329 = vmul.f32 %v322, %v308
      %v330 = vmul.f32 %v322, %v309
      %v331 = vlaneseq
      %v332 = vshrl.u32 %v331, 7
      %v333 = vsub.s32 0, %v332
      %v334 = vrot.slane %v303, %v333
      %v335 = vlaneseq
      %v336 = vshrl.u32 %v335, 7
      %v337 = vsub.s32 0, %v336
      %v338 = vrot.slane %v304, %v337
      %v339 = vmul.f32 %v334, %v311
      %v340 = vmul.f32 %v334, %v312
      %v341 = vmul.f32 %v334, %v313
      %v342 = vmul.f32 %v334, %v314
      %v343 = vmul.f32 %v338, %v311
      %v344 = vmul.f32 %v338, %v312
      %v345 = vmul.f32 %v338, %v313
      %v346 = vmul.f32 %v338, %v314
      %v347 = vsub.f32 %v323, %v339
      %v348 = vsub.f32 %v324, %v340
      %v349 = vsub.f32 %v325, %v341
      %v350 = vsub.f32 %v326, %v342
      %v351 = vsub.f32 %v327, %v343
      %v352 = vsub.f32 %v328, %v344
      %v353 = vsub.f32 %v329, %v345
      %v354 = vsub.f32 %v330, %v346
      %v355 = vadd.f32 %v261, %v347
      %v356 = vadd.f32 %v262, %v348
      %v357 = vadd.f32 %v263, %v349
      %v358 = vadd.f32 %v264, %v350
      %v359 = vadd.f32 %v265, %v351
      %v360 = vadd.f32 %v266, %v352
      %v361 = vadd.f32 %v267, %v353
      %v362 = vadd.f32 %v268, %v354
      %v363 = vmul.f32 %v318, %v311
      %v364 = vmul.f32 %v318, %v312
      %v365 = vmul.f32 %v318, %v313
      %v366 = vmul.f32 %v318, %v314
      %v367 = vmul.f32 %v322, %v311
      %v368 = vmul.f32 %v322, %v312
      %v369 = vmul.f32 %v322, %v313
      %v370 = vmul.f32 %v322, %v314
      %v371 = vmul.f32 %v334, %v306
      %v372 = vmul.f32 %v334, %v307
      %v373 = vmul.f32 %v334, %v308
      %v374 = vmul.f32 %v334, %v309
      %v375 = vmul.f32 %v338, %v306
      %v376 = vmul.f32 %v338, %v307
      %v377 = vmul.f32 %v338, %v308
      %v378 = vmul.f32 %v338, %v309
      %v379 = vadd.f32 %v363, %v371
      %v380 = vadd.f32 %v364, %v372
      %v381 = vadd.f32 %v365, %v373
      %v382 = vadd.f32 %v366, %v374
      %v383 = vadd.f32 %v367, %v375
      %v384 = vadd.f32 %v368, %v376
      %v385 = vadd.f32 %v369, %v377
      %v386 = vadd.f32 %v370, %v378
      %v387 = vadd.f32 %v293, %v379
      %v388 = vadd.f32 %v294, %v380
      %v389 = vadd.f32 %v295, %v381
      %v390 = vadd.f32 %v296, %v382
      %v391 = vadd.f32 %v297, %v383
      %v392 = vadd.f32 %v298, %v384
      %v393 = vadd.f32 %v299, %v385
      %v394 = vadd.f32 %v300, %v386
      %v395 = vld [vmem:[%s190 + $0x2] sm:$0x1]
      %v396 = vld [vmem:[%s190 + $0x42] sm:$0x1]
      %v397 = vld [vmem:[%s190 + $0x22] sm:$0x1]
      %v398 = vld [vmem:[%s190 + $0x62] sm:$0x1]
      %s399 = scalar_lea.vmem %s196, 64
      %v400 = vld [vmem:[%s399] sm:$0xff]
      %v401 = vld [vmem:[%s399 + $0x8] sm:$0xff]
      %v402 = vld [vmem:[%s399 + $0x10] sm:$0xff]
      %v403 = vld [vmem:[%s399 + $0x18] sm:$0xff]
      %s404 = scalar_lea.vmem %s196, 1088
      %v405 = vld [vmem:[%s404] sm:$0xff]
      %v406 = vld [vmem:[%s404 + $0x8] sm:$0xff]
      %v407 = vld [vmem:[%s404 + $0x10] sm:$0xff]
      %v408 = vld [vmem:[%s404 + $0x18] sm:$0xff]
      %v409 = vlaneseq
      %v410 = vshrl.u32 %v409, 7
      %v411 = vsub.s32 0, %v410
      %v412 = vrot.slane %v395, %v411
      %v413 = vlaneseq
      %v414 = vshrl.u32 %v413, 7
      %v415 = vsub.s32 0, %v414
      %v416 = vrot.slane %v396, %v415
      %v417 = vmul.f32 %v412, %v400
      %v418 = vmul.f32 %v412, %v401
      %v419 = vmul.f32 %v412, %v402
      %v420 = vmul.f32 %v412, %v403
      %v421 = vmul.f32 %v416, %v400
      %v422 = vmul.f32 %v416, %v401
      %v423 = vmul.f32 %v416, %v402
      %v424 = vmul.f32 %v416, %v403
      %v425 = vlaneseq
      %v426 = vshrl.u32 %v425, 7
      %v427 = vsub.s32 0, %v426
      %v428 = vrot.slane %v397, %v427
      %v429 = vlaneseq
      %v430 = vshrl.u32 %v429, 7
      %v431 = vsub.s32 0, %v430
      %v432 = vrot.slane %v398, %v431
      %v433 = vmul.f32 %v428, %v405
      %v434 = vmul.f32 %v428, %v406
      %v435 = vmul.f32 %v428, %v407
      %v436 = vmul.f32 %v428, %v408
      %v437 = vmul.f32 %v432, %v405
      %v438 = vmul.f32 %v432, %v406
      %v439 = vmul.f32 %v432, %v407
      %v440 = vmul.f32 %v432, %v408
      %v441 = vsub.f32 %v417, %v433
      %v442 = vsub.f32 %v418, %v434
      %v443 = vsub.f32 %v419, %v435
      %v444 = vsub.f32 %v420, %v436
      %v445 = vsub.f32 %v421, %v437
      %v446 = vsub.f32 %v422, %v438
      %v447 = vsub.f32 %v423, %v439
      %v448 = vsub.f32 %v424, %v440
      %v449 = vadd.f32 %v355, %v441
      %v450 = vadd.f32 %v356, %v442
      %v451 = vadd.f32 %v357, %v443
      %v452 = vadd.f32 %v358, %v444
      %v453 = vadd.f32 %v359, %v445
      %v454 = vadd.f32 %v360, %v446
      %v455 = vadd.f32 %v361, %v447
      %v456 = vadd.f32 %v362, %v448
      %v457 = vmul.f32 %v412, %v405
      %v458 = vmul.f32 %v412, %v406
      %v459 = vmul.f32 %v412, %v407
      %v460 = vmul.f32 %v412, %v408
      %v461 = vmul.f32 %v416, %v405
      %v462 = vmul.f32 %v416, %v406
      %v463 = vmul.f32 %v416, %v407
      %v464 = vmul.f32 %v416, %v408
      %v465 = vmul.f32 %v428, %v400
      %v466 = vmul.f32 %v428, %v401
      %v467 = vmul.f32 %v428, %v402
      %v468 = vmul.f32 %v428, %v403
      %v469 = vmul.f32 %v432, %v400
      %v470 = vmul.f32 %v432, %v401
      %v471 = vmul.f32 %v432, %v402
      %v472 = vmul.f32 %v432, %v403
      %v473 = vadd.f32 %v457, %v465
      %v474 = vadd.f32 %v458, %v466
      %v475 = vadd.f32 %v459, %v467
      %v476 = vadd.f32 %v460, %v468
      %v477 = vadd.f32 %v461, %v469
      %v478 = vadd.f32 %v462, %v470
      %v479 = vadd.f32 %v463, %v471
      %v480 = vadd.f32 %v464, %v472
      %v481 = vadd.f32 %v387, %v473
      %v482 = vadd.f32 %v388, %v474
      %v483 = vadd.f32 %v389, %v475
      %v484 = vadd.f32 %v390, %v476
      %v485 = vadd.f32 %v391, %v477
      %v486 = vadd.f32 %v392, %v478
      %v487 = vadd.f32 %v393, %v479
      %v488 = vadd.f32 %v394, %v480
      %v489 = vld [vmem:[%s190 + $0x3] sm:$0x1]
      %v490 = vld [vmem:[%s190 + $0x43] sm:$0x1]
      %v491 = vld [vmem:[%s190 + $0x23] sm:$0x1]
      %v492 = vld [vmem:[%s190 + $0x63] sm:$0x1]
      %s493 = scalar_lea.vmem %s196, 96
      %v494 = vld [vmem:[%s493] sm:$0xff]
      %v495 = vld [vmem:[%s493 + $0x8] sm:$0xff]
      %v496 = vld [vmem:[%s493 + $0x10] sm:$0xff]
      %v497 = vld [vmem:[%s493 + $0x18] sm:$0xff]
      %s498 = scalar_lea.vmem %s196, 1120
      %v499 = vld [vmem:[%s498] sm:$0xff]
      %v500 = vld [vmem:[%s498 + $0x8] sm:$0xff]
      %v501 = vld [vmem:[%s498 + $0x10] sm:$0xff]
      %v502 = vld [vmem:[%s498 + $0x18] sm:$0xff]
      %v503 = vlaneseq
      %v504 = vshrl.u32 %v503, 7
      %v505 = vsub.s32 0, %v504
      %v506 = vrot.slane %v489, %v505
      %v507 = vlaneseq
      %v508 = vshrl.u32 %v507, 7
      %v509 = vsub.s32 0, %v508
      %v510 = vrot.slane %v490, %v509
      %v511 = vmul.f32 %v506, %v494
      %v512 = vmul.f32 %v506, %v495
      %v513 = vmul.f32 %v506, %v496
      %v514 = vmul.f32 %v506, %v497
      %v515 = vmul.f32 %v510, %v494
      %v516 = vmul.f32 %v510, %v495
      %v517 = vmul.f32 %v510, %v496
      %v518 = vmul.f32 %v510, %v497
      %v519 = vlaneseq
      %v520 = vshrl.u32 %v519, 7
      %v521 = vsub.s32 0, %v520
      %v522 = vrot.slane %v491, %v521
      %v523 = vlaneseq
      %v524 = vshrl.u32 %v523, 7
      %v525 = vsub.s32 0, %v524
      %v526 = vrot.slane %v492, %v525
      %v527 = vmul.f32 %v522, %v499
      %v528 = vmul.f32 %v522, %v500
      %v529 = vmul.f32 %v522, %v501
      %v530 = vmul.f32 %v522, %v502
      %v531 = vmul.f32 %v526, %v499
      %v532 = vmul.f32 %v526, %v500
      %v533 = vmul.f32 %v526, %v501
      %v534 = vmul.f32 %v526, %v502
      %v535 = vsub.f32 %v511, %v527
      %v536 = vsub.f32 %v512, %v528
      %v537 = vsub.f32 %v513, %v529
      %v538 = vsub.f32 %v514, %v530
      %v539 = vsub.f32 %v515, %v531
      %v540 = vsub.f32 %v516, %v532
      %v541 = vsub.f32 %v517, %v533
      %v542 = vsub.f32 %v518, %v534
      %v543 = vadd.f32 %v449, %v535
      %v544 = vadd.f32 %v450, %v536
      %v545 = vadd.f32 %v451, %v537
      %v546 = vadd.f32 %v452, %v538
      %v547 = vadd.f32 %v453, %v539
      %v548 = vadd.f32 %v454, %v540
      %v549 = vadd.f32 %v455, %v541
      %v550 = vadd.f32 %v456, %v542
      %v551 = vmul.f32 %v506, %v499
      %v552 = vmul.f32 %v506, %v500
      %v553 = vmul.f32 %v506, %v501
      %v554 = vmul.f32 %v506, %v502
      %v555 = vmul.f32 %v510, %v499
      %v556 = vmul.f32 %v510, %v500
      %v557 = vmul.f32 %v510, %v501
      %v558 = vmul.f32 %v510, %v502
      %v559 = vmul.f32 %v522, %v494
      %v560 = vmul.f32 %v522, %v495
      %v561 = vmul.f32 %v522, %v496
      %v562 = vmul.f32 %v522, %v497
      %v563 = vmul.f32 %v526, %v494
      %v564 = vmul.f32 %v526, %v495
      %v565 = vmul.f32 %v526, %v496
      %v566 = vmul.f32 %v526, %v497
      %v567 = vadd.f32 %v551, %v559
      %v568 = vadd.f32 %v552, %v560
      %v569 = vadd.f32 %v553, %v561
      %v570 = vadd.f32 %v554, %v562
      %v571 = vadd.f32 %v555, %v563
      %v572 = vadd.f32 %v556, %v564
      %v573 = vadd.f32 %v557, %v565
      %v574 = vadd.f32 %v558, %v566
      %v575 = vadd.f32 %v481, %v567
      %v576 = vadd.f32 %v482, %v568
      %v577 = vadd.f32 %v483, %v569
      %v578 = vadd.f32 %v484, %v570
      %v579 = vadd.f32 %v485, %v571
      %v580 = vadd.f32 %v486, %v572
      %v581 = vadd.f32 %v487, %v573
      %v582 = vadd.f32 %v488, %v574
      %v583 = vld [vmem:[%s190 + $0x4] sm:$0x1]
      %v584 = vld [vmem:[%s190 + $0x44] sm:$0x1]
      %v585 = vld [vmem:[%s190 + $0x24] sm:$0x1]
      %v586 = vld [vmem:[%s190 + $0x64] sm:$0x1]
      %s587 = scalar_lea.vmem %s196, 128
      %v588 = vld [vmem:[%s587] sm:$0xff]
      %v589 = vld [vmem:[%s587 + $0x8] sm:$0xff]
      %v590 = vld [vmem:[%s587 + $0x10] sm:$0xff]
      %v591 = vld [vmem:[%s587 + $0x18] sm:$0xff]
      %s592 = scalar_lea.vmem %s196, 1152
      %v593 = vld [vmem:[%s592] sm:$0xff]
      %v594 = vld [vmem:[%s592 + $0x8] sm:$0xff]
      %v595 = vld [vmem:[%s592 + $0x10] sm:$0xff]
      %v596 = vld [vmem:[%s592 + $0x18] sm:$0xff]
      %v597 = vlaneseq
      %v598 = vshrl.u32 %v597, 7
      %v599 = vsub.s32 0, %v598
      %v600 = vrot.slane %v583, %v599
      %v601 = vlaneseq
      %v602 = vshrl.u32 %v601, 7
      %v603 = vsub.s32 0, %v602
      %v604 = vrot.slane %v584, %v603
      %v605 = vmul.f32 %v600, %v588
      %v606 = vmul.f32 %v600, %v589
      %v607 = vmul.f32 %v600, %v590
      %v608 = vmul.f32 %v600, %v591
      %v609 = vmul.f32 %v604, %v588
      %v610 = vmul.f32 %v604, %v589
      %v611 = vmul.f32 %v604, %v590
      %v612 = vmul.f32 %v604, %v591
      %v613 = vlaneseq
      %v614 = vshrl.u32 %v613, 7
      %v615 = vsub.s32 0, %v614
      %v616 = vrot.slane %v585, %v615
      %v617 = vlaneseq
      %v618 = vshrl.u32 %v617, 7
      %v619 = vsub.s32 0, %v618
      %v620 = vrot.slane %v586, %v619
      %v621 = vmul.f32 %v616, %v593
      %v622 = vmul.f32 %v616, %v594
      %v623 = vmul.f32 %v616, %v595
      %v624 = vmul.f32 %v616, %v596
      %v625 = vmul.f32 %v620, %v593
      %v626 = vmul.f32 %v620, %v594
      %v627 = vmul.f32 %v620, %v595
      %v628 = vmul.f32 %v620, %v596
      %v629 = vsub.f32 %v605, %v621
      %v630 = vsub.f32 %v606, %v622
      %v631 = vsub.f32 %v607, %v623
      %v632 = vsub.f32 %v608, %v624
      %v633 = vsub.f32 %v609, %v625
      %v634 = vsub.f32 %v610, %v626
      %v635 = vsub.f32 %v611, %v627
      %v636 = vsub.f32 %v612, %v628
      %v637 = vadd.f32 %v543, %v629
      %v638 = vadd.f32 %v544, %v630
      %v639 = vadd.f32 %v545, %v631
      %v640 = vadd.f32 %v546, %v632
      %v641 = vadd.f32 %v547, %v633
      %v642 = vadd.f32 %v548, %v634
      %v643 = vadd.f32 %v549, %v635
      %v644 = vadd.f32 %v550, %v636
      %v645 = vmul.f32 %v600, %v593
      %v646 = vmul.f32 %v600, %v594
      %v647 = vmul.f32 %v600, %v595
      %v648 = vmul.f32 %v600, %v596
      %v649 = vmul.f32 %v604, %v593
      %v650 = vmul.f32 %v604, %v594
      %v651 = vmul.f32 %v604, %v595
      %v652 = vmul.f32 %v604, %v596
      %v653 = vmul.f32 %v616, %v588
      %v654 = vmul.f32 %v616, %v589
      %v655 = vmul.f32 %v616, %v590
      %v656 = vmul.f32 %v616, %v591
      %v657 = vmul.f32 %v620, %v588
      %v658 = vmul.f32 %v620, %v589
      %v659 = vmul.f32 %v620, %v590
      %v660 = vmul.f32 %v620, %v591
      %v661 = vadd.f32 %v645, %v653
      %v662 = vadd.f32 %v646, %v654
      %v663 = vadd.f32 %v647, %v655
      %v664 = vadd.f32 %v648, %v656
      %v665 = vadd.f32 %v649, %v657
      %v666 = vadd.f32 %v650, %v658
      %v667 = vadd.f32 %v651, %v659
      %v668 = vadd.f32 %v652, %v660
      %v669 = vadd.f32 %v575, %v661
      %v670 = vadd.f32 %v576, %v662
      %v671 = vadd.f32 %v577, %v663
      %v672 = vadd.f32 %v578, %v664
      %v673 = vadd.f32 %v579, %v665
      %v674 = vadd.f32 %v580, %v666
      %v675 = vadd.f32 %v581, %v667
      %v676 = vadd.f32 %v582, %v668
      %v677 = vld [vmem:[%s190 + $0x5] sm:$0x1]
      %v678 = vld [vmem:[%s190 + $0x45] sm:$0x1]
      %v679 = vld [vmem:[%s190 + $0x25] sm:$0x1]
      %v680 = vld [vmem:[%s190 + $0x65] sm:$0x1]
      %s681 = scalar_lea.vmem %s196, 160
      %v682 = vld [vmem:[%s681] sm:$0xff]
      %v683 = vld [vmem:[%s681 + $0x8] sm:$0xff]
      %v684 = vld [vmem:[%s681 + $0x10] sm:$0xff]
      %v685 = vld [vmem:[%s681 + $0x18] sm:$0xff]
      %s686 = scalar_lea.vmem %s196, 1184
      %v687 = vld [vmem:[%s686] sm:$0xff]
      %v688 = vld [vmem:[%s686 + $0x8] sm:$0xff]
      %v689 = vld [vmem:[%s686 + $0x10] sm:$0xff]
      %v690 = vld [vmem:[%s686 + $0x18] sm:$0xff]
      %v691 = vlaneseq
      %v692 = vshrl.u32 %v691, 7
      %v693 = vsub.s32 0, %v692
      %v694 = vrot.slane %v677, %v693
      %v695 = vlaneseq
      %v696 = vshrl.u32 %v695, 7
      %v697 = vsub.s32 0, %v696
      %v698 = vrot.slane %v678, %v697
      %v699 = vmul.f32 %v694, %v682
      %v700 = vmul.f32 %v694, %v683
      %v701 = vmul.f32 %v694, %v684
      %v702 = vmul.f32 %v694, %v685
      %v703 = vmul.f32 %v698, %v682
      %v704 = vmul.f32 %v698, %v683
      %v705 = vmul.f32 %v698, %v684
      %v706 = vmul.f32 %v698, %v685
      %v707 = vlaneseq
      %v708 = vshrl.u32 %v707, 7
      %v709 = vsub.s32 0, %v708
      %v710 = vrot.slane %v679, %v709
      %v711 = vlaneseq
      %v712 = vshrl.u32 %v711, 7
      %v713 = vsub.s32 0, %v712
      %v714 = vrot.slane %v680, %v713
      %v715 = vmul.f32 %v710, %v687
      %v716 = vmul.f32 %v710, %v688
      %v717 = vmul.f32 %v710, %v689
      %v718 = vmul.f32 %v710, %v690
      %v719 = vmul.f32 %v714, %v687
      %v720 = vmul.f32 %v714, %v688
      %v721 = vmul.f32 %v714, %v689
      %v722 = vmul.f32 %v714, %v690
      %v723 = vsub.f32 %v699, %v715
      %v724 = vsub.f32 %v700, %v716
      %v725 = vsub.f32 %v701, %v717
      %v726 = vsub.f32 %v702, %v718
      %v727 = vsub.f32 %v703, %v719
      %v728 = vsub.f32 %v704, %v720
      %v729 = vsub.f32 %v705, %v721
      %v730 = vsub.f32 %v706, %v722
      %v731 = vadd.f32 %v637, %v723
      %v732 = vadd.f32 %v638, %v724
      %v733 = vadd.f32 %v639, %v725
      %v734 = vadd.f32 %v640, %v726
      %v735 = vadd.f32 %v641, %v727
      %v736 = vadd.f32 %v642, %v728
      %v737 = vadd.f32 %v643, %v729
      %v738 = vadd.f32 %v644, %v730
      %v739 = vmul.f32 %v694, %v687
      %v740 = vmul.f32 %v694, %v688
      %v741 = vmul.f32 %v694, %v689
      %v742 = vmul.f32 %v694, %v690
      %v743 = vmul.f32 %v698, %v687
      %v744 = vmul.f32 %v698, %v688
      %v745 = vmul.f32 %v698, %v689
      %v746 = vmul.f32 %v698, %v690
      %v747 = vmul.f32 %v710, %v682
      %v748 = vmul.f32 %v710, %v683
      %v749 = vmul.f32 %v710, %v684
      %v750 = vmul.f32 %v710, %v685
      %v751 = vmul.f32 %v714, %v682
      %v752 = vmul.f32 %v714, %v683
      %v753 = vmul.f32 %v714, %v684
      %v754 = vmul.f32 %v714, %v685
      %v755 = vadd.f32 %v739, %v747
      %v756 = vadd.f32 %v740, %v748
      %v757 = vadd.f32 %v741, %v749
      %v758 = vadd.f32 %v742, %v750
      %v759 = vadd.f32 %v743, %v751
      %v760 = vadd.f32 %v744, %v752
      %v761 = vadd.f32 %v745, %v753
      %v762 = vadd.f32 %v746, %v754
      %v763 = vadd.f32 %v669, %v755
      %v764 = vadd.f32 %v670, %v756
      %v765 = vadd.f32 %v671, %v757
      %v766 = vadd.f32 %v672, %v758
      %v767 = vadd.f32 %v673, %v759
      %v768 = vadd.f32 %v674, %v760
      %v769 = vadd.f32 %v675, %v761
      %v770 = vadd.f32 %v676, %v762
      %v771 = vld [vmem:[%s190 + $0x6] sm:$0x1]
      %v772 = vld [vmem:[%s190 + $0x46] sm:$0x1]
      %v773 = vld [vmem:[%s190 + $0x26] sm:$0x1]
      %v774 = vld [vmem:[%s190 + $0x66] sm:$0x1]
      %s775 = scalar_lea.vmem %s196, 192
      %v776 = vld [vmem:[%s775] sm:$0xff]
      %v777 = vld [vmem:[%s775 + $0x8] sm:$0xff]
      %v778 = vld [vmem:[%s775 + $0x10] sm:$0xff]
      %v779 = vld [vmem:[%s775 + $0x18] sm:$0xff]
      %s780 = scalar_lea.vmem %s196, 1216
      %v781 = vld [vmem:[%s780] sm:$0xff]
      %v782 = vld [vmem:[%s780 + $0x8] sm:$0xff]
      %v783 = vld [vmem:[%s780 + $0x10] sm:$0xff]
      %v784 = vld [vmem:[%s780 + $0x18] sm:$0xff]
      %v785 = vlaneseq
      %v786 = vshrl.u32 %v785, 7
      %v787 = vsub.s32 0, %v786
      %v788 = vrot.slane %v771, %v787
      %v789 = vlaneseq
      %v790 = vshrl.u32 %v789, 7
      %v791 = vsub.s32 0, %v790
      %v792 = vrot.slane %v772, %v791
      %v793 = vmul.f32 %v788, %v776
      %v794 = vmul.f32 %v788, %v777
      %v795 = vmul.f32 %v788, %v778
      %v796 = vmul.f32 %v788, %v779
      %v797 = vmul.f32 %v792, %v776
      %v798 = vmul.f32 %v792, %v777
      %v799 = vmul.f32 %v792, %v778
      %v800 = vmul.f32 %v792, %v779
      %v801 = vlaneseq
      %v802 = vshrl.u32 %v801, 7
      %v803 = vsub.s32 0, %v802
      %v804 = vrot.slane %v773, %v803
      %v805 = vlaneseq
      %v806 = vshrl.u32 %v805, 7
      %v807 = vsub.s32 0, %v806
      %v808 = vrot.slane %v774, %v807
      %v809 = vmul.f32 %v804, %v781
      %v810 = vmul.f32 %v804, %v782
      %v811 = vmul.f32 %v804, %v783
      %v812 = vmul.f32 %v804, %v784
      %v813 = vmul.f32 %v808, %v781
      %v814 = vmul.f32 %v808, %v782
      %v815 = vmul.f32 %v808, %v783
      %v816 = vmul.f32 %v808, %v784
      %v817 = vsub.f32 %v793, %v809
      %v818 = vsub.f32 %v794, %v810
      %v819 = vsub.f32 %v795, %v811
      %v820 = vsub.f32 %v796, %v812
      %v821 = vsub.f32 %v797, %v813
      %v822 = vsub.f32 %v798, %v814
      %v823 = vsub.f32 %v799, %v815
      %v824 = vsub.f32 %v800, %v816
      %v825 = vadd.f32 %v731, %v817
      %v826 = vadd.f32 %v732, %v818
      %v827 = vadd.f32 %v733, %v819
      %v828 = vadd.f32 %v734, %v820
      %v829 = vadd.f32 %v735, %v821
      %v830 = vadd.f32 %v736, %v822
      %v831 = vadd.f32 %v737, %v823
      %v832 = vadd.f32 %v738, %v824
      %v833 = vmul.f32 %v788, %v781
      %v834 = vmul.f32 %v788, %v782
      %v835 = vmul.f32 %v788, %v783
      %v836 = vmul.f32 %v788, %v784
      %v837 = vmul.f32 %v792, %v781
      %v838 = vmul.f32 %v792, %v782
      %v839 = vmul.f32 %v792, %v783
      %v840 = vmul.f32 %v792, %v784
      %v841 = vmul.f32 %v804, %v776
      %v842 = vmul.f32 %v804, %v777
      %v843 = vmul.f32 %v804, %v778
      %v844 = vmul.f32 %v804, %v779
      %v845 = vmul.f32 %v808, %v776
      %v846 = vmul.f32 %v808, %v777
      %v847 = vmul.f32 %v808, %v778
      %v848 = vmul.f32 %v808, %v779
      %v849 = vadd.f32 %v833, %v841
      %v850 = vadd.f32 %v834, %v842
      %v851 = vadd.f32 %v835, %v843
      %v852 = vadd.f32 %v836, %v844
      %v853 = vadd.f32 %v837, %v845
      %v854 = vadd.f32 %v838, %v846
      %v855 = vadd.f32 %v839, %v847
      %v856 = vadd.f32 %v840, %v848
      %v857 = vadd.f32 %v763, %v849
      %v858 = vadd.f32 %v764, %v850
      %v859 = vadd.f32 %v765, %v851
      %v860 = vadd.f32 %v766, %v852
      %v861 = vadd.f32 %v767, %v853
      %v862 = vadd.f32 %v768, %v854
      %v863 = vadd.f32 %v769, %v855
      %v864 = vadd.f32 %v770, %v856
      %v865 = vld [vmem:[%s190 + $0x7] sm:$0x1]
      %v866 = vld [vmem:[%s190 + $0x47] sm:$0x1]
      %v867 = vld [vmem:[%s190 + $0x27] sm:$0x1]
      %v868 = vld [vmem:[%s190 + $0x67] sm:$0x1]
      %s869 = scalar_lea.vmem %s196, 224
      %v870 = vld [vmem:[%s869] sm:$0xff]
      %v871 = vld [vmem:[%s869 + $0x8] sm:$0xff]
      %v872 = vld [vmem:[%s869 + $0x10] sm:$0xff]
      %v873 = vld [vmem:[%s869 + $0x18] sm:$0xff]
      %s874 = scalar_lea.vmem %s196, 1248
      %v875 = vld [vmem:[%s874] sm:$0xff]
      %v876 = vld [vmem:[%s874 + $0x8] sm:$0xff]
      %v877 = vld [vmem:[%s874 + $0x10] sm:$0xff]
      %v878 = vld [vmem:[%s874 + $0x18] sm:$0xff]
      %v879 = vlaneseq
      %v880 = vshrl.u32 %v879, 7
      %v881 = vsub.s32 0, %v880
      %v882 = vrot.slane %v865, %v881
      %v883 = vlaneseq
      %v884 = vshrl.u32 %v883, 7
      %v885 = vsub.s32 0, %v884
      %v886 = vrot.slane %v866, %v885
      %v887 = vmul.f32 %v882, %v870
      %v888 = vmul.f32 %v882, %v871
      %v889 = vmul.f32 %v882, %v872
      %v890 = vmul.f32 %v882, %v873
      %v891 = vmul.f32 %v886, %v870
      %v892 = vmul.f32 %v886, %v871
      %v893 = vmul.f32 %v886, %v872
      %v894 = vmul.f32 %v886, %v873
      %v895 = vlaneseq
      %v896 = vshrl.u32 %v895, 7
      %v897 = vsub.s32 0, %v896
      %v898 = vrot.slane %v867, %v897
      %v899 = vlaneseq
      %v900 = vshrl.u32 %v899, 7
      %v901 = vsub.s32 0, %v900
      %v902 = vrot.slane %v868, %v901
      %v903 = vmul.f32 %v898, %v875
      %v904 = vmul.f32 %v898, %v876
      %v905 = vmul.f32 %v898, %v877
      %v906 = vmul.f32 %v898, %v878
      %v907 = vmul.f32 %v902, %v875
      %v908 = vmul.f32 %v902, %v876
      %v909 = vmul.f32 %v902, %v877
      %v910 = vmul.f32 %v902, %v878
      %v911 = vsub.f32 %v887, %v903
      %v912 = vsub.f32 %v888, %v904
      %v913 = vsub.f32 %v889, %v905
      %v914 = vsub.f32 %v890, %v906
      %v915 = vsub.f32 %v891, %v907
      %v916 = vsub.f32 %v892, %v908
      %v917 = vsub.f32 %v893, %v909
      %v918 = vsub.f32 %v894, %v910
      %v919 = vadd.f32 %v825, %v911
      %v920 = vadd.f32 %v826, %v912
      %v921 = vadd.f32 %v827, %v913
      %v922 = vadd.f32 %v828, %v914
      %v923 = vadd.f32 %v829, %v915
      %v924 = vadd.f32 %v830, %v916
      %v925 = vadd.f32 %v831, %v917
      %v926 = vadd.f32 %v832, %v918
      %v927 = vmul.f32 %v882, %v875
      %v928 = vmul.f32 %v882, %v876
      %v929 = vmul.f32 %v882, %v877
      %v930 = vmul.f32 %v882, %v878
      %v931 = vmul.f32 %v886, %v875
      %v932 = vmul.f32 %v886, %v876
      %v933 = vmul.f32 %v886, %v877
      %v934 = vmul.f32 %v886, %v878
      %v935 = vmul.f32 %v898, %v870
      %v936 = vmul.f32 %v898, %v871
      %v937 = vmul.f32 %v898, %v872
      %v938 = vmul.f32 %v898, %v873
      %v939 = vmul.f32 %v902, %v870
      %v940 = vmul.f32 %v902, %v871
      %v941 = vmul.f32 %v902, %v872
      %v942 = vmul.f32 %v902, %v873
      %v943 = vadd.f32 %v927, %v935
      %v944 = vadd.f32 %v928, %v936
      %v945 = vadd.f32 %v929, %v937
      %v946 = vadd.f32 %v930, %v938
      %v947 = vadd.f32 %v931, %v939
      %v948 = vadd.f32 %v932, %v940
      %v949 = vadd.f32 %v933, %v941
      %v950 = vadd.f32 %v934, %v942
      %v951 = vadd.f32 %v857, %v943
      %v952 = vadd.f32 %v858, %v944
      %v953 = vadd.f32 %v859, %v945
      %v954 = vadd.f32 %v860, %v946
      %v955 = vadd.f32 %v861, %v947
      %v956 = vadd.f32 %v862, %v948
      %v957 = vadd.f32 %v863, %v949
      %v958 = vadd.f32 %v864, %v950
      %v959 = vld [vmem:[%s190 + $0x8] sm:$0x1]
      %v960 = vld [vmem:[%s190 + $0x48] sm:$0x1]
      %v961 = vld [vmem:[%s190 + $0x28] sm:$0x1]
      %v962 = vld [vmem:[%s190 + $0x68] sm:$0x1]
      %s963 = scalar_lea.vmem %s196, 256
      %v964 = vld [vmem:[%s963] sm:$0xff]
      %v965 = vld [vmem:[%s963 + $0x8] sm:$0xff]
      %v966 = vld [vmem:[%s963 + $0x10] sm:$0xff]
      %v967 = vld [vmem:[%s963 + $0x18] sm:$0xff]
      %s968 = scalar_lea.vmem %s196, 1280
      %v969 = vld [vmem:[%s968] sm:$0xff]
      %v970 = vld [vmem:[%s968 + $0x8] sm:$0xff]
      %v971 = vld [vmem:[%s968 + $0x10] sm:$0xff]
      %v972 = vld [vmem:[%s968 + $0x18] sm:$0xff]
      %v973 = vlaneseq
      %v974 = vshrl.u32 %v973, 7
      %v975 = vsub.s32 0, %v974
      %v976 = vrot.slane %v959, %v975
      %v977 = vlaneseq
      %v978 = vshrl.u32 %v977, 7
      %v979 = vsub.s32 0, %v978
      %v980 = vrot.slane %v960, %v979
      %v981 = vmul.f32 %v976, %v964
      %v982 = vmul.f32 %v976, %v965
      %v983 = vmul.f32 %v976, %v966
      %v984 = vmul.f32 %v976, %v967
      %v985 = vmul.f32 %v980, %v964
      %v986 = vmul.f32 %v980, %v965
      %v987 = vmul.f32 %v980, %v966
      %v988 = vmul.f32 %v980, %v967
      %v989 = vlaneseq
      %v990 = vshrl.u32 %v989, 7
      %v991 = vsub.s32 0, %v990
      %v992 = vrot.slane %v961, %v991
      %v993 = vlaneseq
      %v994 = vshrl.u32 %v993, 7
      %v995 = vsub.s32 0, %v994
      %v996 = vrot.slane %v962, %v995
      %v997 = vmul.f32 %v992, %v969
      %v998 = vmul.f32 %v992, %v970
      %v999 = vmul.f32 %v992, %v971
      %v1000 = vmul.f32 %v992, %v972
      %v1001 = vmul.f32 %v996, %v969
      %v1002 = vmul.f32 %v996, %v970
      %v1003 = vmul.f32 %v996, %v971
      %v1004 = vmul.f32 %v996, %v972
      %v1005 = vsub.f32 %v981, %v997
      %v1006 = vsub.f32 %v982, %v998
      %v1007 = vsub.f32 %v983, %v999
      %v1008 = vsub.f32 %v984, %v1000
      %v1009 = vsub.f32 %v985, %v1001
      %v1010 = vsub.f32 %v986, %v1002
      %v1011 = vsub.f32 %v987, %v1003
      %v1012 = vsub.f32 %v988, %v1004
      %v1013 = vadd.f32 %v919, %v1005
      %v1014 = vadd.f32 %v920, %v1006
      %v1015 = vadd.f32 %v921, %v1007
      %v1016 = vadd.f32 %v922, %v1008
      %v1017 = vadd.f32 %v923, %v1009
      %v1018 = vadd.f32 %v924, %v1010
      %v1019 = vadd.f32 %v925, %v1011
      %v1020 = vadd.f32 %v926, %v1012
      %v1021 = vmul.f32 %v976, %v969
      %v1022 = vmul.f32 %v976, %v970
      %v1023 = vmul.f32 %v976, %v971
      %v1024 = vmul.f32 %v976, %v972
      %v1025 = vmul.f32 %v980, %v969
      %v1026 = vmul.f32 %v980, %v970
      %v1027 = vmul.f32 %v980, %v971
      %v1028 = vmul.f32 %v980, %v972
      %v1029 = vmul.f32 %v992, %v964
      %v1030 = vmul.f32 %v992, %v965
      %v1031 = vmul.f32 %v992, %v966
      %v1032 = vmul.f32 %v992, %v967
      %v1033 = vmul.f32 %v996, %v964
      %v1034 = vmul.f32 %v996, %v965
      %v1035 = vmul.f32 %v996, %v966
      %v1036 = vmul.f32 %v996, %v967
      %v1037 = vadd.f32 %v1021, %v1029
      %v1038 = vadd.f32 %v1022, %v1030
      %v1039 = vadd.f32 %v1023, %v1031
      %v1040 = vadd.f32 %v1024, %v1032
      %v1041 = vadd.f32 %v1025, %v1033
      %v1042 = vadd.f32 %v1026, %v1034
      %v1043 = vadd.f32 %v1027, %v1035
      %v1044 = vadd.f32 %v1028, %v1036
      %v1045 = vadd.f32 %v951, %v1037
      %v1046 = vadd.f32 %v952, %v1038
      %v1047 = vadd.f32 %v953, %v1039
      %v1048 = vadd.f32 %v954, %v1040
      %v1049 = vadd.f32 %v955, %v1041
      %v1050 = vadd.f32 %v956, %v1042
      %v1051 = vadd.f32 %v957, %v1043
      %v1052 = vadd.f32 %v958, %v1044
      %v1053 = vld [vmem:[%s190 + $0x9] sm:$0x1]
      %v1054 = vld [vmem:[%s190 + $0x49] sm:$0x1]
      %v1055 = vld [vmem:[%s190 + $0x29] sm:$0x1]
      %v1056 = vld [vmem:[%s190 + $0x69] sm:$0x1]
      %s1057 = scalar_lea.vmem %s196, 288
      %v1058 = vld [vmem:[%s1057] sm:$0xff]
      %v1059 = vld [vmem:[%s1057 + $0x8] sm:$0xff]
      %v1060 = vld [vmem:[%s1057 + $0x10] sm:$0xff]
      %v1061 = vld [vmem:[%s1057 + $0x18] sm:$0xff]
      %s1062 = scalar_lea.vmem %s196, 1312
      %v1063 = vld [vmem:[%s1062] sm:$0xff]
      %v1064 = vld [vmem:[%s1062 + $0x8] sm:$0xff]
      %v1065 = vld [vmem:[%s1062 + $0x10] sm:$0xff]
      %v1066 = vld [vmem:[%s1062 + $0x18] sm:$0xff]
      %v1067 = vlaneseq
      %v1068 = vshrl.u32 %v1067, 7
      %v1069 = vsub.s32 0, %v1068
      %v1070 = vrot.slane %v1053, %v1069
      %v1071 = vlaneseq
      %v1072 = vshrl.u32 %v1071, 7
      %v1073 = vsub.s32 0, %v1072
      %v1074 = vrot.slane %v1054, %v1073
      %v1075 = vmul.f32 %v1070, %v1058
      %v1076 = vmul.f32 %v1070, %v1059
      %v1077 = vmul.f32 %v1070, %v1060
      %v1078 = vmul.f32 %v1070, %v1061
      %v1079 = vmul.f32 %v1074, %v1058
      %v1080 = vmul.f32 %v1074, %v1059
      %v1081 = vmul.f32 %v1074, %v1060
      %v1082 = vmul.f32 %v1074, %v1061
      %v1083 = vlaneseq
      %v1084 = vshrl.u32 %v1083, 7
      %v1085 = vsub.s32 0, %v1084
      %v1086 = vrot.slane %v1055, %v1085
      %v1087 = vlaneseq
      %v1088 = vshrl.u32 %v1087, 7
      %v1089 = vsub.s32 0, %v1088
      %v1090 = vrot.slane %v1056, %v1089
      %v1091 = vmul.f32 %v1086, %v1063
      %v1092 = vmul.f32 %v1086, %v1064
      %v1093 = vmul.f32 %v1086, %v1065
      %v1094 = vmul.f32 %v1086, %v1066
      %v1095 = vmul.f32 %v1090, %v1063
      %v1096 = vmul.f32 %v1090, %v1064
      %v1097 = vmul.f32 %v1090, %v1065
      %v1098 = vmul.f32 %v1090, %v1066
      %v1099 = vsub.f32 %v1075, %v1091
      %v1100 = vsub.f32 %v1076, %v1092
      %v1101 = vsub.f32 %v1077, %v1093
      %v1102 = vsub.f32 %v1078, %v1094
      %v1103 = vsub.f32 %v1079, %v1095
      %v1104 = vsub.f32 %v1080, %v1096
      %v1105 = vsub.f32 %v1081, %v1097
      %v1106 = vsub.f32 %v1082, %v1098
      %v1107 = vadd.f32 %v1013, %v1099
      %v1108 = vadd.f32 %v1014, %v1100
      %v1109 = vadd.f32 %v1015, %v1101
      %v1110 = vadd.f32 %v1016, %v1102
      %v1111 = vadd.f32 %v1017, %v1103
      %v1112 = vadd.f32 %v1018, %v1104
      %v1113 = vadd.f32 %v1019, %v1105
      %v1114 = vadd.f32 %v1020, %v1106
      %v1115 = vmul.f32 %v1070, %v1063
      %v1116 = vmul.f32 %v1070, %v1064
      %v1117 = vmul.f32 %v1070, %v1065
      %v1118 = vmul.f32 %v1070, %v1066
      %v1119 = vmul.f32 %v1074, %v1063
      %v1120 = vmul.f32 %v1074, %v1064
      %v1121 = vmul.f32 %v1074, %v1065
      %v1122 = vmul.f32 %v1074, %v1066
      %v1123 = vmul.f32 %v1086, %v1058
      %v1124 = vmul.f32 %v1086, %v1059
      %v1125 = vmul.f32 %v1086, %v1060
      %v1126 = vmul.f32 %v1086, %v1061
      %v1127 = vmul.f32 %v1090, %v1058
      %v1128 = vmul.f32 %v1090, %v1059
      %v1129 = vmul.f32 %v1090, %v1060
      %v1130 = vmul.f32 %v1090, %v1061
      %v1131 = vadd.f32 %v1115, %v1123
      %v1132 = vadd.f32 %v1116, %v1124
      %v1133 = vadd.f32 %v1117, %v1125
      %v1134 = vadd.f32 %v1118, %v1126
      %v1135 = vadd.f32 %v1119, %v1127
      %v1136 = vadd.f32 %v1120, %v1128
      %v1137 = vadd.f32 %v1121, %v1129
      %v1138 = vadd.f32 %v1122, %v1130
      %v1139 = vadd.f32 %v1045, %v1131
      %v1140 = vadd.f32 %v1046, %v1132
      %v1141 = vadd.f32 %v1047, %v1133
      %v1142 = vadd.f32 %v1048, %v1134
      %v1143 = vadd.f32 %v1049, %v1135
      %v1144 = vadd.f32 %v1050, %v1136
      %v1145 = vadd.f32 %v1051, %v1137
      %v1146 = vadd.f32 %v1052, %v1138
      %v1147 = vld [vmem:[%s190 + $0xa] sm:$0x1]
      %v1148 = vld [vmem:[%s190 + $0x4a] sm:$0x1]
      %v1149 = vld [vmem:[%s190 + $0x2a] sm:$0x1]
      %v1150 = vld [vmem:[%s190 + $0x6a] sm:$0x1]
      %s1151 = scalar_lea.vmem %s196, 320
      %v1152 = vld [vmem:[%s1151] sm:$0xff]
      %v1153 = vld [vmem:[%s1151 + $0x8] sm:$0xff]
      %v1154 = vld [vmem:[%s1151 + $0x10] sm:$0xff]
      %v1155 = vld [vmem:[%s1151 + $0x18] sm:$0xff]
      %s1156 = scalar_lea.vmem %s196, 1344
      %v1157 = vld [vmem:[%s1156] sm:$0xff]
      %v1158 = vld [vmem:[%s1156 + $0x8] sm:$0xff]
      %v1159 = vld [vmem:[%s1156 + $0x10] sm:$0xff]
      %v1160 = vld [vmem:[%s1156 + $0x18] sm:$0xff]
      %v1161 = vlaneseq
      %v1162 = vshrl.u32 %v1161, 7
      %v1163 = vsub.s32 0, %v1162
      %v1164 = vrot.slane %v1147, %v1163
      %v1165 = vlaneseq
      %v1166 = vshrl.u32 %v1165, 7
      %v1167 = vsub.s32 0, %v1166
      %v1168 = vrot.slane %v1148, %v1167
      %v1169 = vmul.f32 %v1164, %v1152
      %v1170 = vmul.f32 %v1164, %v1153
      %v1171 = vmul.f32 %v1164, %v1154
      %v1172 = vmul.f32 %v1164, %v1155
      %v1173 = vmul.f32 %v1168, %v1152
      %v1174 = vmul.f32 %v1168, %v1153
      %v1175 = vmul.f32 %v1168, %v1154
      %v1176 = vmul.f32 %v1168, %v1155
      %v1177 = vlaneseq
      %v1178 = vshrl.u32 %v1177, 7
      %v1179 = vsub.s32 0, %v1178
      %v1180 = vrot.slane %v1149, %v1179
      %v1181 = vlaneseq
      %v1182 = vshrl.u32 %v1181, 7
      %v1183 = vsub.s32 0, %v1182
      %v1184 = vrot.slane %v1150, %v1183
      %v1185 = vmul.f32 %v1180, %v1157
      %v1186 = vmul.f32 %v1180, %v1158
      %v1187 = vmul.f32 %v1180, %v1159
      %v1188 = vmul.f32 %v1180, %v1160
      %v1189 = vmul.f32 %v1184, %v1157
      %v1190 = vmul.f32 %v1184, %v1158
      %v1191 = vmul.f32 %v1184, %v1159
      %v1192 = vmul.f32 %v1184, %v1160
      %v1193 = vsub.f32 %v1169, %v1185
      %v1194 = vsub.f32 %v1170, %v1186
      %v1195 = vsub.f32 %v1171, %v1187
      %v1196 = vsub.f32 %v1172, %v1188
      %v1197 = vsub.f32 %v1173, %v1189
      %v1198 = vsub.f32 %v1174, %v1190
      %v1199 = vsub.f32 %v1175, %v1191
      %v1200 = vsub.f32 %v1176, %v1192
      %v1201 = vadd.f32 %v1107, %v1193
      %v1202 = vadd.f32 %v1108, %v1194
      %v1203 = vadd.f32 %v1109, %v1195
      %v1204 = vadd.f32 %v1110, %v1196
      %v1205 = vadd.f32 %v1111, %v1197
      %v1206 = vadd.f32 %v1112, %v1198
      %v1207 = vadd.f32 %v1113, %v1199
      %v1208 = vadd.f32 %v1114, %v1200
      %v1209 = vmul.f32 %v1164, %v1157
      %v1210 = vmul.f32 %v1164, %v1158
      %v1211 = vmul.f32 %v1164, %v1159
      %v1212 = vmul.f32 %v1164, %v1160
      %v1213 = vmul.f32 %v1168, %v1157
      %v1214 = vmul.f32 %v1168, %v1158
      %v1215 = vmul.f32 %v1168, %v1159
      %v1216 = vmul.f32 %v1168, %v1160
      %v1217 = vmul.f32 %v1180, %v1152
      %v1218 = vmul.f32 %v1180, %v1153
      %v1219 = vmul.f32 %v1180, %v1154
      %v1220 = vmul.f32 %v1180, %v1155
      %v1221 = vmul.f32 %v1184, %v1152
      %v1222 = vmul.f32 %v1184, %v1153
      %v1223 = vmul.f32 %v1184, %v1154
      %v1224 = vmul.f32 %v1184, %v1155
      %v1225 = vadd.f32 %v1209, %v1217
      %v1226 = vadd.f32 %v1210, %v1218
      %v1227 = vadd.f32 %v1211, %v1219
      %v1228 = vadd.f32 %v1212, %v1220
      %v1229 = vadd.f32 %v1213, %v1221
      %v1230 = vadd.f32 %v1214, %v1222
      %v1231 = vadd.f32 %v1215, %v1223
      %v1232 = vadd.f32 %v1216, %v1224
      %v1233 = vadd.f32 %v1139, %v1225
      %v1234 = vadd.f32 %v1140, %v1226
      %v1235 = vadd.f32 %v1141, %v1227
      %v1236 = vadd.f32 %v1142, %v1228
      %v1237 = vadd.f32 %v1143, %v1229
      %v1238 = vadd.f32 %v1144, %v1230
      %v1239 = vadd.f32 %v1145, %v1231
      %v1240 = vadd.f32 %v1146, %v1232
      %v1241 = vld [vmem:[%s190 + $0xb] sm:$0x1]
      %v1242 = vld [vmem:[%s190 + $0x4b] sm:$0x1]
      %v1243 = vld [vmem:[%s190 + $0x2b] sm:$0x1]
      %v1244 = vld [vmem:[%s190 + $0x6b] sm:$0x1]
      %s1245 = scalar_lea.vmem %s196, 352
      %v1246 = vld [vmem:[%s1245] sm:$0xff]
      %v1247 = vld [vmem:[%s1245 + $0x8] sm:$0xff]
      %v1248 = vld [vmem:[%s1245 + $0x10] sm:$0xff]
      %v1249 = vld [vmem:[%s1245 + $0x18] sm:$0xff]
      %s1250 = scalar_lea.vmem %s196, 1376
      %v1251 = vld [vmem:[%s1250] sm:$0xff]
      %v1252 = vld [vmem:[%s1250 + $0x8] sm:$0xff]
      %v1253 = vld [vmem:[%s1250 + $0x10] sm:$0xff]
      %v1254 = vld [vmem:[%s1250 + $0x18] sm:$0xff]
      %v1255 = vlaneseq
      %v1256 = vshrl.u32 %v1255, 7
      %v1257 = vsub.s32 0, %v1256
      %v1258 = vrot.slane %v1241, %v1257
      %v1259 = vlaneseq
      %v1260 = vshrl.u32 %v1259, 7
      %v1261 = vsub.s32 0, %v1260
      %v1262 = vrot.slane %v1242, %v1261
      %v1263 = vmul.f32 %v1258, %v1246
      %v1264 = vmul.f32 %v1258, %v1247
      %v1265 = vmul.f32 %v1258, %v1248
      %v1266 = vmul.f32 %v1258, %v1249
      %v1267 = vmul.f32 %v1262, %v1246
      %v1268 = vmul.f32 %v1262, %v1247
      %v1269 = vmul.f32 %v1262, %v1248
      %v1270 = vmul.f32 %v1262, %v1249
      %v1271 = vlaneseq
      %v1272 = vshrl.u32 %v1271, 7
      %v1273 = vsub.s32 0, %v1272
      %v1274 = vrot.slane %v1243, %v1273
      %v1275 = vlaneseq
      %v1276 = vshrl.u32 %v1275, 7
      %v1277 = vsub.s32 0, %v1276
      %v1278 = vrot.slane %v1244, %v1277
      %v1279 = vmul.f32 %v1274, %v1251
      %v1280 = vmul.f32 %v1274, %v1252
      %v1281 = vmul.f32 %v1274, %v1253
      %v1282 = vmul.f32 %v1274, %v1254
      %v1283 = vmul.f32 %v1278, %v1251
      %v1284 = vmul.f32 %v1278, %v1252
      %v1285 = vmul.f32 %v1278, %v1253
      %v1286 = vmul.f32 %v1278, %v1254
      %v1287 = vsub.f32 %v1263, %v1279
      %v1288 = vsub.f32 %v1264, %v1280
      %v1289 = vsub.f32 %v1265, %v1281
      %v1290 = vsub.f32 %v1266, %v1282
      %v1291 = vsub.f32 %v1267, %v1283
      %v1292 = vsub.f32 %v1268, %v1284
      %v1293 = vsub.f32 %v1269, %v1285
      %v1294 = vsub.f32 %v1270, %v1286
      %v1295 = vadd.f32 %v1201, %v1287
      %v1296 = vadd.f32 %v1202, %v1288
      %v1297 = vadd.f32 %v1203, %v1289
      %v1298 = vadd.f32 %v1204, %v1290
      %v1299 = vadd.f32 %v1205, %v1291
      %v1300 = vadd.f32 %v1206, %v1292
      %v1301 = vadd.f32 %v1207, %v1293
      %v1302 = vadd.f32 %v1208, %v1294
      %v1303 = vmul.f32 %v1258, %v1251
      %v1304 = vmul.f32 %v1258, %v1252
      %v1305 = vmul.f32 %v1258, %v1253
      %v1306 = vmul.f32 %v1258, %v1254
      %v1307 = vmul.f32 %v1262, %v1251
      %v1308 = vmul.f32 %v1262, %v1252
      %v1309 = vmul.f32 %v1262, %v1253
      %v1310 = vmul.f32 %v1262, %v1254
      %v1311 = vmul.f32 %v1274, %v1246
      %v1312 = vmul.f32 %v1274, %v1247
      %v1313 = vmul.f32 %v1274, %v1248
      %v1314 = vmul.f32 %v1274, %v1249
      %v1315 = vmul.f32 %v1278, %v1246
      %v1316 = vmul.f32 %v1278, %v1247
      %v1317 = vmul.f32 %v1278, %v1248
      %v1318 = vmul.f32 %v1278, %v1249
      %v1319 = vadd.f32 %v1303, %v1311
      %v1320 = vadd.f32 %v1304, %v1312
      %v1321 = vadd.f32 %v1305, %v1313
      %v1322 = vadd.f32 %v1306, %v1314
      %v1323 = vadd.f32 %v1307, %v1315
      %v1324 = vadd.f32 %v1308, %v1316
      %v1325 = vadd.f32 %v1309, %v1317
      %v1326 = vadd.f32 %v1310, %v1318
      %v1327 = vadd.f32 %v1233, %v1319
      %v1328 = vadd.f32 %v1234, %v1320
      %v1329 = vadd.f32 %v1235, %v1321
      %v1330 = vadd.f32 %v1236, %v1322
      %v1331 = vadd.f32 %v1237, %v1323
      %v1332 = vadd.f32 %v1238, %v1324
      %v1333 = vadd.f32 %v1239, %v1325
      %v1334 = vadd.f32 %v1240, %v1326
      %v1335 = vld [vmem:[%s190 + $0xc] sm:$0x1]
      %v1336 = vld [vmem:[%s190 + $0x4c] sm:$0x1]
      %v1337 = vld [vmem:[%s190 + $0x2c] sm:$0x1]
      %v1338 = vld [vmem:[%s190 + $0x6c] sm:$0x1]
      %s1339 = scalar_lea.vmem %s196, 384
      %v1340 = vld [vmem:[%s1339] sm:$0xff]
      %v1341 = vld [vmem:[%s1339 + $0x8] sm:$0xff]
      %v1342 = vld [vmem:[%s1339 + $0x10] sm:$0xff]
      %v1343 = vld [vmem:[%s1339 + $0x18] sm:$0xff]
      %s1344 = scalar_lea.vmem %s196, 1408
      %v1345 = vld [vmem:[%s1344] sm:$0xff]
      %v1346 = vld [vmem:[%s1344 + $0x8] sm:$0xff]
      %v1347 = vld [vmem:[%s1344 + $0x10] sm:$0xff]
      %v1348 = vld [vmem:[%s1344 + $0x18] sm:$0xff]
      %v1349 = vlaneseq
      %v1350 = vshrl.u32 %v1349, 7
      %v1351 = vsub.s32 0, %v1350
      %v1352 = vrot.slane %v1335, %v1351
      %v1353 = vlaneseq
      %v1354 = vshrl.u32 %v1353, 7
      %v1355 = vsub.s32 0, %v1354
      %v1356 = vrot.slane %v1336, %v1355
      %v1357 = vmul.f32 %v1352, %v1340
      %v1358 = vmul.f32 %v1352, %v1341
      %v1359 = vmul.f32 %v1352, %v1342
      %v1360 = vmul.f32 %v1352, %v1343
      %v1361 = vmul.f32 %v1356, %v1340
      %v1362 = vmul.f32 %v1356, %v1341
      %v1363 = vmul.f32 %v1356, %v1342
      %v1364 = vmul.f32 %v1356, %v1343
      %v1365 = vlaneseq
      %v1366 = vshrl.u32 %v1365, 7
      %v1367 = vsub.s32 0, %v1366
      %v1368 = vrot.slane %v1337, %v1367
      %v1369 = vlaneseq
      %v1370 = vshrl.u32 %v1369, 7
      %v1371 = vsub.s32 0, %v1370
      %v1372 = vrot.slane %v1338, %v1371
      %v1373 = vmul.f32 %v1368, %v1345
      %v1374 = vmul.f32 %v1368, %v1346
      %v1375 = vmul.f32 %v1368, %v1347
      %v1376 = vmul.f32 %v1368, %v1348
      %v1377 = vmul.f32 %v1372, %v1345
      %v1378 = vmul.f32 %v1372, %v1346
      %v1379 = vmul.f32 %v1372, %v1347
      %v1380 = vmul.f32 %v1372, %v1348
      %v1381 = vsub.f32 %v1357, %v1373
      %v1382 = vsub.f32 %v1358, %v1374
      %v1383 = vsub.f32 %v1359, %v1375
      %v1384 = vsub.f32 %v1360, %v1376
      %v1385 = vsub.f32 %v1361, %v1377
      %v1386 = vsub.f32 %v1362, %v1378
      %v1387 = vsub.f32 %v1363, %v1379
      %v1388 = vsub.f32 %v1364, %v1380
      %v1389 = vadd.f32 %v1295, %v1381
      %v1390 = vadd.f32 %v1296, %v1382
      %v1391 = vadd.f32 %v1297, %v1383
      %v1392 = vadd.f32 %v1298, %v1384
      %v1393 = vadd.f32 %v1299, %v1385
      %v1394 = vadd.f32 %v1300, %v1386
      %v1395 = vadd.f32 %v1301, %v1387
      %v1396 = vadd.f32 %v1302, %v1388
      %v1397 = vmul.f32 %v1352, %v1345
      %v1398 = vmul.f32 %v1352, %v1346
      %v1399 = vmul.f32 %v1352, %v1347
      %v1400 = vmul.f32 %v1352, %v1348
      %v1401 = vmul.f32 %v1356, %v1345
      %v1402 = vmul.f32 %v1356, %v1346
      %v1403 = vmul.f32 %v1356, %v1347
      %v1404 = vmul.f32 %v1356, %v1348
      %v1405 = vmul.f32 %v1368, %v1340
      %v1406 = vmul.f32 %v1368, %v1341
      %v1407 = vmul.f32 %v1368, %v1342
      %v1408 = vmul.f32 %v1368, %v1343
      %v1409 = vmul.f32 %v1372, %v1340
      %v1410 = vmul.f32 %v1372, %v1341
      %v1411 = vmul.f32 %v1372, %v1342
      %v1412 = vmul.f32 %v1372, %v1343
      %v1413 = vadd.f32 %v1397, %v1405
      %v1414 = vadd.f32 %v1398, %v1406
      %v1415 = vadd.f32 %v1399, %v1407
      %v1416 = vadd.f32 %v1400, %v1408
      %v1417 = vadd.f32 %v1401, %v1409
      %v1418 = vadd.f32 %v1402, %v1410
      %v1419 = vadd.f32 %v1403, %v1411
      %v1420 = vadd.f32 %v1404, %v1412
      %v1421 = vadd.f32 %v1327, %v1413
      %v1422 = vadd.f32 %v1328, %v1414
      %v1423 = vadd.f32 %v1329, %v1415
      %v1424 = vadd.f32 %v1330, %v1416
      %v1425 = vadd.f32 %v1331, %v1417
      %v1426 = vadd.f32 %v1332, %v1418
      %v1427 = vadd.f32 %v1333, %v1419
      %v1428 = vadd.f32 %v1334, %v1420
      %v1429 = vld [vmem:[%s190 + $0xd] sm:$0x1]
      %v1430 = vld [vmem:[%s190 + $0x4d] sm:$0x1]
      %v1431 = vld [vmem:[%s190 + $0x2d] sm:$0x1]
      %v1432 = vld [vmem:[%s190 + $0x6d] sm:$0x1]
      %s1433 = scalar_lea.vmem %s196, 416
      %v1434 = vld [vmem:[%s1433] sm:$0xff]
      %v1435 = vld [vmem:[%s1433 + $0x8] sm:$0xff]
      %v1436 = vld [vmem:[%s1433 + $0x10] sm:$0xff]
      %v1437 = vld [vmem:[%s1433 + $0x18] sm:$0xff]
      %s1438 = scalar_lea.vmem %s196, 1440
      %v1439 = vld [vmem:[%s1438] sm:$0xff]
      %v1440 = vld [vmem:[%s1438 + $0x8] sm:$0xff]
      %v1441 = vld [vmem:[%s1438 + $0x10] sm:$0xff]
      %v1442 = vld [vmem:[%s1438 + $0x18] sm:$0xff]
      %v1443 = vlaneseq
      %v1444 = vshrl.u32 %v1443, 7
      %v1445 = vsub.s32 0, %v1444
      %v1446 = vrot.slane %v1429, %v1445
      %v1447 = vlaneseq
      %v1448 = vshrl.u32 %v1447, 7
      %v1449 = vsub.s32 0, %v1448
      %v1450 = vrot.slane %v1430, %v1449
      %v1451 = vmul.f32 %v1446, %v1434
      %v1452 = vmul.f32 %v1446, %v1435
      %v1453 = vmul.f32 %v1446, %v1436
      %v1454 = vmul.f32 %v1446, %v1437
      %v1455 = vmul.f32 %v1450, %v1434
      %v1456 = vmul.f32 %v1450, %v1435
      %v1457 = vmul.f32 %v1450, %v1436
      %v1458 = vmul.f32 %v1450, %v1437
      %v1459 = vlaneseq
      %v1460 = vshrl.u32 %v1459, 7
      %v1461 = vsub.s32 0, %v1460
      %v1462 = vrot.slane %v1431, %v1461
      %v1463 = vlaneseq
      %v1464 = vshrl.u32 %v1463, 7
      %v1465 = vsub.s32 0, %v1464
      %v1466 = vrot.slane %v1432, %v1465
      %v1467 = vmul.f32 %v1462, %v1439
      %v1468 = vmul.f32 %v1462, %v1440
      %v1469 = vmul.f32 %v1462, %v1441
      %v1470 = vmul.f32 %v1462, %v1442
      %v1471 = vmul.f32 %v1466, %v1439
      %v1472 = vmul.f32 %v1466, %v1440
      %v1473 = vmul.f32 %v1466, %v1441
      %v1474 = vmul.f32 %v1466, %v1442
      %v1475 = vsub.f32 %v1451, %v1467
      %v1476 = vsub.f32 %v1452, %v1468
      %v1477 = vsub.f32 %v1453, %v1469
      %v1478 = vsub.f32 %v1454, %v1470
      %v1479 = vsub.f32 %v1455, %v1471
      %v1480 = vsub.f32 %v1456, %v1472
      %v1481 = vsub.f32 %v1457, %v1473
      %v1482 = vsub.f32 %v1458, %v1474
      %v1483 = vadd.f32 %v1389, %v1475
      %v1484 = vadd.f32 %v1390, %v1476
      %v1485 = vadd.f32 %v1391, %v1477
      %v1486 = vadd.f32 %v1392, %v1478
      %v1487 = vadd.f32 %v1393, %v1479
      %v1488 = vadd.f32 %v1394, %v1480
      %v1489 = vadd.f32 %v1395, %v1481
      %v1490 = vadd.f32 %v1396, %v1482
      %v1491 = vmul.f32 %v1446, %v1439
      %v1492 = vmul.f32 %v1446, %v1440
      %v1493 = vmul.f32 %v1446, %v1441
      %v1494 = vmul.f32 %v1446, %v1442
      %v1495 = vmul.f32 %v1450, %v1439
      %v1496 = vmul.f32 %v1450, %v1440
      %v1497 = vmul.f32 %v1450, %v1441
      %v1498 = vmul.f32 %v1450, %v1442
      %v1499 = vmul.f32 %v1462, %v1434
      %v1500 = vmul.f32 %v1462, %v1435
      %v1501 = vmul.f32 %v1462, %v1436
      %v1502 = vmul.f32 %v1462, %v1437
      %v1503 = vmul.f32 %v1466, %v1434
      %v1504 = vmul.f32 %v1466, %v1435
      %v1505 = vmul.f32 %v1466, %v1436
      %v1506 = vmul.f32 %v1466, %v1437
      %v1507 = vadd.f32 %v1491, %v1499
      %v1508 = vadd.f32 %v1492, %v1500
      %v1509 = vadd.f32 %v1493, %v1501
      %v1510 = vadd.f32 %v1494, %v1502
      %v1511 = vadd.f32 %v1495, %v1503
      %v1512 = vadd.f32 %v1496, %v1504
      %v1513 = vadd.f32 %v1497, %v1505
      %v1514 = vadd.f32 %v1498, %v1506
      %v1515 = vadd.f32 %v1421, %v1507
      %v1516 = vadd.f32 %v1422, %v1508
      %v1517 = vadd.f32 %v1423, %v1509
      %v1518 = vadd.f32 %v1424, %v1510
      %v1519 = vadd.f32 %v1425, %v1511
      %v1520 = vadd.f32 %v1426, %v1512
      %v1521 = vadd.f32 %v1427, %v1513
      %v1522 = vadd.f32 %v1428, %v1514
      %v1523 = vld [vmem:[%s190 + $0xe] sm:$0x1]
      %v1524 = vld [vmem:[%s190 + $0x4e] sm:$0x1]
      %v1525 = vld [vmem:[%s190 + $0x2e] sm:$0x1]
      %v1526 = vld [vmem:[%s190 + $0x6e] sm:$0x1]
      %s1527 = scalar_lea.vmem %s196, 448
      %v1528 = vld [vmem:[%s1527] sm:$0xff]
      %v1529 = vld [vmem:[%s1527 + $0x8] sm:$0xff]
      %v1530 = vld [vmem:[%s1527 + $0x10] sm:$0xff]
      %v1531 = vld [vmem:[%s1527 + $0x18] sm:$0xff]
      %s1532 = scalar_lea.vmem %s196, 1472
      %v1533 = vld [vmem:[%s1532] sm:$0xff]
      %v1534 = vld [vmem:[%s1532 + $0x8] sm:$0xff]
      %v1535 = vld [vmem:[%s1532 + $0x10] sm:$0xff]
      %v1536 = vld [vmem:[%s1532 + $0x18] sm:$0xff]
      %v1537 = vlaneseq
      %v1538 = vshrl.u32 %v1537, 7
      %v1539 = vsub.s32 0, %v1538
      %v1540 = vrot.slane %v1523, %v1539
      %v1541 = vlaneseq
      %v1542 = vshrl.u32 %v1541, 7
      %v1543 = vsub.s32 0, %v1542
      %v1544 = vrot.slane %v1524, %v1543
      %v1545 = vmul.f32 %v1540, %v1528
      %v1546 = vmul.f32 %v1540, %v1529
      %v1547 = vmul.f32 %v1540, %v1530
      %v1548 = vmul.f32 %v1540, %v1531
      %v1549 = vmul.f32 %v1544, %v1528
      %v1550 = vmul.f32 %v1544, %v1529
      %v1551 = vmul.f32 %v1544, %v1530
      %v1552 = vmul.f32 %v1544, %v1531
      %v1553 = vlaneseq
      %v1554 = vshrl.u32 %v1553, 7
      %v1555 = vsub.s32 0, %v1554
      %v1556 = vrot.slane %v1525, %v1555
      %v1557 = vlaneseq
      %v1558 = vshrl.u32 %v1557, 7
      %v1559 = vsub.s32 0, %v1558
      %v1560 = vrot.slane %v1526, %v1559
      %v1561 = vmul.f32 %v1556, %v1533
      %v1562 = vmul.f32 %v1556, %v1534
      %v1563 = vmul.f32 %v1556, %v1535
      %v1564 = vmul.f32 %v1556, %v1536
      %v1565 = vmul.f32 %v1560, %v1533
      %v1566 = vmul.f32 %v1560, %v1534
      %v1567 = vmul.f32 %v1560, %v1535
      %v1568 = vmul.f32 %v1560, %v1536
      %v1569 = vsub.f32 %v1545, %v1561
      %v1570 = vsub.f32 %v1546, %v1562
      %v1571 = vsub.f32 %v1547, %v1563
      %v1572 = vsub.f32 %v1548, %v1564
      %v1573 = vsub.f32 %v1549, %v1565
      %v1574 = vsub.f32 %v1550, %v1566
      %v1575 = vsub.f32 %v1551, %v1567
      %v1576 = vsub.f32 %v1552, %v1568
      %v1577 = vadd.f32 %v1483, %v1569
      %v1578 = vadd.f32 %v1484, %v1570
      %v1579 = vadd.f32 %v1485, %v1571
      %v1580 = vadd.f32 %v1486, %v1572
      %v1581 = vadd.f32 %v1487, %v1573
      %v1582 = vadd.f32 %v1488, %v1574
      %v1583 = vadd.f32 %v1489, %v1575
      %v1584 = vadd.f32 %v1490, %v1576
      %v1585 = vmul.f32 %v1540, %v1533
      %v1586 = vmul.f32 %v1540, %v1534
      %v1587 = vmul.f32 %v1540, %v1535
      %v1588 = vmul.f32 %v1540, %v1536
      %v1589 = vmul.f32 %v1544, %v1533
      %v1590 = vmul.f32 %v1544, %v1534
      %v1591 = vmul.f32 %v1544, %v1535
      %v1592 = vmul.f32 %v1544, %v1536
      %v1593 = vmul.f32 %v1556, %v1528
      %v1594 = vmul.f32 %v1556, %v1529
      %v1595 = vmul.f32 %v1556, %v1530
      %v1596 = vmul.f32 %v1556, %v1531
      %v1597 = vmul.f32 %v1560, %v1528
      %v1598 = vmul.f32 %v1560, %v1529
      %v1599 = vmul.f32 %v1560, %v1530
      %v1600 = vmul.f32 %v1560, %v1531
      %v1601 = vadd.f32 %v1585, %v1593
      %v1602 = vadd.f32 %v1586, %v1594
      %v1603 = vadd.f32 %v1587, %v1595
      %v1604 = vadd.f32 %v1588, %v1596
      %v1605 = vadd.f32 %v1589, %v1597
      %v1606 = vadd.f32 %v1590, %v1598
      %v1607 = vadd.f32 %v1591, %v1599
      %v1608 = vadd.f32 %v1592, %v1600
      %v1609 = vadd.f32 %v1515, %v1601
      %v1610 = vadd.f32 %v1516, %v1602
      %v1611 = vadd.f32 %v1517, %v1603
      %v1612 = vadd.f32 %v1518, %v1604
      %v1613 = vadd.f32 %v1519, %v1605
      %v1614 = vadd.f32 %v1520, %v1606
      %v1615 = vadd.f32 %v1521, %v1607
      %v1616 = vadd.f32 %v1522, %v1608
      %v1617 = vld [vmem:[%s190 + $0xf] sm:$0x1]
      %v1618 = vld [vmem:[%s190 + $0x4f] sm:$0x1]
      %v1619 = vld [vmem:[%s190 + $0x2f] sm:$0x1]
      %v1620 = vld [vmem:[%s190 + $0x6f] sm:$0x1]
      %s1621 = scalar_lea.vmem %s196, 480
      %v1622 = vld [vmem:[%s1621] sm:$0xff]
      %v1623 = vld [vmem:[%s1621 + $0x8] sm:$0xff]
      %v1624 = vld [vmem:[%s1621 + $0x10] sm:$0xff]
      %v1625 = vld [vmem:[%s1621 + $0x18] sm:$0xff]
      %s1626 = scalar_lea.vmem %s196, 1504
      %v1627 = vld [vmem:[%s1626] sm:$0xff]
      %v1628 = vld [vmem:[%s1626 + $0x8] sm:$0xff]
      %v1629 = vld [vmem:[%s1626 + $0x10] sm:$0xff]
      %v1630 = vld [vmem:[%s1626 + $0x18] sm:$0xff]
      %v1631 = vlaneseq
      %v1632 = vshrl.u32 %v1631, 7
      %v1633 = vsub.s32 0, %v1632
      %v1634 = vrot.slane %v1617, %v1633
      %v1635 = vlaneseq
      %v1636 = vshrl.u32 %v1635, 7
      %v1637 = vsub.s32 0, %v1636
      %v1638 = vrot.slane %v1618, %v1637
      %v1639 = vmul.f32 %v1634, %v1622
      %v1640 = vmul.f32 %v1634, %v1623
      %v1641 = vmul.f32 %v1634, %v1624
      %v1642 = vmul.f32 %v1634, %v1625
      %v1643 = vmul.f32 %v1638, %v1622
      %v1644 = vmul.f32 %v1638, %v1623
      %v1645 = vmul.f32 %v1638, %v1624
      %v1646 = vmul.f32 %v1638, %v1625
      %v1647 = vlaneseq
      %v1648 = vshrl.u32 %v1647, 7
      %v1649 = vsub.s32 0, %v1648
      %v1650 = vrot.slane %v1619, %v1649
      %v1651 = vlaneseq
      %v1652 = vshrl.u32 %v1651, 7
      %v1653 = vsub.s32 0, %v1652
      %v1654 = vrot.slane %v1620, %v1653
      %v1655 = vmul.f32 %v1650, %v1627
      %v1656 = vmul.f32 %v1650, %v1628
      %v1657 = vmul.f32 %v1650, %v1629
      %v1658 = vmul.f32 %v1650, %v1630
      %v1659 = vmul.f32 %v1654, %v1627
      %v1660 = vmul.f32 %v1654, %v1628
      %v1661 = vmul.f32 %v1654, %v1629
      %v1662 = vmul.f32 %v1654, %v1630
      %v1663 = vsub.f32 %v1639, %v1655
      %v1664 = vsub.f32 %v1640, %v1656
      %v1665 = vsub.f32 %v1641, %v1657
      %v1666 = vsub.f32 %v1642, %v1658
      %v1667 = vsub.f32 %v1643, %v1659
      %v1668 = vsub.f32 %v1644, %v1660
      %v1669 = vsub.f32 %v1645, %v1661
      %v1670 = vsub.f32 %v1646, %v1662
      %v1671 = vadd.f32 %v1577, %v1663
      %v1672 = vadd.f32 %v1578, %v1664
      %v1673 = vadd.f32 %v1579, %v1665
      %v1674 = vadd.f32 %v1580, %v1666
      %v1675 = vadd.f32 %v1581, %v1667
      %v1676 = vadd.f32 %v1582, %v1668
      %v1677 = vadd.f32 %v1583, %v1669
      %v1678 = vadd.f32 %v1584, %v1670
      %v1679 = vmul.f32 %v1634, %v1627
      %v1680 = vmul.f32 %v1634, %v1628
      %v1681 = vmul.f32 %v1634, %v1629
      %v1682 = vmul.f32 %v1634, %v1630
      %v1683 = vmul.f32 %v1638, %v1627
      %v1684 = vmul.f32 %v1638, %v1628
      %v1685 = vmul.f32 %v1638, %v1629
      %v1686 = vmul.f32 %v1638, %v1630
      %v1687 = vmul.f32 %v1650, %v1622
      %v1688 = vmul.f32 %v1650, %v1623
      %v1689 = vmul.f32 %v1650, %v1624
      %v1690 = vmul.f32 %v1650, %v1625
      %v1691 = vmul.f32 %v1654, %v1622
      %v1692 = vmul.f32 %v1654, %v1623
      %v1693 = vmul.f32 %v1654, %v1624
      %v1694 = vmul.f32 %v1654, %v1625
      %v1695 = vadd.f32 %v1679, %v1687
      %v1696 = vadd.f32 %v1680, %v1688
      %v1697 = vadd.f32 %v1681, %v1689
      %v1698 = vadd.f32 %v1682, %v1690
      %v1699 = vadd.f32 %v1683, %v1691
      %v1700 = vadd.f32 %v1684, %v1692
      %v1701 = vadd.f32 %v1685, %v1693
      %v1702 = vadd.f32 %v1686, %v1694
      %v1703 = vadd.f32 %v1609, %v1695
      %v1704 = vadd.f32 %v1610, %v1696
      %v1705 = vadd.f32 %v1611, %v1697
      %v1706 = vadd.f32 %v1612, %v1698
      %v1707 = vadd.f32 %v1613, %v1699
      %v1708 = vadd.f32 %v1614, %v1700
      %v1709 = vadd.f32 %v1615, %v1701
      %v1710 = vadd.f32 %v1616, %v1702
      %v1711 = vld [vmem:[%s190 + $0x10] sm:$0x1]
      %v1712 = vld [vmem:[%s190 + $0x50] sm:$0x1]
      %v1713 = vld [vmem:[%s190 + $0x30] sm:$0x1]
      %v1714 = vld [vmem:[%s190 + $0x70] sm:$0x1]
      %s1715 = scalar_lea.vmem %s196, 512
      %v1716 = vld [vmem:[%s1715] sm:$0xff]
      %v1717 = vld [vmem:[%s1715 + $0x8] sm:$0xff]
      %v1718 = vld [vmem:[%s1715 + $0x10] sm:$0xff]
      %v1719 = vld [vmem:[%s1715 + $0x18] sm:$0xff]
      %s1720 = scalar_lea.vmem %s196, 1536
      %v1721 = vld [vmem:[%s1720] sm:$0xff]
      %v1722 = vld [vmem:[%s1720 + $0x8] sm:$0xff]
      %v1723 = vld [vmem:[%s1720 + $0x10] sm:$0xff]
      %v1724 = vld [vmem:[%s1720 + $0x18] sm:$0xff]
      %v1725 = vlaneseq
      %v1726 = vshrl.u32 %v1725, 7
      %v1727 = vsub.s32 0, %v1726
      %v1728 = vrot.slane %v1711, %v1727
      %v1729 = vlaneseq
      %v1730 = vshrl.u32 %v1729, 7
      %v1731 = vsub.s32 0, %v1730
      %v1732 = vrot.slane %v1712, %v1731
      %v1733 = vmul.f32 %v1728, %v1716
      %v1734 = vmul.f32 %v1728, %v1717
      %v1735 = vmul.f32 %v1728, %v1718
      %v1736 = vmul.f32 %v1728, %v1719
      %v1737 = vmul.f32 %v1732, %v1716
      %v1738 = vmul.f32 %v1732, %v1717
      %v1739 = vmul.f32 %v1732, %v1718
      %v1740 = vmul.f32 %v1732, %v1719
      %v1741 = vlaneseq
      %v1742 = vshrl.u32 %v1741, 7
      %v1743 = vsub.s32 0, %v1742
      %v1744 = vrot.slane %v1713, %v1743
      %v1745 = vlaneseq
      %v1746 = vshrl.u32 %v1745, 7
      %v1747 = vsub.s32 0, %v1746
      %v1748 = vrot.slane %v1714, %v1747
      %v1749 = vmul.f32 %v1744, %v1721
      %v1750 = vmul.f32 %v1744, %v1722
      %v1751 = vmul.f32 %v1744, %v1723
      %v1752 = vmul.f32 %v1744, %v1724
      %v1753 = vmul.f32 %v1748, %v1721
      %v1754 = vmul.f32 %v1748, %v1722
      %v1755 = vmul.f32 %v1748, %v1723
      %v1756 = vmul.f32 %v1748, %v1724
      %v1757 = vsub.f32 %v1733, %v1749
      %v1758 = vsub.f32 %v1734, %v1750
      %v1759 = vsub.f32 %v1735, %v1751
      %v1760 = vsub.f32 %v1736, %v1752
      %v1761 = vsub.f32 %v1737, %v1753
      %v1762 = vsub.f32 %v1738, %v1754
      %v1763 = vsub.f32 %v1739, %v1755
      %v1764 = vsub.f32 %v1740, %v1756
      %v1765 = vadd.f32 %v1671, %v1757
      %v1766 = vadd.f32 %v1672, %v1758
      %v1767 = vadd.f32 %v1673, %v1759
      %v1768 = vadd.f32 %v1674, %v1760
      %v1769 = vadd.f32 %v1675, %v1761
      %v1770 = vadd.f32 %v1676, %v1762
      %v1771 = vadd.f32 %v1677, %v1763
      %v1772 = vadd.f32 %v1678, %v1764
      %v1773 = vmul.f32 %v1728, %v1721
      %v1774 = vmul.f32 %v1728, %v1722
      %v1775 = vmul.f32 %v1728, %v1723
      %v1776 = vmul.f32 %v1728, %v1724
      %v1777 = vmul.f32 %v1732, %v1721
      %v1778 = vmul.f32 %v1732, %v1722
      %v1779 = vmul.f32 %v1732, %v1723
      %v1780 = vmul.f32 %v1732, %v1724
      %v1781 = vmul.f32 %v1744, %v1716
      %v1782 = vmul.f32 %v1744, %v1717
      %v1783 = vmul.f32 %v1744, %v1718
      %v1784 = vmul.f32 %v1744, %v1719
      %v1785 = vmul.f32 %v1748, %v1716
      %v1786 = vmul.f32 %v1748, %v1717
      %v1787 = vmul.f32 %v1748, %v1718
      %v1788 = vmul.f32 %v1748, %v1719
      %v1789 = vadd.f32 %v1773, %v1781
      %v1790 = vadd.f32 %v1774, %v1782
      %v1791 = vadd.f32 %v1775, %v1783
      %v1792 = vadd.f32 %v1776, %v1784
      %v1793 = vadd.f32 %v1777, %v1785
      %v1794 = vadd.f32 %v1778, %v1786
      %v1795 = vadd.f32 %v1779, %v1787
      %v1796 = vadd.f32 %v1780, %v1788
      %v1797 = vadd.f32 %v1703, %v1789
      %v1798 = vadd.f32 %v1704, %v1790
      %v1799 = vadd.f32 %v1705, %v1791
      %v1800 = vadd.f32 %v1706, %v1792
      %v1801 = vadd.f32 %v1707, %v1793
      %v1802 = vadd.f32 %v1708, %v1794
      %v1803 = vadd.f32 %v1709, %v1795
      %v1804 = vadd.f32 %v1710, %v1796
      %v1805 = vld [vmem:[%s190 + $0x11] sm:$0x1]
      %v1806 = vld [vmem:[%s190 + $0x51] sm:$0x1]
      %v1807 = vld [vmem:[%s190 + $0x31] sm:$0x1]
      %v1808 = vld [vmem:[%s190 + $0x71] sm:$0x1]
      %s1809 = scalar_lea.vmem %s196, 544
      %v1810 = vld [vmem:[%s1809] sm:$0xff]
      %v1811 = vld [vmem:[%s1809 + $0x8] sm:$0xff]
      %v1812 = vld [vmem:[%s1809 + $0x10] sm:$0xff]
      %v1813 = vld [vmem:[%s1809 + $0x18] sm:$0xff]
      %s1814 = scalar_lea.vmem %s196, 1568
      %v1815 = vld [vmem:[%s1814] sm:$0xff]
      %v1816 = vld [vmem:[%s1814 + $0x8] sm:$0xff]
      %v1817 = vld [vmem:[%s1814 + $0x10] sm:$0xff]
      %v1818 = vld [vmem:[%s1814 + $0x18] sm:$0xff]
      %v1819 = vlaneseq
      %v1820 = vshrl.u32 %v1819, 7
      %v1821 = vsub.s32 0, %v1820
      %v1822 = vrot.slane %v1805, %v1821
      %v1823 = vlaneseq
      %v1824 = vshrl.u32 %v1823, 7
      %v1825 = vsub.s32 0, %v1824
      %v1826 = vrot.slane %v1806, %v1825
      %v1827 = vmul.f32 %v1822, %v1810
      %v1828 = vmul.f32 %v1822, %v1811
      %v1829 = vmul.f32 %v1822, %v1812
      %v1830 = vmul.f32 %v1822, %v1813
      %v1831 = vmul.f32 %v1826, %v1810
      %v1832 = vmul.f32 %v1826, %v1811
      %v1833 = vmul.f32 %v1826, %v1812
      %v1834 = vmul.f32 %v1826, %v1813
      %v1835 = vlaneseq
      %v1836 = vshrl.u32 %v1835, 7
      %v1837 = vsub.s32 0, %v1836
      %v1838 = vrot.slane %v1807, %v1837
      %v1839 = vlaneseq
      %v1840 = vshrl.u32 %v1839, 7
      %v1841 = vsub.s32 0, %v1840
      %v1842 = vrot.slane %v1808, %v1841
      %v1843 = vmul.f32 %v1838, %v1815
      %v1844 = vmul.f32 %v1838, %v1816
      %v1845 = vmul.f32 %v1838, %v1817
      %v1846 = vmul.f32 %v1838, %v1818
      %v1847 = vmul.f32 %v1842, %v1815
      %v1848 = vmul.f32 %v1842, %v1816
      %v1849 = vmul.f32 %v1842, %v1817
      %v1850 = vmul.f32 %v1842, %v1818
      %v1851 = vsub.f32 %v1827, %v1843
      %v1852 = vsub.f32 %v1828, %v1844
      %v1853 = vsub.f32 %v1829, %v1845
      %v1854 = vsub.f32 %v1830, %v1846
      %v1855 = vsub.f32 %v1831, %v1847
      %v1856 = vsub.f32 %v1832, %v1848
      %v1857 = vsub.f32 %v1833, %v1849
      %v1858 = vsub.f32 %v1834, %v1850
      %v1859 = vadd.f32 %v1765, %v1851
      %v1860 = vadd.f32 %v1766, %v1852
      %v1861 = vadd.f32 %v1767, %v1853
      %v1862 = vadd.f32 %v1768, %v1854
      %v1863 = vadd.f32 %v1769, %v1855
      %v1864 = vadd.f32 %v1770, %v1856
      %v1865 = vadd.f32 %v1771, %v1857
      %v1866 = vadd.f32 %v1772, %v1858
      %v1867 = vmul.f32 %v1822, %v1815
      %v1868 = vmul.f32 %v1822, %v1816
      %v1869 = vmul.f32 %v1822, %v1817
      %v1870 = vmul.f32 %v1822, %v1818
      %v1871 = vmul.f32 %v1826, %v1815
      %v1872 = vmul.f32 %v1826, %v1816
      %v1873 = vmul.f32 %v1826, %v1817
      %v1874 = vmul.f32 %v1826, %v1818
      %v1875 = vmul.f32 %v1838, %v1810
      %v1876 = vmul.f32 %v1838, %v1811
      %v1877 = vmul.f32 %v1838, %v1812
      %v1878 = vmul.f32 %v1838, %v1813
      %v1879 = vmul.f32 %v1842, %v1810
      %v1880 = vmul.f32 %v1842, %v1811
      %v1881 = vmul.f32 %v1842, %v1812
      %v1882 = vmul.f32 %v1842, %v1813
      %v1883 = vadd.f32 %v1867, %v1875
      %v1884 = vadd.f32 %v1868, %v1876
      %v1885 = vadd.f32 %v1869, %v1877
      %v1886 = vadd.f32 %v1870, %v1878
      %v1887 = vadd.f32 %v1871, %v1879
      %v1888 = vadd.f32 %v1872, %v1880
      %v1889 = vadd.f32 %v1873, %v1881
      %v1890 = vadd.f32 %v1874, %v1882
      %v1891 = vadd.f32 %v1797, %v1883
      %v1892 = vadd.f32 %v1798, %v1884
      %v1893 = vadd.f32 %v1799, %v1885
      %v1894 = vadd.f32 %v1800, %v1886
      %v1895 = vadd.f32 %v1801, %v1887
      %v1896 = vadd.f32 %v1802, %v1888
      %v1897 = vadd.f32 %v1803, %v1889
      %v1898 = vadd.f32 %v1804, %v1890
      %v1899 = vld [vmem:[%s190 + $0x12] sm:$0x1]
      %v1900 = vld [vmem:[%s190 + $0x52] sm:$0x1]
      %v1901 = vld [vmem:[%s190 + $0x32] sm:$0x1]
      %v1902 = vld [vmem:[%s190 + $0x72] sm:$0x1]
      %s1903 = scalar_lea.vmem %s196, 576
      %v1904 = vld [vmem:[%s1903] sm:$0xff]
      %v1905 = vld [vmem:[%s1903 + $0x8] sm:$0xff]
      %v1906 = vld [vmem:[%s1903 + $0x10] sm:$0xff]
      %v1907 = vld [vmem:[%s1903 + $0x18] sm:$0xff]
      %s1908 = scalar_lea.vmem %s196, 1600
      %v1909 = vld [vmem:[%s1908] sm:$0xff]
      %v1910 = vld [vmem:[%s1908 + $0x8] sm:$0xff]
      %v1911 = vld [vmem:[%s1908 + $0x10] sm:$0xff]
      %v1912 = vld [vmem:[%s1908 + $0x18] sm:$0xff]
      %v1913 = vlaneseq
      %v1914 = vshrl.u32 %v1913, 7
      %v1915 = vsub.s32 0, %v1914
      %v1916 = vrot.slane %v1899, %v1915
      %v1917 = vlaneseq
      %v1918 = vshrl.u32 %v1917, 7
      %v1919 = vsub.s32 0, %v1918
      %v1920 = vrot.slane %v1900, %v1919
      %v1921 = vmul.f32 %v1916, %v1904
      %v1922 = vmul.f32 %v1916, %v1905
      %v1923 = vmul.f32 %v1916, %v1906
      %v1924 = vmul.f32 %v1916, %v1907
      %v1925 = vmul.f32 %v1920, %v1904
      %v1926 = vmul.f32 %v1920, %v1905
      %v1927 = vmul.f32 %v1920, %v1906
      %v1928 = vmul.f32 %v1920, %v1907
      %v1929 = vlaneseq
      %v1930 = vshrl.u32 %v1929, 7
      %v1931 = vsub.s32 0, %v1930
      %v1932 = vrot.slane %v1901, %v1931
      %v1933 = vlaneseq
      %v1934 = vshrl.u32 %v1933, 7
      %v1935 = vsub.s32 0, %v1934
      %v1936 = vrot.slane %v1902, %v1935
      %v1937 = vmul.f32 %v1932, %v1909
      %v1938 = vmul.f32 %v1932, %v1910
      %v1939 = vmul.f32 %v1932, %v1911
      %v1940 = vmul.f32 %v1932, %v1912
      %v1941 = vmul.f32 %v1936, %v1909
      %v1942 = vmul.f32 %v1936, %v1910
      %v1943 = vmul.f32 %v1936, %v1911
      %v1944 = vmul.f32 %v1936, %v1912
      %v1945 = vsub.f32 %v1921, %v1937
      %v1946 = vsub.f32 %v1922, %v1938
      %v1947 = vsub.f32 %v1923, %v1939
      %v1948 = vsub.f32 %v1924, %v1940
      %v1949 = vsub.f32 %v1925, %v1941
      %v1950 = vsub.f32 %v1926, %v1942
      %v1951 = vsub.f32 %v1927, %v1943
      %v1952 = vsub.f32 %v1928, %v1944
      %v1953 = vadd.f32 %v1859, %v1945
      %v1954 = vadd.f32 %v1860, %v1946
      %v1955 = vadd.f32 %v1861, %v1947
      %v1956 = vadd.f32 %v1862, %v1948
      %v1957 = vadd.f32 %v1863, %v1949
      %v1958 = vadd.f32 %v1864, %v1950
      %v1959 = vadd.f32 %v1865, %v1951
      %v1960 = vadd.f32 %v1866, %v1952
      %v1961 = vmul.f32 %v1916, %v1909
      %v1962 = vmul.f32 %v1916, %v1910
      %v1963 = vmul.f32 %v1916, %v1911
      %v1964 = vmul.f32 %v1916, %v1912
      %v1965 = vmul.f32 %v1920, %v1909
      %v1966 = vmul.f32 %v1920, %v1910
      %v1967 = vmul.f32 %v1920, %v1911
      %v1968 = vmul.f32 %v1920, %v1912
      %v1969 = vmul.f32 %v1932, %v1904
      %v1970 = vmul.f32 %v1932, %v1905
      %v1971 = vmul.f32 %v1932, %v1906
      %v1972 = vmul.f32 %v1932, %v1907
      %v1973 = vmul.f32 %v1936, %v1904
      %v1974 = vmul.f32 %v1936, %v1905
      %v1975 = vmul.f32 %v1936, %v1906
      %v1976 = vmul.f32 %v1936, %v1907
      %v1977 = vadd.f32 %v1961, %v1969
      %v1978 = vadd.f32 %v1962, %v1970
      %v1979 = vadd.f32 %v1963, %v1971
      %v1980 = vadd.f32 %v1964, %v1972
      %v1981 = vadd.f32 %v1965, %v1973
      %v1982 = vadd.f32 %v1966, %v1974
      %v1983 = vadd.f32 %v1967, %v1975
      %v1984 = vadd.f32 %v1968, %v1976
      %v1985 = vadd.f32 %v1891, %v1977
      %v1986 = vadd.f32 %v1892, %v1978
      %v1987 = vadd.f32 %v1893, %v1979
      %v1988 = vadd.f32 %v1894, %v1980
      %v1989 = vadd.f32 %v1895, %v1981
      %v1990 = vadd.f32 %v1896, %v1982
      %v1991 = vadd.f32 %v1897, %v1983
      %v1992 = vadd.f32 %v1898, %v1984
      %v1993 = vld [vmem:[%s190 + $0x13] sm:$0x1]
      %v1994 = vld [vmem:[%s190 + $0x53] sm:$0x1]
      %v1995 = vld [vmem:[%s190 + $0x33] sm:$0x1]
      %v1996 = vld [vmem:[%s190 + $0x73] sm:$0x1]
      %s1997 = scalar_lea.vmem %s196, 608
      %v1998 = vld [vmem:[%s1997] sm:$0xff]
      %v1999 = vld [vmem:[%s1997 + $0x8] sm:$0xff]
      %v2000 = vld [vmem:[%s1997 + $0x10] sm:$0xff]
      %v2001 = vld [vmem:[%s1997 + $0x18] sm:$0xff]
      %s2002 = scalar_lea.vmem %s196, 1632
      %v2003 = vld [vmem:[%s2002] sm:$0xff]
      %v2004 = vld [vmem:[%s2002 + $0x8] sm:$0xff]
      %v2005 = vld [vmem:[%s2002 + $0x10] sm:$0xff]
      %v2006 = vld [vmem:[%s2002 + $0x18] sm:$0xff]
      %v2007 = vlaneseq
      %v2008 = vshrl.u32 %v2007, 7
      %v2009 = vsub.s32 0, %v2008
      %v2010 = vrot.slane %v1993, %v2009
      %v2011 = vlaneseq
      %v2012 = vshrl.u32 %v2011, 7
      %v2013 = vsub.s32 0, %v2012
      %v2014 = vrot.slane %v1994, %v2013
      %v2015 = vmul.f32 %v2010, %v1998
      %v2016 = vmul.f32 %v2010, %v1999
      %v2017 = vmul.f32 %v2010, %v2000
      %v2018 = vmul.f32 %v2010, %v2001
      %v2019 = vmul.f32 %v2014, %v1998
      %v2020 = vmul.f32 %v2014, %v1999
      %v2021 = vmul.f32 %v2014, %v2000
      %v2022 = vmul.f32 %v2014, %v2001
      %v2023 = vlaneseq
      %v2024 = vshrl.u32 %v2023, 7
      %v2025 = vsub.s32 0, %v2024
      %v2026 = vrot.slane %v1995, %v2025
      %v2027 = vlaneseq
      %v2028 = vshrl.u32 %v2027, 7
      %v2029 = vsub.s32 0, %v2028
      %v2030 = vrot.slane %v1996, %v2029
      %v2031 = vmul.f32 %v2026, %v2003
      %v2032 = vmul.f32 %v2026, %v2004
      %v2033 = vmul.f32 %v2026, %v2005
      %v2034 = vmul.f32 %v2026, %v2006
      %v2035 = vmul.f32 %v2030, %v2003
      %v2036 = vmul.f32 %v2030, %v2004
      %v2037 = vmul.f32 %v2030, %v2005
      %v2038 = vmul.f32 %v2030, %v2006
      %v2039 = vsub.f32 %v2015, %v2031
      %v2040 = vsub.f32 %v2016, %v2032
      %v2041 = vsub.f32 %v2017, %v2033
      %v2042 = vsub.f32 %v2018, %v2034
      %v2043 = vsub.f32 %v2019, %v2035
      %v2044 = vsub.f32 %v2020, %v2036
      %v2045 = vsub.f32 %v2021, %v2037
      %v2046 = vsub.f32 %v2022, %v2038
      %v2047 = vadd.f32 %v1953, %v2039
      %v2048 = vadd.f32 %v1954, %v2040
      %v2049 = vadd.f32 %v1955, %v2041
      %v2050 = vadd.f32 %v1956, %v2042
      %v2051 = vadd.f32 %v1957, %v2043
      %v2052 = vadd.f32 %v1958, %v2044
      %v2053 = vadd.f32 %v1959, %v2045
      %v2054 = vadd.f32 %v1960, %v2046
      %v2055 = vmul.f32 %v2010, %v2003
      %v2056 = vmul.f32 %v2010, %v2004
      %v2057 = vmul.f32 %v2010, %v2005
      %v2058 = vmul.f32 %v2010, %v2006
      %v2059 = vmul.f32 %v2014, %v2003
      %v2060 = vmul.f32 %v2014, %v2004
      %v2061 = vmul.f32 %v2014, %v2005
      %v2062 = vmul.f32 %v2014, %v2006
      %v2063 = vmul.f32 %v2026, %v1998
      %v2064 = vmul.f32 %v2026, %v1999
      %v2065 = vmul.f32 %v2026, %v2000
      %v2066 = vmul.f32 %v2026, %v2001
      %v2067 = vmul.f32 %v2030, %v1998
      %v2068 = vmul.f32 %v2030, %v1999
      %v2069 = vmul.f32 %v2030, %v2000
      %v2070 = vmul.f32 %v2030, %v2001
      %v2071 = vadd.f32 %v2055, %v2063
      %v2072 = vadd.f32 %v2056, %v2064
      %v2073 = vadd.f32 %v2057, %v2065
      %v2074 = vadd.f32 %v2058, %v2066
      %v2075 = vadd.f32 %v2059, %v2067
      %v2076 = vadd.f32 %v2060, %v2068
      %v2077 = vadd.f32 %v2061, %v2069
      %v2078 = vadd.f32 %v2062, %v2070
      %v2079 = vadd.f32 %v1985, %v2071
      %v2080 = vadd.f32 %v1986, %v2072
      %v2081 = vadd.f32 %v1987, %v2073
      %v2082 = vadd.f32 %v1988, %v2074
      %v2083 = vadd.f32 %v1989, %v2075
      %v2084 = vadd.f32 %v1990, %v2076
      %v2085 = vadd.f32 %v1991, %v2077
      %v2086 = vadd.f32 %v1992, %v2078
      %v2087 = vld [vmem:[%s190 + $0x14] sm:$0x1]
      %v2088 = vld [vmem:[%s190 + $0x54] sm:$0x1]
      %v2089 = vld [vmem:[%s190 + $0x34] sm:$0x1]
      %v2090 = vld [vmem:[%s190 + $0x74] sm:$0x1]
      %s2091 = scalar_lea.vmem %s196, 640
      %v2092 = vld [vmem:[%s2091] sm:$0xff]
      %v2093 = vld [vmem:[%s2091 + $0x8] sm:$0xff]
      %v2094 = vld [vmem:[%s2091 + $0x10] sm:$0xff]
      %v2095 = vld [vmem:[%s2091 + $0x18] sm:$0xff]
      %s2096 = scalar_lea.vmem %s196, 1664
      %v2097 = vld [vmem:[%s2096] sm:$0xff]
      %v2098 = vld [vmem:[%s2096 + $0x8] sm:$0xff]
      %v2099 = vld [vmem:[%s2096 + $0x10] sm:$0xff]
      %v2100 = vld [vmem:[%s2096 + $0x18] sm:$0xff]
      %v2101 = vlaneseq
      %v2102 = vshrl.u32 %v2101, 7
      %v2103 = vsub.s32 0, %v2102
      %v2104 = vrot.slane %v2087, %v2103
      %v2105 = vlaneseq
      %v2106 = vshrl.u32 %v2105, 7
      %v2107 = vsub.s32 0, %v2106
      %v2108 = vrot.slane %v2088, %v2107
      %v2109 = vmul.f32 %v2104, %v2092
      %v2110 = vmul.f32 %v2104, %v2093
      %v2111 = vmul.f32 %v2104, %v2094
      %v2112 = vmul.f32 %v2104, %v2095
      %v2113 = vmul.f32 %v2108, %v2092
      %v2114 = vmul.f32 %v2108, %v2093
      %v2115 = vmul.f32 %v2108, %v2094
      %v2116 = vmul.f32 %v2108, %v2095
      %v2117 = vlaneseq
      %v2118 = vshrl.u32 %v2117, 7
      %v2119 = vsub.s32 0, %v2118
      %v2120 = vrot.slane %v2089, %v2119
      %v2121 = vlaneseq
      %v2122 = vshrl.u32 %v2121, 7
      %v2123 = vsub.s32 0, %v2122
      %v2124 = vrot.slane %v2090, %v2123
      %v2125 = vmul.f32 %v2120, %v2097
      %v2126 = vmul.f32 %v2120, %v2098
      %v2127 = vmul.f32 %v2120, %v2099
      %v2128 = vmul.f32 %v2120, %v2100
      %v2129 = vmul.f32 %v2124, %v2097
      %v2130 = vmul.f32 %v2124, %v2098
      %v2131 = vmul.f32 %v2124, %v2099
      %v2132 = vmul.f32 %v2124, %v2100
      %v2133 = vsub.f32 %v2109, %v2125
      %v2134 = vsub.f32 %v2110, %v2126
      %v2135 = vsub.f32 %v2111, %v2127
      %v2136 = vsub.f32 %v2112, %v2128
      %v2137 = vsub.f32 %v2113, %v2129
      %v2138 = vsub.f32 %v2114, %v2130
      %v2139 = vsub.f32 %v2115, %v2131
      %v2140 = vsub.f32 %v2116, %v2132
      %v2141 = vadd.f32 %v2047, %v2133
      %v2142 = vadd.f32 %v2048, %v2134
      %v2143 = vadd.f32 %v2049, %v2135
      %v2144 = vadd.f32 %v2050, %v2136
      %v2145 = vadd.f32 %v2051, %v2137
      %v2146 = vadd.f32 %v2052, %v2138
      %v2147 = vadd.f32 %v2053, %v2139
      %v2148 = vadd.f32 %v2054, %v2140
      %v2149 = vmul.f32 %v2104, %v2097
      %v2150 = vmul.f32 %v2104, %v2098
      %v2151 = vmul.f32 %v2104, %v2099
      %v2152 = vmul.f32 %v2104, %v2100
      %v2153 = vmul.f32 %v2108, %v2097
      %v2154 = vmul.f32 %v2108, %v2098
      %v2155 = vmul.f32 %v2108, %v2099
      %v2156 = vmul.f32 %v2108, %v2100
      %v2157 = vmul.f32 %v2120, %v2092
      %v2158 = vmul.f32 %v2120, %v2093
      %v2159 = vmul.f32 %v2120, %v2094
      %v2160 = vmul.f32 %v2120, %v2095
      %v2161 = vmul.f32 %v2124, %v2092
      %v2162 = vmul.f32 %v2124, %v2093
      %v2163 = vmul.f32 %v2124, %v2094
      %v2164 = vmul.f32 %v2124, %v2095
      %v2165 = vadd.f32 %v2149, %v2157
      %v2166 = vadd.f32 %v2150, %v2158
      %v2167 = vadd.f32 %v2151, %v2159
      %v2168 = vadd.f32 %v2152, %v2160
      %v2169 = vadd.f32 %v2153, %v2161
      %v2170 = vadd.f32 %v2154, %v2162
      %v2171 = vadd.f32 %v2155, %v2163
      %v2172 = vadd.f32 %v2156, %v2164
      %v2173 = vadd.f32 %v2079, %v2165
      %v2174 = vadd.f32 %v2080, %v2166
      %v2175 = vadd.f32 %v2081, %v2167
      %v2176 = vadd.f32 %v2082, %v2168
      %v2177 = vadd.f32 %v2083, %v2169
      %v2178 = vadd.f32 %v2084, %v2170
      %v2179 = vadd.f32 %v2085, %v2171
      %v2180 = vadd.f32 %v2086, %v2172
      %v2181 = vld [vmem:[%s190 + $0x15] sm:$0x1]
      %v2182 = vld [vmem:[%s190 + $0x55] sm:$0x1]
      %v2183 = vld [vmem:[%s190 + $0x35] sm:$0x1]
      %v2184 = vld [vmem:[%s190 + $0x75] sm:$0x1]
      %s2185 = scalar_lea.vmem %s196, 672
      %v2186 = vld [vmem:[%s2185] sm:$0xff]
      %v2187 = vld [vmem:[%s2185 + $0x8] sm:$0xff]
      %v2188 = vld [vmem:[%s2185 + $0x10] sm:$0xff]
      %v2189 = vld [vmem:[%s2185 + $0x18] sm:$0xff]
      %s2190 = scalar_lea.vmem %s196, 1696
      %v2191 = vld [vmem:[%s2190] sm:$0xff]
      %v2192 = vld [vmem:[%s2190 + $0x8] sm:$0xff]
      %v2193 = vld [vmem:[%s2190 + $0x10] sm:$0xff]
      %v2194 = vld [vmem:[%s2190 + $0x18] sm:$0xff]
      %v2195 = vlaneseq
      %v2196 = vshrl.u32 %v2195, 7
      %v2197 = vsub.s32 0, %v2196
      %v2198 = vrot.slane %v2181, %v2197
      %v2199 = vlaneseq
      %v2200 = vshrl.u32 %v2199, 7
      %v2201 = vsub.s32 0, %v2200
      %v2202 = vrot.slane %v2182, %v2201
      %v2203 = vmul.f32 %v2198, %v2186
      %v2204 = vmul.f32 %v2198, %v2187
      %v2205 = vmul.f32 %v2198, %v2188
      %v2206 = vmul.f32 %v2198, %v2189
      %v2207 = vmul.f32 %v2202, %v2186
      %v2208 = vmul.f32 %v2202, %v2187
      %v2209 = vmul.f32 %v2202, %v2188
      %v2210 = vmul.f32 %v2202, %v2189
      %v2211 = vlaneseq
      %v2212 = vshrl.u32 %v2211, 7
      %v2213 = vsub.s32 0, %v2212
      %v2214 = vrot.slane %v2183, %v2213
      %v2215 = vlaneseq
      %v2216 = vshrl.u32 %v2215, 7
      %v2217 = vsub.s32 0, %v2216
      %v2218 = vrot.slane %v2184, %v2217
      %v2219 = vmul.f32 %v2214, %v2191
      %v2220 = vmul.f32 %v2214, %v2192
      %v2221 = vmul.f32 %v2214, %v2193
      %v2222 = vmul.f32 %v2214, %v2194
      %v2223 = vmul.f32 %v2218, %v2191
      %v2224 = vmul.f32 %v2218, %v2192
      %v2225 = vmul.f32 %v2218, %v2193
      %v2226 = vmul.f32 %v2218, %v2194
      %v2227 = vsub.f32 %v2203, %v2219
      %v2228 = vsub.f32 %v2204, %v2220
      %v2229 = vsub.f32 %v2205, %v2221
      %v2230 = vsub.f32 %v2206, %v2222
      %v2231 = vsub.f32 %v2207, %v2223
      %v2232 = vsub.f32 %v2208, %v2224
      %v2233 = vsub.f32 %v2209, %v2225
      %v2234 = vsub.f32 %v2210, %v2226
      %v2235 = vadd.f32 %v2141, %v2227
      %v2236 = vadd.f32 %v2142, %v2228
      %v2237 = vadd.f32 %v2143, %v2229
      %v2238 = vadd.f32 %v2144, %v2230
      %v2239 = vadd.f32 %v2145, %v2231
      %v2240 = vadd.f32 %v2146, %v2232
      %v2241 = vadd.f32 %v2147, %v2233
      %v2242 = vadd.f32 %v2148, %v2234
      %v2243 = vmul.f32 %v2198, %v2191
      %v2244 = vmul.f32 %v2198, %v2192
      %v2245 = vmul.f32 %v2198, %v2193
      %v2246 = vmul.f32 %v2198, %v2194
      %v2247 = vmul.f32 %v2202, %v2191
      %v2248 = vmul.f32 %v2202, %v2192
      %v2249 = vmul.f32 %v2202, %v2193
      %v2250 = vmul.f32 %v2202, %v2194
      %v2251 = vmul.f32 %v2214, %v2186
      %v2252 = vmul.f32 %v2214, %v2187
      %v2253 = vmul.f32 %v2214, %v2188
      %v2254 = vmul.f32 %v2214, %v2189
      %v2255 = vmul.f32 %v2218, %v2186
      %v2256 = vmul.f32 %v2218, %v2187
      %v2257 = vmul.f32 %v2218, %v2188
      %v2258 = vmul.f32 %v2218, %v2189
      %v2259 = vadd.f32 %v2243, %v2251
      %v2260 = vadd.f32 %v2244, %v2252
      %v2261 = vadd.f32 %v2245, %v2253
      %v2262 = vadd.f32 %v2246, %v2254
      %v2263 = vadd.f32 %v2247, %v2255
      %v2264 = vadd.f32 %v2248, %v2256
      %v2265 = vadd.f32 %v2249, %v2257
      %v2266 = vadd.f32 %v2250, %v2258
      %v2267 = vadd.f32 %v2173, %v2259
      %v2268 = vadd.f32 %v2174, %v2260
      %v2269 = vadd.f32 %v2175, %v2261
      %v2270 = vadd.f32 %v2176, %v2262
      %v2271 = vadd.f32 %v2177, %v2263
      %v2272 = vadd.f32 %v2178, %v2264
      %v2273 = vadd.f32 %v2179, %v2265
      %v2274 = vadd.f32 %v2180, %v2266
      %v2275 = vld [vmem:[%s190 + $0x16] sm:$0x1]
      %v2276 = vld [vmem:[%s190 + $0x56] sm:$0x1]
      %v2277 = vld [vmem:[%s190 + $0x36] sm:$0x1]
      %v2278 = vld [vmem:[%s190 + $0x76] sm:$0x1]
      %s2279 = scalar_lea.vmem %s196, 704
      %v2280 = vld [vmem:[%s2279] sm:$0xff]
      %v2281 = vld [vmem:[%s2279 + $0x8] sm:$0xff]
      %v2282 = vld [vmem:[%s2279 + $0x10] sm:$0xff]
      %v2283 = vld [vmem:[%s2279 + $0x18] sm:$0xff]
      %s2284 = scalar_lea.vmem %s196, 1728
      %v2285 = vld [vmem:[%s2284] sm:$0xff]
      %v2286 = vld [vmem:[%s2284 + $0x8] sm:$0xff]
      %v2287 = vld [vmem:[%s2284 + $0x10] sm:$0xff]
      %v2288 = vld [vmem:[%s2284 + $0x18] sm:$0xff]
      %v2289 = vlaneseq
      %v2290 = vshrl.u32 %v2289, 7
      %v2291 = vsub.s32 0, %v2290
      %v2292 = vrot.slane %v2275, %v2291
      %v2293 = vlaneseq
      %v2294 = vshrl.u32 %v2293, 7
      %v2295 = vsub.s32 0, %v2294
      %v2296 = vrot.slane %v2276, %v2295
      %v2297 = vmul.f32 %v2292, %v2280
      %v2298 = vmul.f32 %v2292, %v2281
      %v2299 = vmul.f32 %v2292, %v2282
      %v2300 = vmul.f32 %v2292, %v2283
      %v2301 = vmul.f32 %v2296, %v2280
      %v2302 = vmul.f32 %v2296, %v2281
      %v2303 = vmul.f32 %v2296, %v2282
      %v2304 = vmul.f32 %v2296, %v2283
      %v2305 = vlaneseq
      %v2306 = vshrl.u32 %v2305, 7
      %v2307 = vsub.s32 0, %v2306
      %v2308 = vrot.slane %v2277, %v2307
      %v2309 = vlaneseq
      %v2310 = vshrl.u32 %v2309, 7
      %v2311 = vsub.s32 0, %v2310
      %v2312 = vrot.slane %v2278, %v2311
      %v2313 = vmul.f32 %v2308, %v2285
      %v2314 = vmul.f32 %v2308, %v2286
      %v2315 = vmul.f32 %v2308, %v2287
      %v2316 = vmul.f32 %v2308, %v2288
      %v2317 = vmul.f32 %v2312, %v2285
      %v2318 = vmul.f32 %v2312, %v2286
      %v2319 = vmul.f32 %v2312, %v2287
      %v2320 = vmul.f32 %v2312, %v2288
      %v2321 = vsub.f32 %v2297, %v2313
      %v2322 = vsub.f32 %v2298, %v2314
      %v2323 = vsub.f32 %v2299, %v2315
      %v2324 = vsub.f32 %v2300, %v2316
      %v2325 = vsub.f32 %v2301, %v2317
      %v2326 = vsub.f32 %v2302, %v2318
      %v2327 = vsub.f32 %v2303, %v2319
      %v2328 = vsub.f32 %v2304, %v2320
      %v2329 = vadd.f32 %v2235, %v2321
      %v2330 = vadd.f32 %v2236, %v2322
      %v2331 = vadd.f32 %v2237, %v2323
      %v2332 = vadd.f32 %v2238, %v2324
      %v2333 = vadd.f32 %v2239, %v2325
      %v2334 = vadd.f32 %v2240, %v2326
      %v2335 = vadd.f32 %v2241, %v2327
      %v2336 = vadd.f32 %v2242, %v2328
      %v2337 = vmul.f32 %v2292, %v2285
      %v2338 = vmul.f32 %v2292, %v2286
      %v2339 = vmul.f32 %v2292, %v2287
      %v2340 = vmul.f32 %v2292, %v2288
      %v2341 = vmul.f32 %v2296, %v2285
      %v2342 = vmul.f32 %v2296, %v2286
      %v2343 = vmul.f32 %v2296, %v2287
      %v2344 = vmul.f32 %v2296, %v2288
      %v2345 = vmul.f32 %v2308, %v2280
      %v2346 = vmul.f32 %v2308, %v2281
      %v2347 = vmul.f32 %v2308, %v2282
      %v2348 = vmul.f32 %v2308, %v2283
      %v2349 = vmul.f32 %v2312, %v2280
      %v2350 = vmul.f32 %v2312, %v2281
      %v2351 = vmul.f32 %v2312, %v2282
      %v2352 = vmul.f32 %v2312, %v2283
      %v2353 = vadd.f32 %v2337, %v2345
      %v2354 = vadd.f32 %v2338, %v2346
      %v2355 = vadd.f32 %v2339, %v2347
      %v2356 = vadd.f32 %v2340, %v2348
      %v2357 = vadd.f32 %v2341, %v2349
      %v2358 = vadd.f32 %v2342, %v2350
      %v2359 = vadd.f32 %v2343, %v2351
      %v2360 = vadd.f32 %v2344, %v2352
      %v2361 = vadd.f32 %v2267, %v2353
      %v2362 = vadd.f32 %v2268, %v2354
      %v2363 = vadd.f32 %v2269, %v2355
      %v2364 = vadd.f32 %v2270, %v2356
      %v2365 = vadd.f32 %v2271, %v2357
      %v2366 = vadd.f32 %v2272, %v2358
      %v2367 = vadd.f32 %v2273, %v2359
      %v2368 = vadd.f32 %v2274, %v2360
      %v2369 = vld [vmem:[%s190 + $0x17] sm:$0x1]
      %v2370 = vld [vmem:[%s190 + $0x57] sm:$0x1]
      %v2371 = vld [vmem:[%s190 + $0x37] sm:$0x1]
      %v2372 = vld [vmem:[%s190 + $0x77] sm:$0x1]
      %s2373 = scalar_lea.vmem %s196, 736
      %v2374 = vld [vmem:[%s2373] sm:$0xff]
      %v2375 = vld [vmem:[%s2373 + $0x8] sm:$0xff]
      %v2376 = vld [vmem:[%s2373 + $0x10] sm:$0xff]
      %v2377 = vld [vmem:[%s2373 + $0x18] sm:$0xff]
      %s2378 = scalar_lea.vmem %s196, 1760
      %v2379 = vld [vmem:[%s2378] sm:$0xff]
      %v2380 = vld [vmem:[%s2378 + $0x8] sm:$0xff]
      %v2381 = vld [vmem:[%s2378 + $0x10] sm:$0xff]
      %v2382 = vld [vmem:[%s2378 + $0x18] sm:$0xff]
      %v2383 = vlaneseq
      %v2384 = vshrl.u32 %v2383, 7
      %v2385 = vsub.s32 0, %v2384
      %v2386 = vrot.slane %v2369, %v2385
      %v2387 = vlaneseq
      %v2388 = vshrl.u32 %v2387, 7
      %v2389 = vsub.s32 0, %v2388
      %v2390 = vrot.slane %v2370, %v2389
      %v2391 = vmul.f32 %v2386, %v2374
      %v2392 = vmul.f32 %v2386, %v2375
      %v2393 = vmul.f32 %v2386, %v2376
      %v2394 = vmul.f32 %v2386, %v2377
      %v2395 = vmul.f32 %v2390, %v2374
      %v2396 = vmul.f32 %v2390, %v2375
      %v2397 = vmul.f32 %v2390, %v2376
      %v2398 = vmul.f32 %v2390, %v2377
      %v2399 = vlaneseq
      %v2400 = vshrl.u32 %v2399, 7
      %v2401 = vsub.s32 0, %v2400
      %v2402 = vrot.slane %v2371, %v2401
      %v2403 = vlaneseq
      %v2404 = vshrl.u32 %v2403, 7
      %v2405 = vsub.s32 0, %v2404
      %v2406 = vrot.slane %v2372, %v2405
      %v2407 = vmul.f32 %v2402, %v2379
      %v2408 = vmul.f32 %v2402, %v2380
      %v2409 = vmul.f32 %v2402, %v2381
      %v2410 = vmul.f32 %v2402, %v2382
      %v2411 = vmul.f32 %v2406, %v2379
      %v2412 = vmul.f32 %v2406, %v2380
      %v2413 = vmul.f32 %v2406, %v2381
      %v2414 = vmul.f32 %v2406, %v2382
      %v2415 = vsub.f32 %v2391, %v2407
      %v2416 = vsub.f32 %v2392, %v2408
      %v2417 = vsub.f32 %v2393, %v2409
      %v2418 = vsub.f32 %v2394, %v2410
      %v2419 = vsub.f32 %v2395, %v2411
      %v2420 = vsub.f32 %v2396, %v2412
      %v2421 = vsub.f32 %v2397, %v2413
      %v2422 = vsub.f32 %v2398, %v2414
      %v2423 = vadd.f32 %v2329, %v2415
      %v2424 = vadd.f32 %v2330, %v2416
      %v2425 = vadd.f32 %v2331, %v2417
      %v2426 = vadd.f32 %v2332, %v2418
      %v2427 = vadd.f32 %v2333, %v2419
      %v2428 = vadd.f32 %v2334, %v2420
      %v2429 = vadd.f32 %v2335, %v2421
      %v2430 = vadd.f32 %v2336, %v2422
      %v2431 = vmul.f32 %v2386, %v2379
      %v2432 = vmul.f32 %v2386, %v2380
      %v2433 = vmul.f32 %v2386, %v2381
      %v2434 = vmul.f32 %v2386, %v2382
      %v2435 = vmul.f32 %v2390, %v2379
      %v2436 = vmul.f32 %v2390, %v2380
      %v2437 = vmul.f32 %v2390, %v2381
      %v2438 = vmul.f32 %v2390, %v2382
      %v2439 = vmul.f32 %v2402, %v2374
      %v2440 = vmul.f32 %v2402, %v2375
      %v2441 = vmul.f32 %v2402, %v2376
      %v2442 = vmul.f32 %v2402, %v2377
      %v2443 = vmul.f32 %v2406, %v2374
      %v2444 = vmul.f32 %v2406, %v2375
      %v2445 = vmul.f32 %v2406, %v2376
      %v2446 = vmul.f32 %v2406, %v2377
      %v2447 = vadd.f32 %v2431, %v2439
      %v2448 = vadd.f32 %v2432, %v2440
      %v2449 = vadd.f32 %v2433, %v2441
      %v2450 = vadd.f32 %v2434, %v2442
      %v2451 = vadd.f32 %v2435, %v2443
      %v2452 = vadd.f32 %v2436, %v2444
      %v2453 = vadd.f32 %v2437, %v2445
      %v2454 = vadd.f32 %v2438, %v2446
      %v2455 = vadd.f32 %v2361, %v2447
      %v2456 = vadd.f32 %v2362, %v2448
      %v2457 = vadd.f32 %v2363, %v2449
      %v2458 = vadd.f32 %v2364, %v2450
      %v2459 = vadd.f32 %v2365, %v2451
      %v2460 = vadd.f32 %v2366, %v2452
      %v2461 = vadd.f32 %v2367, %v2453
      %v2462 = vadd.f32 %v2368, %v2454
      %v2463 = vld [vmem:[%s190 + $0x18] sm:$0x1]
      %v2464 = vld [vmem:[%s190 + $0x58] sm:$0x1]
      %v2465 = vld [vmem:[%s190 + $0x38] sm:$0x1]
      %v2466 = vld [vmem:[%s190 + $0x78] sm:$0x1]
      %s2467 = scalar_lea.vmem %s196, 768
      %v2468 = vld [vmem:[%s2467] sm:$0xff]
      %v2469 = vld [vmem:[%s2467 + $0x8] sm:$0xff]
      %v2470 = vld [vmem:[%s2467 + $0x10] sm:$0xff]
      %v2471 = vld [vmem:[%s2467 + $0x18] sm:$0xff]
      %s2472 = scalar_lea.vmem %s196, 1792
      %v2473 = vld [vmem:[%s2472] sm:$0xff]
      %v2474 = vld [vmem:[%s2472 + $0x8] sm:$0xff]
      %v2475 = vld [vmem:[%s2472 + $0x10] sm:$0xff]
      %v2476 = vld [vmem:[%s2472 + $0x18] sm:$0xff]
      %v2477 = vlaneseq
      %v2478 = vshrl.u32 %v2477, 7
      %v2479 = vsub.s32 0, %v2478
      %v2480 = vrot.slane %v2463, %v2479
      %v2481 = vlaneseq
      %v2482 = vshrl.u32 %v2481, 7
      %v2483 = vsub.s32 0, %v2482
      %v2484 = vrot.slane %v2464, %v2483
      %v2485 = vmul.f32 %v2480, %v2468
      %v2486 = vmul.f32 %v2480, %v2469
      %v2487 = vmul.f32 %v2480, %v2470
      %v2488 = vmul.f32 %v2480, %v2471
      %v2489 = vmul.f32 %v2484, %v2468
      %v2490 = vmul.f32 %v2484, %v2469
      %v2491 = vmul.f32 %v2484, %v2470
      %v2492 = vmul.f32 %v2484, %v2471
      %v2493 = vlaneseq
      %v2494 = vshrl.u32 %v2493, 7
      %v2495 = vsub.s32 0, %v2494
      %v2496 = vrot.slane %v2465, %v2495
      %v2497 = vlaneseq
      %v2498 = vshrl.u32 %v2497, 7
      %v2499 = vsub.s32 0, %v2498
      %v2500 = vrot.slane %v2466, %v2499
      %v2501 = vmul.f32 %v2496, %v2473
      %v2502 = vmul.f32 %v2496, %v2474
      %v2503 = vmul.f32 %v2496, %v2475
      %v2504 = vmul.f32 %v2496, %v2476
      %v2505 = vmul.f32 %v2500, %v2473
      %v2506 = vmul.f32 %v2500, %v2474
      %v2507 = vmul.f32 %v2500, %v2475
      %v2508 = vmul.f32 %v2500, %v2476
      %v2509 = vsub.f32 %v2485, %v2501
      %v2510 = vsub.f32 %v2486, %v2502
      %v2511 = vsub.f32 %v2487, %v2503
      %v2512 = vsub.f32 %v2488, %v2504
      %v2513 = vsub.f32 %v2489, %v2505
      %v2514 = vsub.f32 %v2490, %v2506
      %v2515 = vsub.f32 %v2491, %v2507
      %v2516 = vsub.f32 %v2492, %v2508
      %v2517 = vadd.f32 %v2423, %v2509
      %v2518 = vadd.f32 %v2424, %v2510
      %v2519 = vadd.f32 %v2425, %v2511
      %v2520 = vadd.f32 %v2426, %v2512
      %v2521 = vadd.f32 %v2427, %v2513
      %v2522 = vadd.f32 %v2428, %v2514
      %v2523 = vadd.f32 %v2429, %v2515
      %v2524 = vadd.f32 %v2430, %v2516
      %v2525 = vmul.f32 %v2480, %v2473
      %v2526 = vmul.f32 %v2480, %v2474
      %v2527 = vmul.f32 %v2480, %v2475
      %v2528 = vmul.f32 %v2480, %v2476
      %v2529 = vmul.f32 %v2484, %v2473
      %v2530 = vmul.f32 %v2484, %v2474
      %v2531 = vmul.f32 %v2484, %v2475
      %v2532 = vmul.f32 %v2484, %v2476
      %v2533 = vmul.f32 %v2496, %v2468
      %v2534 = vmul.f32 %v2496, %v2469
      %v2535 = vmul.f32 %v2496, %v2470
      %v2536 = vmul.f32 %v2496, %v2471
      %v2537 = vmul.f32 %v2500, %v2468
      %v2538 = vmul.f32 %v2500, %v2469
      %v2539 = vmul.f32 %v2500, %v2470
      %v2540 = vmul.f32 %v2500, %v2471
      %v2541 = vadd.f32 %v2525, %v2533
      %v2542 = vadd.f32 %v2526, %v2534
      %v2543 = vadd.f32 %v2527, %v2535
      %v2544 = vadd.f32 %v2528, %v2536
      %v2545 = vadd.f32 %v2529, %v2537
      %v2546 = vadd.f32 %v2530, %v2538
      %v2547 = vadd.f32 %v2531, %v2539
      %v2548 = vadd.f32 %v2532, %v2540
      %v2549 = vadd.f32 %v2455, %v2541
      %v2550 = vadd.f32 %v2456, %v2542
      %v2551 = vadd.f32 %v2457, %v2543
      %v2552 = vadd.f32 %v2458, %v2544
      %v2553 = vadd.f32 %v2459, %v2545
      %v2554 = vadd.f32 %v2460, %v2546
      %v2555 = vadd.f32 %v2461, %v2547
      %v2556 = vadd.f32 %v2462, %v2548
      %v2557 = vld [vmem:[%s190 + $0x19] sm:$0x1]
      %v2558 = vld [vmem:[%s190 + $0x59] sm:$0x1]
      %v2559 = vld [vmem:[%s190 + $0x39] sm:$0x1]
      %v2560 = vld [vmem:[%s190 + $0x79] sm:$0x1]
      %s2561 = scalar_lea.vmem %s196, 800
      %v2562 = vld [vmem:[%s2561] sm:$0xff]
      %v2563 = vld [vmem:[%s2561 + $0x8] sm:$0xff]
      %v2564 = vld [vmem:[%s2561 + $0x10] sm:$0xff]
      %v2565 = vld [vmem:[%s2561 + $0x18] sm:$0xff]
      %s2566 = scalar_lea.vmem %s196, 1824
      %v2567 = vld [vmem:[%s2566] sm:$0xff]
      %v2568 = vld [vmem:[%s2566 + $0x8] sm:$0xff]
      %v2569 = vld [vmem:[%s2566 + $0x10] sm:$0xff]
      %v2570 = vld [vmem:[%s2566 + $0x18] sm:$0xff]
      %v2571 = vlaneseq
      %v2572 = vshrl.u32 %v2571, 7
      %v2573 = vsub.s32 0, %v2572
      %v2574 = vrot.slane %v2557, %v2573
      %v2575 = vlaneseq
      %v2576 = vshrl.u32 %v2575, 7
      %v2577 = vsub.s32 0, %v2576
      %v2578 = vrot.slane %v2558, %v2577
      %v2579 = vmul.f32 %v2574, %v2562
      %v2580 = vmul.f32 %v2574, %v2563
      %v2581 = vmul.f32 %v2574, %v2564
      %v2582 = vmul.f32 %v2574, %v2565
      %v2583 = vmul.f32 %v2578, %v2562
      %v2584 = vmul.f32 %v2578, %v2563
      %v2585 = vmul.f32 %v2578, %v2564
      %v2586 = vmul.f32 %v2578, %v2565
      %v2587 = vlaneseq
      %v2588 = vshrl.u32 %v2587, 7
      %v2589 = vsub.s32 0, %v2588
      %v2590 = vrot.slane %v2559, %v2589
      %v2591 = vlaneseq
      %v2592 = vshrl.u32 %v2591, 7
      %v2593 = vsub.s32 0, %v2592
      %v2594 = vrot.slane %v2560, %v2593
      %v2595 = vmul.f32 %v2590, %v2567
      %v2596 = vmul.f32 %v2590, %v2568
      %v2597 = vmul.f32 %v2590, %v2569
      %v2598 = vmul.f32 %v2590, %v2570
      %v2599 = vmul.f32 %v2594, %v2567
      %v2600 = vmul.f32 %v2594, %v2568
      %v2601 = vmul.f32 %v2594, %v2569
      %v2602 = vmul.f32 %v2594, %v2570
      %v2603 = vsub.f32 %v2579, %v2595
      %v2604 = vsub.f32 %v2580, %v2596
      %v2605 = vsub.f32 %v2581, %v2597
      %v2606 = vsub.f32 %v2582, %v2598
      %v2607 = vsub.f32 %v2583, %v2599
      %v2608 = vsub.f32 %v2584, %v2600
      %v2609 = vsub.f32 %v2585, %v2601
      %v2610 = vsub.f32 %v2586, %v2602
      %v2611 = vadd.f32 %v2517, %v2603
      %v2612 = vadd.f32 %v2518, %v2604
      %v2613 = vadd.f32 %v2519, %v2605
      %v2614 = vadd.f32 %v2520, %v2606
      %v2615 = vadd.f32 %v2521, %v2607
      %v2616 = vadd.f32 %v2522, %v2608
      %v2617 = vadd.f32 %v2523, %v2609
      %v2618 = vadd.f32 %v2524, %v2610
      %v2619 = vmul.f32 %v2574, %v2567
      %v2620 = vmul.f32 %v2574, %v2568
      %v2621 = vmul.f32 %v2574, %v2569
      %v2622 = vmul.f32 %v2574, %v2570
      %v2623 = vmul.f32 %v2578, %v2567
      %v2624 = vmul.f32 %v2578, %v2568
      %v2625 = vmul.f32 %v2578, %v2569
      %v2626 = vmul.f32 %v2578, %v2570
      %v2627 = vmul.f32 %v2590, %v2562
      %v2628 = vmul.f32 %v2590, %v2563
      %v2629 = vmul.f32 %v2590, %v2564
      %v2630 = vmul.f32 %v2590, %v2565
      %v2631 = vmul.f32 %v2594, %v2562
      %v2632 = vmul.f32 %v2594, %v2563
      %v2633 = vmul.f32 %v2594, %v2564
      %v2634 = vmul.f32 %v2594, %v2565
      %v2635 = vadd.f32 %v2619, %v2627
      %v2636 = vadd.f32 %v2620, %v2628
      %v2637 = vadd.f32 %v2621, %v2629
      %v2638 = vadd.f32 %v2622, %v2630
      %v2639 = vadd.f32 %v2623, %v2631
      %v2640 = vadd.f32 %v2624, %v2632
      %v2641 = vadd.f32 %v2625, %v2633
      %v2642 = vadd.f32 %v2626, %v2634
      %v2643 = vadd.f32 %v2549, %v2635
      %v2644 = vadd.f32 %v2550, %v2636
      %v2645 = vadd.f32 %v2551, %v2637
      %v2646 = vadd.f32 %v2552, %v2638
      %v2647 = vadd.f32 %v2553, %v2639
      %v2648 = vadd.f32 %v2554, %v2640
      %v2649 = vadd.f32 %v2555, %v2641
      %v2650 = vadd.f32 %v2556, %v2642
      %v2651 = vld [vmem:[%s190 + $0x1a] sm:$0x1]
      %v2652 = vld [vmem:[%s190 + $0x5a] sm:$0x1]
      %v2653 = vld [vmem:[%s190 + $0x3a] sm:$0x1]
      %v2654 = vld [vmem:[%s190 + $0x7a] sm:$0x1]
      %s2655 = scalar_lea.vmem %s196, 832
      %v2656 = vld [vmem:[%s2655] sm:$0xff]
      %v2657 = vld [vmem:[%s2655 + $0x8] sm:$0xff]
      %v2658 = vld [vmem:[%s2655 + $0x10] sm:$0xff]
      %v2659 = vld [vmem:[%s2655 + $0x18] sm:$0xff]
      %s2660 = scalar_lea.vmem %s196, 1856
      %v2661 = vld [vmem:[%s2660] sm:$0xff]
      %v2662 = vld [vmem:[%s2660 + $0x8] sm:$0xff]
      %v2663 = vld [vmem:[%s2660 + $0x10] sm:$0xff]
      %v2664 = vld [vmem:[%s2660 + $0x18] sm:$0xff]
      %v2665 = vlaneseq
      %v2666 = vshrl.u32 %v2665, 7
      %v2667 = vsub.s32 0, %v2666
      %v2668 = vrot.slane %v2651, %v2667
      %v2669 = vlaneseq
      %v2670 = vshrl.u32 %v2669, 7
      %v2671 = vsub.s32 0, %v2670
      %v2672 = vrot.slane %v2652, %v2671
      %v2673 = vmul.f32 %v2668, %v2656
      %v2674 = vmul.f32 %v2668, %v2657
      %v2675 = vmul.f32 %v2668, %v2658
      %v2676 = vmul.f32 %v2668, %v2659
      %v2677 = vmul.f32 %v2672, %v2656
      %v2678 = vmul.f32 %v2672, %v2657
      %v2679 = vmul.f32 %v2672, %v2658
      %v2680 = vmul.f32 %v2672, %v2659
      %v2681 = vlaneseq
      %v2682 = vshrl.u32 %v2681, 7
      %v2683 = vsub.s32 0, %v2682
      %v2684 = vrot.slane %v2653, %v2683
      %v2685 = vlaneseq
      %v2686 = vshrl.u32 %v2685, 7
      %v2687 = vsub.s32 0, %v2686
      %v2688 = vrot.slane %v2654, %v2687
      %v2689 = vmul.f32 %v2684, %v2661
      %v2690 = vmul.f32 %v2684, %v2662
      %v2691 = vmul.f32 %v2684, %v2663
      %v2692 = vmul.f32 %v2684, %v2664
      %v2693 = vmul.f32 %v2688, %v2661
      %v2694 = vmul.f32 %v2688, %v2662
      %v2695 = vmul.f32 %v2688, %v2663
      %v2696 = vmul.f32 %v2688, %v2664
      %v2697 = vsub.f32 %v2673, %v2689
      %v2698 = vsub.f32 %v2674, %v2690
      %v2699 = vsub.f32 %v2675, %v2691
      %v2700 = vsub.f32 %v2676, %v2692
      %v2701 = vsub.f32 %v2677, %v2693
      %v2702 = vsub.f32 %v2678, %v2694
      %v2703 = vsub.f32 %v2679, %v2695
      %v2704 = vsub.f32 %v2680, %v2696
      %v2705 = vadd.f32 %v2611, %v2697
      %v2706 = vadd.f32 %v2612, %v2698
      %v2707 = vadd.f32 %v2613, %v2699
      %v2708 = vadd.f32 %v2614, %v2700
      %v2709 = vadd.f32 %v2615, %v2701
      %v2710 = vadd.f32 %v2616, %v2702
      %v2711 = vadd.f32 %v2617, %v2703
      %v2712 = vadd.f32 %v2618, %v2704
      %v2713 = vmul.f32 %v2668, %v2661
      %v2714 = vmul.f32 %v2668, %v2662
      %v2715 = vmul.f32 %v2668, %v2663
      %v2716 = vmul.f32 %v2668, %v2664
      %v2717 = vmul.f32 %v2672, %v2661
      %v2718 = vmul.f32 %v2672, %v2662
      %v2719 = vmul.f32 %v2672, %v2663
      %v2720 = vmul.f32 %v2672, %v2664
      %v2721 = vmul.f32 %v2684, %v2656
      %v2722 = vmul.f32 %v2684, %v2657
      %v2723 = vmul.f32 %v2684, %v2658
      %v2724 = vmul.f32 %v2684, %v2659
      %v2725 = vmul.f32 %v2688, %v2656
      %v2726 = vmul.f32 %v2688, %v2657
      %v2727 = vmul.f32 %v2688, %v2658
      %v2728 = vmul.f32 %v2688, %v2659
      %v2729 = vadd.f32 %v2713, %v2721
      %v2730 = vadd.f32 %v2714, %v2722
      %v2731 = vadd.f32 %v2715, %v2723
      %v2732 = vadd.f32 %v2716, %v2724
      %v2733 = vadd.f32 %v2717, %v2725
      %v2734 = vadd.f32 %v2718, %v2726
      %v2735 = vadd.f32 %v2719, %v2727
      %v2736 = vadd.f32 %v2720, %v2728
      %v2737 = vadd.f32 %v2643, %v2729
      %v2738 = vadd.f32 %v2644, %v2730
      %v2739 = vadd.f32 %v2645, %v2731
      %v2740 = vadd.f32 %v2646, %v2732
      %v2741 = vadd.f32 %v2647, %v2733
      %v2742 = vadd.f32 %v2648, %v2734
      %v2743 = vadd.f32 %v2649, %v2735
      %v2744 = vadd.f32 %v2650, %v2736
      %v2745 = vld [vmem:[%s190 + $0x1b] sm:$0x1]
      %v2746 = vld [vmem:[%s190 + $0x5b] sm:$0x1]
      %v2747 = vld [vmem:[%s190 + $0x3b] sm:$0x1]
      %v2748 = vld [vmem:[%s190 + $0x7b] sm:$0x1]
      %s2749 = scalar_lea.vmem %s196, 864
      %v2750 = vld [vmem:[%s2749] sm:$0xff]
      %v2751 = vld [vmem:[%s2749 + $0x8] sm:$0xff]
      %v2752 = vld [vmem:[%s2749 + $0x10] sm:$0xff]
      %v2753 = vld [vmem:[%s2749 + $0x18] sm:$0xff]
      %s2754 = scalar_lea.vmem %s196, 1888
      %v2755 = vld [vmem:[%s2754] sm:$0xff]
      %v2756 = vld [vmem:[%s2754 + $0x8] sm:$0xff]
      %v2757 = vld [vmem:[%s2754 + $0x10] sm:$0xff]
      %v2758 = vld [vmem:[%s2754 + $0x18] sm:$0xff]
      %v2759 = vlaneseq
      %v2760 = vshrl.u32 %v2759, 7
      %v2761 = vsub.s32 0, %v2760
      %v2762 = vrot.slane %v2745, %v2761
      %v2763 = vlaneseq
      %v2764 = vshrl.u32 %v2763, 7
      %v2765 = vsub.s32 0, %v2764
      %v2766 = vrot.slane %v2746, %v2765
      %v2767 = vmul.f32 %v2762, %v2750
      %v2768 = vmul.f32 %v2762, %v2751
      %v2769 = vmul.f32 %v2762, %v2752
      %v2770 = vmul.f32 %v2762, %v2753
      %v2771 = vmul.f32 %v2766, %v2750
      %v2772 = vmul.f32 %v2766, %v2751
      %v2773 = vmul.f32 %v2766, %v2752
      %v2774 = vmul.f32 %v2766, %v2753
      %v2775 = vlaneseq
      %v2776 = vshrl.u32 %v2775, 7
      %v2777 = vsub.s32 0, %v2776
      %v2778 = vrot.slane %v2747, %v2777
      %v2779 = vlaneseq
      %v2780 = vshrl.u32 %v2779, 7
      %v2781 = vsub.s32 0, %v2780
      %v2782 = vrot.slane %v2748, %v2781
      %v2783 = vmul.f32 %v2778, %v2755
      %v2784 = vmul.f32 %v2778, %v2756
      %v2785 = vmul.f32 %v2778, %v2757
      %v2786 = vmul.f32 %v2778, %v2758
      %v2787 = vmul.f32 %v2782, %v2755
      %v2788 = vmul.f32 %v2782, %v2756
      %v2789 = vmul.f32 %v2782, %v2757
      %v2790 = vmul.f32 %v2782, %v2758
      %v2791 = vsub.f32 %v2767, %v2783
      %v2792 = vsub.f32 %v2768, %v2784
      %v2793 = vsub.f32 %v2769, %v2785
      %v2794 = vsub.f32 %v2770, %v2786
      %v2795 = vsub.f32 %v2771, %v2787
      %v2796 = vsub.f32 %v2772, %v2788
      %v2797 = vsub.f32 %v2773, %v2789
      %v2798 = vsub.f32 %v2774, %v2790
      %v2799 = vadd.f32 %v2705, %v2791
      %v2800 = vadd.f32 %v2706, %v2792
      %v2801 = vadd.f32 %v2707, %v2793
      %v2802 = vadd.f32 %v2708, %v2794
      %v2803 = vadd.f32 %v2709, %v2795
      %v2804 = vadd.f32 %v2710, %v2796
      %v2805 = vadd.f32 %v2711, %v2797
      %v2806 = vadd.f32 %v2712, %v2798
      %v2807 = vmul.f32 %v2762, %v2755
      %v2808 = vmul.f32 %v2762, %v2756
      %v2809 = vmul.f32 %v2762, %v2757
      %v2810 = vmul.f32 %v2762, %v2758
      %v2811 = vmul.f32 %v2766, %v2755
      %v2812 = vmul.f32 %v2766, %v2756
      %v2813 = vmul.f32 %v2766, %v2757
      %v2814 = vmul.f32 %v2766, %v2758
      %v2815 = vmul.f32 %v2778, %v2750
      %v2816 = vmul.f32 %v2778, %v2751
      %v2817 = vmul.f32 %v2778, %v2752
      %v2818 = vmul.f32 %v2778, %v2753
      %v2819 = vmul.f32 %v2782, %v2750
      %v2820 = vmul.f32 %v2782, %v2751
      %v2821 = vmul.f32 %v2782, %v2752
      %v2822 = vmul.f32 %v2782, %v2753
      %v2823 = vadd.f32 %v2807, %v2815
      %v2824 = vadd.f32 %v2808, %v2816
      %v2825 = vadd.f32 %v2809, %v2817
      %v2826 = vadd.f32 %v2810, %v2818
      %v2827 = vadd.f32 %v2811, %v2819
      %v2828 = vadd.f32 %v2812, %v2820
      %v2829 = vadd.f32 %v2813, %v2821
      %v2830 = vadd.f32 %v2814, %v2822
      %v2831 = vadd.f32 %v2737, %v2823
      %v2832 = vadd.f32 %v2738, %v2824
      %v2833 = vadd.f32 %v2739, %v2825
      %v2834 = vadd.f32 %v2740, %v2826
      %v2835 = vadd.f32 %v2741, %v2827
      %v2836 = vadd.f32 %v2742, %v2828
      %v2837 = vadd.f32 %v2743, %v2829
      %v2838 = vadd.f32 %v2744, %v2830
      %v2839 = vld [vmem:[%s190 + $0x1c] sm:$0x1]
      %v2840 = vld [vmem:[%s190 + $0x5c] sm:$0x1]
      %v2841 = vld [vmem:[%s190 + $0x3c] sm:$0x1]
      %v2842 = vld [vmem:[%s190 + $0x7c] sm:$0x1]
      %s2843 = scalar_lea.vmem %s196, 896
      %v2844 = vld [vmem:[%s2843] sm:$0xff]
      %v2845 = vld [vmem:[%s2843 + $0x8] sm:$0xff]
      %v2846 = vld [vmem:[%s2843 + $0x10] sm:$0xff]
      %v2847 = vld [vmem:[%s2843 + $0x18] sm:$0xff]
      %s2848 = scalar_lea.vmem %s196, 1920
      %v2849 = vld [vmem:[%s2848] sm:$0xff]
      %v2850 = vld [vmem:[%s2848 + $0x8] sm:$0xff]
      %v2851 = vld [vmem:[%s2848 + $0x10] sm:$0xff]
      %v2852 = vld [vmem:[%s2848 + $0x18] sm:$0xff]
      %v2853 = vlaneseq
      %v2854 = vshrl.u32 %v2853, 7
      %v2855 = vsub.s32 0, %v2854
      %v2856 = vrot.slane %v2839, %v2855
      %v2857 = vlaneseq
      %v2858 = vshrl.u32 %v2857, 7
      %v2859 = vsub.s32 0, %v2858
      %v2860 = vrot.slane %v2840, %v2859
      %v2861 = vmul.f32 %v2856, %v2844
      %v2862 = vmul.f32 %v2856, %v2845
      %v2863 = vmul.f32 %v2856, %v2846
      %v2864 = vmul.f32 %v2856, %v2847
      %v2865 = vmul.f32 %v2860, %v2844
      %v2866 = vmul.f32 %v2860, %v2845
      %v2867 = vmul.f32 %v2860, %v2846
      %v2868 = vmul.f32 %v2860, %v2847
      %v2869 = vlaneseq
      %v2870 = vshrl.u32 %v2869, 7
      %v2871 = vsub.s32 0, %v2870
      %v2872 = vrot.slane %v2841, %v2871
      %v2873 = vlaneseq
      %v2874 = vshrl.u32 %v2873, 7
      %v2875 = vsub.s32 0, %v2874
      %v2876 = vrot.slane %v2842, %v2875
      %v2877 = vmul.f32 %v2872, %v2849
      %v2878 = vmul.f32 %v2872, %v2850
      %v2879 = vmul.f32 %v2872, %v2851
      %v2880 = vmul.f32 %v2872, %v2852
      %v2881 = vmul.f32 %v2876, %v2849
      %v2882 = vmul.f32 %v2876, %v2850
      %v2883 = vmul.f32 %v2876, %v2851
      %v2884 = vmul.f32 %v2876, %v2852
      %v2885 = vsub.f32 %v2861, %v2877
      %v2886 = vsub.f32 %v2862, %v2878
      %v2887 = vsub.f32 %v2863, %v2879
      %v2888 = vsub.f32 %v2864, %v2880
      %v2889 = vsub.f32 %v2865, %v2881
      %v2890 = vsub.f32 %v2866, %v2882
      %v2891 = vsub.f32 %v2867, %v2883
      %v2892 = vsub.f32 %v2868, %v2884
      %v2893 = vadd.f32 %v2799, %v2885
      %v2894 = vadd.f32 %v2800, %v2886
      %v2895 = vadd.f32 %v2801, %v2887
      %v2896 = vadd.f32 %v2802, %v2888
      %v2897 = vadd.f32 %v2803, %v2889
      %v2898 = vadd.f32 %v2804, %v2890
      %v2899 = vadd.f32 %v2805, %v2891
      %v2900 = vadd.f32 %v2806, %v2892
      %v2901 = vmul.f32 %v2856, %v2849
      %v2902 = vmul.f32 %v2856, %v2850
      %v2903 = vmul.f32 %v2856, %v2851
      %v2904 = vmul.f32 %v2856, %v2852
      %v2905 = vmul.f32 %v2860, %v2849
      %v2906 = vmul.f32 %v2860, %v2850
      %v2907 = vmul.f32 %v2860, %v2851
      %v2908 = vmul.f32 %v2860, %v2852
      %v2909 = vmul.f32 %v2872, %v2844
      %v2910 = vmul.f32 %v2872, %v2845
      %v2911 = vmul.f32 %v2872, %v2846
      %v2912 = vmul.f32 %v2872, %v2847
      %v2913 = vmul.f32 %v2876, %v2844
      %v2914 = vmul.f32 %v2876, %v2845
      %v2915 = vmul.f32 %v2876, %v2846
      %v2916 = vmul.f32 %v2876, %v2847
      %v2917 = vadd.f32 %v2901, %v2909
      %v2918 = vadd.f32 %v2902, %v2910
      %v2919 = vadd.f32 %v2903, %v2911
      %v2920 = vadd.f32 %v2904, %v2912
      %v2921 = vadd.f32 %v2905, %v2913
      %v2922 = vadd.f32 %v2906, %v2914
      %v2923 = vadd.f32 %v2907, %v2915
      %v2924 = vadd.f32 %v2908, %v2916
      %v2925 = vadd.f32 %v2831, %v2917
      %v2926 = vadd.f32 %v2832, %v2918
      %v2927 = vadd.f32 %v2833, %v2919
      %v2928 = vadd.f32 %v2834, %v2920
      %v2929 = vadd.f32 %v2835, %v2921
      %v2930 = vadd.f32 %v2836, %v2922
      %v2931 = vadd.f32 %v2837, %v2923
      %v2932 = vadd.f32 %v2838, %v2924
      %v2933 = vld [vmem:[%s190 + $0x1d] sm:$0x1]
      %v2934 = vld [vmem:[%s190 + $0x5d] sm:$0x1]
      %v2935 = vld [vmem:[%s190 + $0x3d] sm:$0x1]
      %v2936 = vld [vmem:[%s190 + $0x7d] sm:$0x1]
      %s2937 = scalar_lea.vmem %s196, 928
      %v2938 = vld [vmem:[%s2937] sm:$0xff]
      %v2939 = vld [vmem:[%s2937 + $0x8] sm:$0xff]
      %v2940 = vld [vmem:[%s2937 + $0x10] sm:$0xff]
      %v2941 = vld [vmem:[%s2937 + $0x18] sm:$0xff]
      %s2942 = scalar_lea.vmem %s196, 1952
      %v2943 = vld [vmem:[%s2942] sm:$0xff]
      %v2944 = vld [vmem:[%s2942 + $0x8] sm:$0xff]
      %v2945 = vld [vmem:[%s2942 + $0x10] sm:$0xff]
      %v2946 = vld [vmem:[%s2942 + $0x18] sm:$0xff]
      %v2947 = vlaneseq
      %v2948 = vshrl.u32 %v2947, 7
      %v2949 = vsub.s32 0, %v2948
      %v2950 = vrot.slane %v2933, %v2949
      %v2951 = vlaneseq
      %v2952 = vshrl.u32 %v2951, 7
      %v2953 = vsub.s32 0, %v2952
      %v2954 = vrot.slane %v2934, %v2953
      %v2955 = vmul.f32 %v2950, %v2938
      %v2956 = vmul.f32 %v2950, %v2939
      %v2957 = vmul.f32 %v2950, %v2940
      %v2958 = vmul.f32 %v2950, %v2941
      %v2959 = vmul.f32 %v2954, %v2938
      %v2960 = vmul.f32 %v2954, %v2939
      %v2961 = vmul.f32 %v2954, %v2940
      %v2962 = vmul.f32 %v2954, %v2941
      %v2963 = vlaneseq
      %v2964 = vshrl.u32 %v2963, 7
      %v2965 = vsub.s32 0, %v2964
      %v2966 = vrot.slane %v2935, %v2965
      %v2967 = vlaneseq
      %v2968 = vshrl.u32 %v2967, 7
      %v2969 = vsub.s32 0, %v2968
      %v2970 = vrot.slane %v2936, %v2969
      %v2971 = vmul.f32 %v2966, %v2943
      %v2972 = vmul.f32 %v2966, %v2944
      %v2973 = vmul.f32 %v2966, %v2945
      %v2974 = vmul.f32 %v2966, %v2946
      %v2975 = vmul.f32 %v2970, %v2943
      %v2976 = vmul.f32 %v2970, %v2944
      %v2977 = vmul.f32 %v2970, %v2945
      %v2978 = vmul.f32 %v2970, %v2946
      %v2979 = vsub.f32 %v2955, %v2971
      %v2980 = vsub.f32 %v2956, %v2972
      %v2981 = vsub.f32 %v2957, %v2973
      %v2982 = vsub.f32 %v2958, %v2974
      %v2983 = vsub.f32 %v2959, %v2975
      %v2984 = vsub.f32 %v2960, %v2976
      %v2985 = vsub.f32 %v2961, %v2977
      %v2986 = vsub.f32 %v2962, %v2978
      %v2987 = vadd.f32 %v2893, %v2979
      %v2988 = vadd.f32 %v2894, %v2980
      %v2989 = vadd.f32 %v2895, %v2981
      %v2990 = vadd.f32 %v2896, %v2982
      %v2991 = vadd.f32 %v2897, %v2983
      %v2992 = vadd.f32 %v2898, %v2984
      %v2993 = vadd.f32 %v2899, %v2985
      %v2994 = vadd.f32 %v2900, %v2986
      %v2995 = vmul.f32 %v2950, %v2943
      %v2996 = vmul.f32 %v2950, %v2944
      %v2997 = vmul.f32 %v2950, %v2945
      %v2998 = vmul.f32 %v2950, %v2946
      %v2999 = vmul.f32 %v2954, %v2943
      %v3000 = vmul.f32 %v2954, %v2944
      %v3001 = vmul.f32 %v2954, %v2945
      %v3002 = vmul.f32 %v2954, %v2946
      %v3003 = vmul.f32 %v2966, %v2938
      %v3004 = vmul.f32 %v2966, %v2939
      %v3005 = vmul.f32 %v2966, %v2940
      %v3006 = vmul.f32 %v2966, %v2941
      %v3007 = vmul.f32 %v2970, %v2938
      %v3008 = vmul.f32 %v2970, %v2939
      %v3009 = vmul.f32 %v2970, %v2940
      %v3010 = vmul.f32 %v2970, %v2941
      %v3011 = vadd.f32 %v2995, %v3003
      %v3012 = vadd.f32 %v2996, %v3004
      %v3013 = vadd.f32 %v2997, %v3005
      %v3014 = vadd.f32 %v2998, %v3006
      %v3015 = vadd.f32 %v2999, %v3007
      %v3016 = vadd.f32 %v3000, %v3008
      %v3017 = vadd.f32 %v3001, %v3009
      %v3018 = vadd.f32 %v3002, %v3010
      %v3019 = vadd.f32 %v2925, %v3011
      %v3020 = vadd.f32 %v2926, %v3012
      %v3021 = vadd.f32 %v2927, %v3013
      %v3022 = vadd.f32 %v2928, %v3014
      %v3023 = vadd.f32 %v2929, %v3015
      %v3024 = vadd.f32 %v2930, %v3016
      %v3025 = vadd.f32 %v2931, %v3017
      %v3026 = vadd.f32 %v2932, %v3018
      %v3027 = vld [vmem:[%s190 + $0x1e] sm:$0x1]
      %v3028 = vld [vmem:[%s190 + $0x5e] sm:$0x1]
      %v3029 = vld [vmem:[%s190 + $0x3e] sm:$0x1]
      %v3030 = vld [vmem:[%s190 + $0x7e] sm:$0x1]
      %s3031 = scalar_lea.vmem %s196, 960
      %v3032 = vld [vmem:[%s3031] sm:$0xff]
      %v3033 = vld [vmem:[%s3031 + $0x8] sm:$0xff]
      %v3034 = vld [vmem:[%s3031 + $0x10] sm:$0xff]
      %v3035 = vld [vmem:[%s3031 + $0x18] sm:$0xff]
      %s3036 = scalar_lea.vmem %s196, 1984
      %v3037 = vld [vmem:[%s3036] sm:$0xff]
      %v3038 = vld [vmem:[%s3036 + $0x8] sm:$0xff]
      %v3039 = vld [vmem:[%s3036 + $0x10] sm:$0xff]
      %v3040 = vld [vmem:[%s3036 + $0x18] sm:$0xff]
      %v3041 = vlaneseq
      %v3042 = vshrl.u32 %v3041, 7
      %v3043 = vsub.s32 0, %v3042
      %v3044 = vrot.slane %v3027, %v3043
      %v3045 = vlaneseq
      %v3046 = vshrl.u32 %v3045, 7
      %v3047 = vsub.s32 0, %v3046
      %v3048 = vrot.slane %v3028, %v3047
      %v3049 = vmul.f32 %v3044, %v3032
      %v3050 = vmul.f32 %v3044, %v3033
      %v3051 = vmul.f32 %v3044, %v3034
      %v3052 = vmul.f32 %v3044, %v3035
      %v3053 = vmul.f32 %v3048, %v3032
      %v3054 = vmul.f32 %v3048, %v3033
      %v3055 = vmul.f32 %v3048, %v3034
      %v3056 = vmul.f32 %v3048, %v3035
      %v3057 = vlaneseq
      %v3058 = vshrl.u32 %v3057, 7
      %v3059 = vsub.s32 0, %v3058
      %v3060 = vrot.slane %v3029, %v3059
      %v3061 = vlaneseq
      %v3062 = vshrl.u32 %v3061, 7
      %v3063 = vsub.s32 0, %v3062
      %v3064 = vrot.slane %v3030, %v3063
      %v3065 = vmul.f32 %v3060, %v3037
      %v3066 = vmul.f32 %v3060, %v3038
      %v3067 = vmul.f32 %v3060, %v3039
      %v3068 = vmul.f32 %v3060, %v3040
      %v3069 = vmul.f32 %v3064, %v3037
      %v3070 = vmul.f32 %v3064, %v3038
      %v3071 = vmul.f32 %v3064, %v3039
      %v3072 = vmul.f32 %v3064, %v3040
      %v3073 = vsub.f32 %v3049, %v3065
      %v3074 = vsub.f32 %v3050, %v3066
      %v3075 = vsub.f32 %v3051, %v3067
      %v3076 = vsub.f32 %v3052, %v3068
      %v3077 = vsub.f32 %v3053, %v3069
      %v3078 = vsub.f32 %v3054, %v3070
      %v3079 = vsub.f32 %v3055, %v3071
      %v3080 = vsub.f32 %v3056, %v3072
      %v3081 = vadd.f32 %v2987, %v3073
      %v3082 = vadd.f32 %v2988, %v3074
      %v3083 = vadd.f32 %v2989, %v3075
      %v3084 = vadd.f32 %v2990, %v3076
      %v3085 = vadd.f32 %v2991, %v3077
      %v3086 = vadd.f32 %v2992, %v3078
      %v3087 = vadd.f32 %v2993, %v3079
      %v3088 = vadd.f32 %v2994, %v3080
      %v3089 = vmul.f32 %v3044, %v3037
      %v3090 = vmul.f32 %v3044, %v3038
      %v3091 = vmul.f32 %v3044, %v3039
      %v3092 = vmul.f32 %v3044, %v3040
      %v3093 = vmul.f32 %v3048, %v3037
      %v3094 = vmul.f32 %v3048, %v3038
      %v3095 = vmul.f32 %v3048, %v3039
      %v3096 = vmul.f32 %v3048, %v3040
      %v3097 = vmul.f32 %v3060, %v3032
      %v3098 = vmul.f32 %v3060, %v3033
      %v3099 = vmul.f32 %v3060, %v3034
      %v3100 = vmul.f32 %v3060, %v3035
      %v3101 = vmul.f32 %v3064, %v3032
      %v3102 = vmul.f32 %v3064, %v3033
      %v3103 = vmul.f32 %v3064, %v3034
      %v3104 = vmul.f32 %v3064, %v3035
      %v3105 = vadd.f32 %v3089, %v3097
      %v3106 = vadd.f32 %v3090, %v3098
      %v3107 = vadd.f32 %v3091, %v3099
      %v3108 = vadd.f32 %v3092, %v3100
      %v3109 = vadd.f32 %v3093, %v3101
      %v3110 = vadd.f32 %v3094, %v3102
      %v3111 = vadd.f32 %v3095, %v3103
      %v3112 = vadd.f32 %v3096, %v3104
      %v3113 = vadd.f32 %v3019, %v3105
      %v3114 = vadd.f32 %v3020, %v3106
      %v3115 = vadd.f32 %v3021, %v3107
      %v3116 = vadd.f32 %v3022, %v3108
      %v3117 = vadd.f32 %v3023, %v3109
      %v3118 = vadd.f32 %v3024, %v3110
      %v3119 = vadd.f32 %v3025, %v3111
      %v3120 = vadd.f32 %v3026, %v3112
      %v3121 = vld [vmem:[%s190 + $0x1f] sm:$0x1]
      %v3122 = vld [vmem:[%s190 + $0x5f] sm:$0x1]
      %v3123 = vld [vmem:[%s190 + $0x3f] sm:$0x1]
      %v3124 = vld [vmem:[%s190 + $0x7f] sm:$0x1]
      %s3125 = scalar_lea.vmem %s196, 992
      %v3126 = vld [vmem:[%s3125] sm:$0xff]
      %v3127 = vld [vmem:[%s3125 + $0x8] sm:$0xff]
      %v3128 = vld [vmem:[%s3125 + $0x10] sm:$0xff]
      %v3129 = vld [vmem:[%s3125 + $0x18] sm:$0xff]
      %s3130 = scalar_lea.vmem %s196, 2016
      %v3131 = vld [vmem:[%s3130] sm:$0xff]
      %v3132 = vld [vmem:[%s3130 + $0x8] sm:$0xff]
      %v3133 = vld [vmem:[%s3130 + $0x10] sm:$0xff]
      %v3134 = vld [vmem:[%s3130 + $0x18] sm:$0xff]
      %v3135 = vlaneseq
      %v3136 = vshrl.u32 %v3135, 7
      %v3137 = vsub.s32 0, %v3136
      %v3138 = vrot.slane %v3121, %v3137
      %v3139 = vlaneseq
      %v3140 = vshrl.u32 %v3139, 7
      %v3141 = vsub.s32 0, %v3140
      %v3142 = vrot.slane %v3122, %v3141
      %v3143 = vmul.f32 %v3138, %v3126
      %v3144 = vmul.f32 %v3138, %v3127
      %v3145 = vmul.f32 %v3138, %v3128
      %v3146 = vmul.f32 %v3138, %v3129
      %v3147 = vmul.f32 %v3142, %v3126
      %v3148 = vmul.f32 %v3142, %v3127
      %v3149 = vmul.f32 %v3142, %v3128
      %v3150 = vmul.f32 %v3142, %v3129
      %v3151 = vlaneseq
      %v3152 = vshrl.u32 %v3151, 7
      %v3153 = vsub.s32 0, %v3152
      %v3154 = vrot.slane %v3123, %v3153
      %v3155 = vlaneseq
      %v3156 = vshrl.u32 %v3155, 7
      %v3157 = vsub.s32 0, %v3156
      %v3158 = vrot.slane %v3124, %v3157
      %v3159 = vmul.f32 %v3154, %v3131
      %v3160 = vmul.f32 %v3154, %v3132
      %v3161 = vmul.f32 %v3154, %v3133
      %v3162 = vmul.f32 %v3154, %v3134
      %v3163 = vmul.f32 %v3158, %v3131
      %v3164 = vmul.f32 %v3158, %v3132
      %v3165 = vmul.f32 %v3158, %v3133
      %v3166 = vmul.f32 %v3158, %v3134
      %v3167 = vsub.f32 %v3143, %v3159
      %v3168 = vsub.f32 %v3144, %v3160
      %v3169 = vsub.f32 %v3145, %v3161
      %v3170 = vsub.f32 %v3146, %v3162
      %v3171 = vsub.f32 %v3147, %v3163
      %v3172 = vsub.f32 %v3148, %v3164
      %v3173 = vsub.f32 %v3149, %v3165
      %v3174 = vsub.f32 %v3150, %v3166
      %v3175 = vadd.f32 %v3081, %v3167
      %v3176 = vadd.f32 %v3082, %v3168
      %v3177 = vadd.f32 %v3083, %v3169
      %v3178 = vadd.f32 %v3084, %v3170
      %v3179 = vadd.f32 %v3085, %v3171
      %v3180 = vadd.f32 %v3086, %v3172
      %v3181 = vadd.f32 %v3087, %v3173
      %v3182 = vadd.f32 %v3088, %v3174
      %v3183 = vmul.f32 %v3138, %v3131
      %v3184 = vmul.f32 %v3138, %v3132
      %v3185 = vmul.f32 %v3138, %v3133
      %v3186 = vmul.f32 %v3138, %v3134
      %v3187 = vmul.f32 %v3142, %v3131
      %v3188 = vmul.f32 %v3142, %v3132
      %v3189 = vmul.f32 %v3142, %v3133
      %v3190 = vmul.f32 %v3142, %v3134
      %v3191 = vmul.f32 %v3154, %v3126
      %v3192 = vmul.f32 %v3154, %v3127
      %v3193 = vmul.f32 %v3154, %v3128
      %v3194 = vmul.f32 %v3154, %v3129
      %v3195 = vmul.f32 %v3158, %v3126
      %v3196 = vmul.f32 %v3158, %v3127
      %v3197 = vmul.f32 %v3158, %v3128
      %v3198 = vmul.f32 %v3158, %v3129
      %v3199 = vadd.f32 %v3183, %v3191
      %v3200 = vadd.f32 %v3184, %v3192
      %v3201 = vadd.f32 %v3185, %v3193
      %v3202 = vadd.f32 %v3186, %v3194
      %v3203 = vadd.f32 %v3187, %v3195
      %v3204 = vadd.f32 %v3188, %v3196
      %v3205 = vadd.f32 %v3189, %v3197
      %v3206 = vadd.f32 %v3190, %v3198
      %v3207 = vadd.f32 %v3113, %v3199
      %v3208 = vadd.f32 %v3114, %v3200
      %v3209 = vadd.f32 %v3115, %v3201
      %v3210 = vadd.f32 %v3116, %v3202
      %v3211 = vadd.f32 %v3117, %v3203
      %v3212 = vadd.f32 %v3118, %v3204
      %v3213 = vadd.f32 %v3119, %v3205
      %v3214 = vadd.f32 %v3120, %v3206
      %3215 = vst [vmem:[%s206] sm:$0xff] %v3175
      %3216 = vst [vmem:[%s206 + $0x8] sm:$0xff] %v3176
      %3217 = vst [vmem:[%s206 + $0x10] sm:$0xff] %v3177
      %3218 = vst [vmem:[%s206 + $0x18] sm:$0xff] %v3178
      %3219 = vst [vmem:[%s206 + $0x40] sm:$0xff] %v3179
      %3220 = vst [vmem:[%s206 + $0x48] sm:$0xff] %v3180
      %3221 = vst [vmem:[%s206 + $0x50] sm:$0xff] %v3181
      %3222 = vst [vmem:[%s206 + $0x58] sm:$0xff] %v3182
      %3223 = vst [vmem:[%s206 + $0x20] sm:$0xff] %v3207
      %3224 = vst [vmem:[%s206 + $0x28] sm:$0xff] %v3208
      %3225 = vst [vmem:[%s206 + $0x30] sm:$0xff] %v3209
      %3226 = vst [vmem:[%s206 + $0x38] sm:$0xff] %v3210
      %3227 = vst [vmem:[%s206 + $0x60] sm:$0xff] %v3211
      %3228 = vst [vmem:[%s206 + $0x68] sm:$0xff] %v3212
      %3229 = vst [vmem:[%s206 + $0x70] sm:$0xff] %v3213
      %3230 = vst [vmem:[%s206 + $0x78] sm:$0xff] %v3214
      %s3231 = smul.u32 2, %s18
      %p3232 = scmp.lt.s32.totalorder %s17, 1
      %s3233 = scalar_select %p3232, %s17, 1
      %p3234 = scmp.lt.s32.totalorder %s3231, 1
      %s3235 = scalar_select %p3234, %s3231, 1
      %s3236 = smul.addr %s3235, 8
      %s3237 = smul.addr %s3233, 16
      %s3238 = sadd.s32 %s3236, %s3237
      %s3239 = smul.addr %s3238, 8
      %s3240 = scalar_lea.vmem %s2, %s3239
      // Predicated region
      $region29: #{fno2d_emdt_forward.4} parent=27 // pred_check
        %p3241 = pneg %p99
      $region30: #{fno2d_emdt_forward.4} parent=27 // pred_check_branch
        %3243 = sbr.rel (%p3241) target = $region32
      $region31: #{fno2d_emdt_forward.4} parent=27 // pred_region
        %s3244 = smul.u32 2, %s18
      $region32: #{fno2d_emdt_forward.4} parent=27 // pred_fallthru
        _
    $region28: #{fno2d_emdt_forward.4} parent=5 // pred_fallthru
      _
    %p3245 = scmp.le.s32.totalorder 2, %s8
    // Predicated region
    $region33: #{fno2d_emdt_forward.4} parent=5 // pred_check
      %p3246 = pneg %p3245
    $region34: #{fno2d_emdt_forward.4} parent=5 // pred_check_branch
      %3248 = sbr.rel (%p3246) target = $region36
    $region35: #{fno2d_emdt_forward.4} parent=5 // pred_region
      %s3249 = ssub.s32 %s8, 2
      // Predicated region
      $region37: #{fno2d_emdt_forward.4} parent=35 // pred_check
        %p3250 = pneg %p105
      $region38: #{fno2d_emdt_forward.4} parent=35 // pred_check_branch
        %3252 = sbr.rel (%p3250) target = $region40
      $region39: #{fno2d_emdt_forward.4} parent=35 // pred_region
        %s3253 = smul.u32 2, %s20
        %p3254 = scmp.lt.s32.totalorder %s19, 1
        %s3255 = scalar_select %p3254, %s19, 1
        %p3256 = scmp.lt.s32.totalorder %s3253, 1
        %s3257 = scalar_select %p3256, %s3253, 1
        %s3258 = smul.addr %s3257, 8
        %s3259 = smul.addr %s3255, 16
        %s3260 = sadd.s32 %s3258, %s3259
        %s3261 = smul.addr %s3260, 8
        %s3262 = scalar_lea.vmem %s2, %s3261
      $region40: #{fno2d_emdt_forward.4} parent=35 // pred_fallthru
        _
    $region36: #{fno2d_emdt_forward.4} parent=5 // pred_fallthru
      _
  $region6: #{fno2d_emdt_forward.4} parent=0 // loop_footer
    %s12 = sadd.s32 1, %s8
  $region7: #{fno2d_emdt_forward.4} parent=0 // loop_footer_branch
    %7 = sbr.rel target = $region3
  $region8: #{fno2d_emdt_forward.4} parent=0 // loop_exit
    _

// kernel: reverse.8
$region0: #{reverse.8}
  #allocation0 [shape = 's32[1]{0}', space=sflag, size = 0x4, scoped, tag = 'scoped memory for reverse.8']
  %s0 = inlined_call_operand.vmem [shape: f32[2,32,24,11], index: 0, kind: input, shape index: {}]
  %s1 = inlined_call_operand.vmem [shape: f32[2,32,24,11], index: 1, kind: output, shape index: {}]
  %s2 = scalar_lea.vmem %s0, 240
  %v3 = vld [vmem:[%s2] sm:$0xff]
  %4 = vst [vmem:[%s1] sm:$0xff] %v3
  %s5 = scalar_lea.vmem %s0, 504
  %v6 = vld [vmem:[%s5] sm:$0xff]
  %s7 = scalar_lea.vmem %s1, 264
  %8 = vst [vmem:[%s7] sm:$0xff] %v6
  %s9 = scalar_lea.vmem %s0, 216
  %v10 = vld [vmem:[%s9] sm:$0xff]
  %s11 = scalar_lea.vmem %s1, 24
  %12 = vst [vmem:[%s11] sm:$0xff] %v10
  %s13 = scalar_lea.vmem %s0, 480
  %v14 = vld [vmem:[%s13] sm:$0xff]
  %s15 = scalar_lea.vmem %s1, 288
  %16 = vst [vmem:[%s15] sm:$0xff] %v14
  %s17 = scalar_lea.vmem %s0, 192
  %v18 = vld [vmem:[%s17] sm:$0xff]
  %s19 = scalar_lea.vmem %s1, 48
  %20 = vst [vmem:[%s19] sm:$0xff] %v18
  %s21 = scalar_lea.vmem %s0, 456
  %v22 = vld [vmem:[%s21] sm:$0xff]
  %s23 = scalar_lea.vmem %s1, 312
  %24 = vst [vmem:[%s23] sm:$0xff] %v22
  %s25 = scalar_lea.vmem %s0, 168
  %v26 = vld [vmem:[%s25] sm:$0xff]
  %s27 = scalar_lea.vmem %s1, 72
  %28 = vst [vmem:[%s27] sm:$0xff] %v26
  %s29 = scalar_lea.vmem %s0, 432
  %v30 = vld [vmem:[%s29] sm:$0xff]
  %s31 = scalar_lea.vmem %s1, 336
  %32 = vst [vmem:[%s31] sm:$0xff] %v30
  %s33 = scalar_lea.vmem %s0, 144
  %v34 = vld [vmem:[%s33] sm:$0xff]
  %s35 = scalar_lea.vmem %s1, 96
  %36 = vst [vmem:[%s35] sm:$0xff] %v34
  %s37 = scalar_lea.vmem %s0, 408
  %v38 = vld [vmem:[%s37] sm:$0xff]
  %s39 = scalar_lea.vmem %s1, 360
  %40 = vst [vmem:[%s39] sm:$0xff] %v38
  %s41 = scalar_lea.vmem %s0, 120
  %v42 = vld [vmem:[%s41] sm:$0xff]
  %s43 = scalar_lea.vmem %s1, 120
  %44 = vst [vmem:[%s43] sm:$0xff] %v42
  %s45 = scalar_lea.vmem %s0, 384
  %v46 = vld [vmem:[%s45] sm:$0xff]
  %s47 = scalar_lea.vmem %s1, 384
  %48 = vst [vmem:[%s47] sm:$0xff] %v46
  %s49 = scalar_lea.vmem %s0, 96
  %v50 = vld [vmem:[%s49] sm:$0xff]
  %s51 = scalar_lea.vmem %s1, 144
  %52 = vst [vmem:[%s51] sm:$0xff] %v50
  %s53 = scalar_lea.vmem %s0, 360
  %v54 = vld [vmem:[%s53] sm:$0xff]
  %s55 = scalar_lea.vmem %s1, 408
  %56 = vst [vmem:[%s55] sm:$0xff] %v54
  %s57 = scalar_lea.vmem %s0, 72
  %v58 = vld [vmem:[%s57] sm:$0xff]
  %s59 = scalar_lea.vmem %s1, 168
  %60 = vst [vmem:[%s59] sm:$0xff] %v58
  %s61 = scalar_lea.vmem %s0, 336
  %v62 = vld [vmem:[%s61] sm:$0xff]
  %s63 = scalar_lea.vmem %s1, 432
  %64 = vst [vmem:[%s63] sm:$0xff] %v62
  %s65 = scalar_lea.vmem %s0, 48
  %v66 = vld [vmem:[%s65] sm:$0xff]
  %s67 = scalar_lea.vmem %s1, 192
  %68 = vst [vmem:[%s67] sm:$0xff] %v66
  %s69 = scalar_lea.vmem %s0, 312
  %v70 = vld [vmem:[%s69] sm:$0xff]
  %s71 = scalar_lea.vmem %s1, 456
  %72 = vst [vmem:[%s71] sm:$0xff] %v70
  %s73 = scalar_lea.vmem %s0, 24
  %v74 = vld [vmem:[%s73] sm:$0xff]
  %s75 = scalar_lea.vmem %s1, 216
  %76 = vst [vmem:[%s75] sm:$0xff] %v74
  %s77 = scalar_lea.vmem %s0, 288
  %v78 = vld [vmem:[%s77] sm:$0xff]
  %s79 = scalar_lea.vmem %s1, 480
  %80 = vst [vmem:[%s79] sm:$0xff] %v78
  %v81 = vld [vmem:[%s0] sm:$0xff]
  %s82 = scalar_lea.vmem %s1, 240
  %83 = vst [vmem:[%s82] sm:$0xff] %v81
  %s84 = scalar_lea.vmem %s0, 264
  %v85 = vld [vmem:[%s84] sm:$0xff]
  %s86 = scalar_lea.vmem %s1, 504
  %87 = vst [vmem:[%s86] sm:$0xff] %v85
  %s88 = scalar_lea.vmem %s0, 248
  %v89 = vld [vmem:[%s88] sm:$0xff]
  %s90 = scalar_lea.vmem %s1, 8
  %91 = vst [vmem:[%s90] sm:$0xff] %v89
  %s92 = scalar_lea.vmem %s0, 512
  %v93 = vld [vmem:[%s92] sm:$0xff]
  %s94 = scalar_lea.vmem %s1, 272
  %95 = vst [vmem:[%s94] sm:$0xff] %v93
  %s96 = scalar_lea.vmem %s0, 224
  %v97 = vld [vmem:[%s96] sm:$0xff]
  %s98 = scalar_lea.vmem %s1, 32
  %99 = vst [vmem:[%s98] sm:$0xff] %v97
  %s100 = scalar_lea.vmem %s0, 488
  %v101 = vld [vmem:[%s100] sm:$0xff]
  %s102 = scalar_lea.vmem %s1, 296
  %103 = vst [vmem:[%s102] sm:$0xff] %v101
  %s104 = scalar_lea.vmem %s0, 200
  %v105 = vld [vmem:[%s104] sm:$0xff]
  %s106 = scalar_lea.vmem %s1, 56
  %107 = vst [vmem:[%s106] sm:$0xff] %v105
  %s108 = scalar_lea.vmem %s0, 464
  %v109 = vld [vmem:[%s108] sm:$0xff]
  %s110 = scalar_lea.vmem %s1, 320
  %111 = vst [vmem:[%s110] sm:$0xff] %v109
  %s112 = scalar_lea.vmem %s0, 176
  %v113 = vld [vmem:[%s112] sm:$0xff]
  %s114 = scalar_lea.vmem %s1, 80
  %115 = vst [vmem:[%s114] sm:$0xff] %v113
  %s116 = scalar_lea.vmem %s0, 440
  %v117 = vld [vmem:[%s116] sm:$0xff]
  %s118 = scalar_lea.vmem %s1, 344
  %119 = vst [vmem:[%s118] sm:$0xff] %v117
  %s120 = scalar_lea.vmem %s0, 152
  %v121 = vld [vmem:[%s120] sm:$0xff]
  %s122 = scalar_lea.vmem %s1, 104
  %123 = vst [vmem:[%s122] sm:$0xff] %v121
  %s124 = scalar_lea.vmem %s0, 416
  %v125 = vld [vmem:[%s124] sm:$0xff]
  %s126 = scalar_lea.vmem %s1, 368
  %127 = vst [vmem:[%s126] sm:$0xff] %v125
  %s128 = scalar_lea.vmem %s0, 128
  %v129 = vld [vmem:[%s128] sm:$0xff]
  %s130 = scalar_lea.vmem %s1, 128
  %131 = vst [vmem:[%s130] sm:$0xff] %v129
  %s132 = scalar_lea.vmem %s0, 392
  %v133 = vld [vmem:[%s132] sm:$0xff]
  %s134 = scalar_lea.vmem %s1, 392
  %135 = vst [vmem:[%s134] sm:$0xff] %v133
  %s136 = scalar_lea.vmem %s0, 104
  %v137 = vld [vmem:[%s136] sm:$0xff]
  %s138 = scalar_lea.vmem %s1, 152
  %139 = vst [vmem:[%s138] sm:$0xff] %v137
  %s140 = scalar_lea.vmem %s0, 368
  %v141 = vld [vmem:[%s140] sm:$0xff]
  %s142 = scalar_lea.vmem %s1, 416
  %143 = vst [vmem:[%s142] sm:$0xff] %v141
  %s144 = scalar_lea.vmem %s0, 80
  %v145 = vld [vmem:[%s144] sm:$0xff]
  %s146 = scalar_lea.vmem %s1, 176
  %147 = vst [vmem:[%s146] sm:$0xff] %v145
  %s148 = scalar_lea.vmem %s0, 344
  %v149 = vld [vmem:[%s148] sm:$0xff]
  %s150 = scalar_lea.vmem %s1, 440
  %151 = vst [vmem:[%s150] sm:$0xff] %v149
  %s152 = scalar_lea.vmem %s0, 56
  %v153 = vld [vmem:[%s152] sm:$0xff]
  %s154 = scalar_lea.vmem %s1, 200
  %155 = vst [vmem:[%s154] sm:$0xff] %v153
  %s156 = scalar_lea.vmem %s0, 320
  %v157 = vld [vmem:[%s156] sm:$0xff]
  %s158 = scalar_lea.vmem %s1, 464
  %159 = vst [vmem:[%s158] sm:$0xff] %v157
  %s160 = scalar_lea.vmem %s0, 32
  %v161 = vld [vmem:[%s160] sm:$0xff]
  %s162 = scalar_lea.vmem %s1, 224
  %163 = vst [vmem:[%s162] sm:$0xff] %v161
  %s164 = scalar_lea.vmem %s0, 296
  %v165 = vld [vmem:[%s164] sm:$0xff]
  %s166 = scalar_lea.vmem %s1, 488
  %167 = vst [vmem:[%s166] sm:$0xff] %v165
  %s168 = scalar_lea.vmem %s0, 8
  %v169 = vld [vmem:[%s168] sm:$0xff]
  %s170 = scalar_lea.vmem %s1, 248
  %171 = vst [vmem:[%s170] sm:$0xff] %v169
  %s172 = scalar_lea.vmem %s0, 272
  %v173 = vld [vmem:[%s172] sm:$0xff]
  %s174 = scalar_lea.vmem %s1, 512
  %175 = vst [vmem:[%s174] sm:$0xff] %v173
  %s176 = scalar_lea.vmem %s0, 256
  %v177 = vld [vmem:[%s176] sm:$0xff]
  %s178 = scalar_lea.vmem %s1, 16
  %179 = vst [vmem:[%s178] sm:$0xff] %v177
  %s180 = scalar_lea.vmem %s0, 520
  %v181 = vld [vmem:[%s180] sm:$0xff]
  %s182 = scalar_lea.vmem %s1, 280
  %183 = vst [vmem:[%s182] sm:$0xff] %v181
  %s184 = scalar_lea.vmem %s0, 232
  %v185 = vld [vmem:[%s184] sm:$0xff]
  %s186 = scalar_lea.vmem %s1, 40
  %187 = vst [vmem:[%s186] sm:$0xff] %v185
  %s188 = scalar_lea.vmem %s0, 496
  %v189 = vld [vmem:[%s188] sm:$0xff]
  %s190 = scalar_lea.vmem %s1, 304
  %191 = vst [vmem:[%s190] sm:$0xff] %v189
  %s192 = scalar_lea.vmem %s0, 208
  %v193 = vld [vmem:[%s192] sm:$0xff]
  %s194 = scalar_lea.vmem %s1, 64
  %195 = vst [vmem:[%s194] sm:$0xff] %v193
  %s196 = scalar_lea.vmem %s0, 472
  %v197 = vld [vmem:[%s196] sm:$0xff]
  %s198 = scalar_lea.vmem %s1, 328
  %199 = vst [vmem:[%s198] sm:$0xff] %v197
  %s200 = scalar_lea.vmem %s0, 184
  %v201 = vld [vmem:[%s200] sm:$0xff]
  %s202 = scalar_lea.vmem %s1, 88
  %203 = vst [vmem:[%s202] sm:$0xff] %v201
  %s204 = scalar_lea.vmem %s0, 448
  %v205 = vld [vmem:[%s204] sm:$0xff]
  %s206 = scalar_lea.vmem %s1, 352
  %207 = vst [vmem:[%s206] sm:$0xff] %v205
  %s208 = scalar_lea.vmem %s0, 160
  %v209 = vld [vmem:[%s208] sm:$0xff]
  %s210 = scalar_lea.vmem %s1, 112
  %211 = vst [vmem:[%s210] sm:$0xff] %v209
  %s212 = scalar_lea.vmem %s0, 424
  %v213 = vld [vmem:[%s212] sm:$0xff]
  %s214 = scalar_lea.vmem %s1, 376
  %215 = vst [vmem:[%s214] sm:$0xff] %v213
  %s216 = scalar_lea.vmem %s0, 136
  %v217 = vld [vmem:[%s216] sm:$0xff]
  %s218 = scalar_lea.vmem %s1, 136
  %219 = vst [vmem:[%s218] sm:$0xff] %v217
  %s220 = scalar_lea.vmem %s0, 400
  %v221 = vld [vmem:[%s220] sm:$0xff]
  %s222 = scalar_lea.vmem %s1, 400
  %223 = vst [vmem:[%s222] sm:$0xff] %v221
  %s224 = scalar_lea.vmem %s0, 112
  %v225 = vld [vmem:[%s224] sm:$0xff]
  %s226 = scalar_lea.vmem %s1, 160
  %227 = vst [vmem:[%s226] sm:$0xff] %v225
  %s228 = scalar_lea.vmem %s0, 376
  %v229 = vld [vmem:[%s228] sm:$0xff]
  %s230 = scalar_lea.vmem %s1, 424
  %231 = vst [vmem:[%s230] sm:$0xff] %v229
  %s232 = scalar_lea.vmem %s0, 88
  %v233 = vld [vmem:[%s232] sm:$0xff]
  %s234 = scalar_lea.vmem %s1, 184
  %235 = vst [vmem:[%s234] sm:$0xff] %v233
  %s236 = scalar_lea.vmem %s0, 352
  %v237 = vld [vmem:[%s236] sm:$0xff]
  %s238 = scalar_lea.vmem %s1, 448
  %239 = vst [vmem:[%s238] sm:$0xff] %v237
  %s240 = scalar_lea.vmem %s0, 64
  %v241 = vld [vmem:[%s240] sm:$0xff]
  %s242 = scalar_lea.vmem %s1, 208
  %243 = vst [vmem:[%s242] sm:$0xff] %v241
  %s244 = scalar_lea.vmem %s0, 328
  %v245 = vld [vmem:[%s244] sm:$0xff]
  %s246 = scalar_lea.vmem %s1, 472
  %247 = vst [vmem:[%s246] sm:$0xff] %v245
  %s248 = scalar_lea.vmem %s0, 40
  %v249 = vld [vmem:[%s248] sm:$0xff]
  %s250 = scalar_lea.vmem %s1, 232
  %251 = vst [vmem:[%s250] sm:$0xff] %v249
  %s252 = scalar_lea.vmem %s0, 304
  %v253 = vld [vmem:[%s252] sm:$0xff]
  %s254 = scalar_lea.vmem %s1, 496
  %255 = vst [vmem:[%s254] sm:$0xff] %v253
  %s256 = scalar_lea.vmem %s0, 16
  %v257 = vld [vmem:[%s256] sm:$0xff]
  %s258 = scalar_lea.vmem %s1, 256
  %259 = vst [vmem:[%s258] sm:$0xff] %v257
  %s260 = scalar_lea.vmem %s0, 280
  %v261 = vld [vmem:[%s260] sm:$0xff]
  %s262 = scalar_lea.vmem %s1, 520
  %263 = vst [vmem:[%s262] sm:$0xff] %v261

</llo_original>
